<compile_context>
chip_gen: v7x
topology: tpu7x:2x2x1
jax: 0.10.0
libtpu: 0.0.40
codegen_flags: <defaults>
</compile_context>

<pallas_src>
import functools

import jax
import jax.numpy as jnp
from jax import lax
from jax.experimental import pallas as pl
from jax.experimental.pallas import tpu as pltpu


def mhsa_kernel(xq_ref, xfull_ref, wq_ref, wk_ref, wv_ref, wp_ref,
                bq_ref, bk_ref, bv_ref, bp_ref,
                o_ref,
                kT_sc, v_sc, av_sc,
                *, num_heads: int, head_dim: int, n_valid: int):
    """Grid = (batch, query_tile).

    xq_ref   : (1, TQ, C)   bf16 query-tile slice of x
    xfull_ref: (1, Npad, C) bf16 full-sequence x block (only read at qi == 0)
    w*_ref   : (C, C)       bf16 pre-transposed weights (y = x @ W); scale folded into Wq
    b*_ref   : (1, C)       f32 biases (scale folded into bq)
    o_ref    : (1, TQ, C)   output tile
    kT_sc    : VMEM (C, Npad) bf16  K^T projection, resident across query tiles
    v_sc     : VMEM (Npad, C) bf16  V projection, resident across query tiles
    av_sc    : VMEM (TQ, C)   bf16  per-head AV staged lane-wise for ONE projection matmul
    """
    qi = pl.program_id(1)
    hd = head_dim
    cdt = v_sc.dtype                     # bf16: fast MXU path on v5e/v6e/v7x
    q_tile = av_sc.shape[0]
    n_keys = v_sc.shape[0]

    # ---- K / V projection: once per batch element, kept resident in VMEM scratch. ----
    @pl.when(qi == 0)
    def _():
        xf = xfull_ref[0]                                                  # [Npad, C]
        k = jnp.dot(xf, wk_ref[...], preferred_element_type=jnp.float32) + bk_ref[0]
        v = jnp.dot(xf, wv_ref[...], preferred_element_type=jnp.float32) + bv_ref[0]
        # One XLU transpose per batch element; every q_h @ K_h^T below is then a
        # plain NN matmul on a lane-dense [TQ, Npad] score tile.
        kT_sc[...] = jnp.transpose(k.astype(cdt))                          # [C, Npad]
        v_sc[...] = v.astype(cdt)                                          # [Npad, C]

    # ---- Q projection for this query tile (1/sqrt(hd) pre-folded into Wq / bq). ----
    q = (jnp.dot(xq_ref[0], wq_ref[...], preferred_element_type=jnp.float32)
         + bq_ref[0]).astype(cdt)                                          # [TQ, C]

    # ---- Per-head attention; AV written into lane slices of av_sc. ----
    for h in range(num_heads):
        sl = slice(h * hd, (h + 1) * hd)
        s = jnp.dot(q[:, sl], kT_sc[sl, :],
                    preferred_element_type=jnp.float32)                    # [TQ, Npad]
        if n_valid < n_keys:   # static branch: mask padded key columns pre max/exp
            key_idx = lax.broadcasted_iota(jnp.int32, (q_tile, n_keys), 1)
            s = jnp.where(key_idx < n_valid, s, jnp.float32(-1e30))
        s = s - jnp.max(s, axis=-1, keepdims=True)
        p = jnp.exp(s)                                                     # unnormalized
        inv = pl.reciprocal(jnp.sum(p, axis=-1, keepdims=True), approx=True)  # EUP slot
        # attn_dropout: p = 0.0 -> identity
        av = jnp.dot(p.astype(cdt), v_sc[:, sl],
                     preferred_element_type=jnp.float32)                   # [TQ, hd]
        # Normalize AFTER the AV matmul: [TQ, hd] multiply instead of [TQ, Npad].
        av_sc[:, sl] = (av * inv).astype(cdt)

    # ---- Single full-depth (K = C) output projection, bias added once. ----
    o_ref[0] = (jnp.dot(av_sc[...], wp_ref[...], preferred_element_type=jnp.float32)
                + bp_ref[0]).astype(o_ref.dtype)
    # proj_dropout: p = 0.0 -> identity


def multi_head_self_attention(x, w_qkv, b_qkv, w_proj, b_proj, *,
                              num_heads, q_tile=128):
    """x: [B, N, C]; torch layouts: w_qkv [3C, C], b_qkv [3C], w_proj [C, C], b_proj [C]."""
    B, N, C = x.shape
    head_dim = C // num_heads
    assert head_dim * num_heads == C, "embed_dim must be divisible by num_heads"

    cdt = jnp.bfloat16                      # MXU operand dtype
    scale = float(head_dim) ** -0.5

    # One-time layout prep OUTSIDE the kernel: split q/k/v, pre-transpose to row-major
    # [in, out], fold the softmax scale into the Q projection, downcast to bf16.
    w_q_t = (jnp.transpose(w_qkv[0 * C:1 * C]).astype(jnp.float32) * scale).astype(cdt)
    w_k_t = jnp.transpose(w_qkv[1 * C:2 * C]).astype(cdt)
    w_v_t = jnp.transpose(w_qkv[2 * C:3 * C]).astype(cdt)
    w_p_t = jnp.transpose(w_proj).astype(cdt)
    b_q = (b_qkv[0 * C:1 * C].astype(jnp.float32) * scale).reshape(1, C)
    b_k = b_qkv[1 * C:2 * C].astype(jnp.float32).reshape(1, C)
    b_v = b_qkv[2 * C:3 * C].astype(jnp.float32).reshape(1, C)
    b_p = b_proj.astype(jnp.float32).reshape(1, C)

    # Pad the sequence to a q_tile multiple: lane-dense scores / output tiles and
    # query-tile pipelining even for ragged ViT lengths (e.g. N = 197).
    n_pad = q_tile * pl.cdiv(N, q_tile)
    x_p = x.astype(cdt)
    if n_pad != N:
        x_p = jnp.pad(x_p, ((0, 0), (0, n_pad - N), (0, 0)))
    n_q = n_pad // q_tile

    kernel = functools.partial(mhsa_kernel, num_heads=num_heads,
                               head_dim=head_dim, n_valid=N)
    const = lambda b, qi: (0, 0)

    # VMEM budget (double-buffered blocks + resident scratch) with 2x headroom,
    # clamped to [16 MiB, 64 MiB] so the request is valid from v5e through v7x.
    vmem_est = (2 * q_tile * C * 2 + 2 * n_pad * C * 2        # xq + xfull blocks
                + 2 * 4 * C * C * 2 + 2 * 4 * C * 4           # weights + biases
                + 2 * q_tile * C * x.dtype.itemsize           # out block
                + 2 * n_pad * C * 2 + q_tile * C * 2)         # kT / v / av scratch
    vmem_limit = int(min(max(2 * vmem_est, 16 * 1024 * 1024), 64 * 1024 * 1024))

    out = pl.pallas_call(
        kernel,
        out_shape=jax.ShapeDtypeStruct((B, n_pad, C), x.dtype),
        grid_spec=pltpu.PrefetchScalarGridSpec(
            num_scalar_prefetch=0,
            grid=(B, n_q),
            in_specs=[
                pl.BlockSpec((1, q_tile, C), lambda b, qi: (b, qi, 0)),  # x (query tile)
                pl.BlockSpec((1, n_pad, C), lambda b, qi: (b, 0, 0)),    # x (full seq, K/V only)
                pl.BlockSpec((C, C), const),                             # Wq^T (scale folded)
                pl.BlockSpec((C, C), const),                             # Wk^T
                pl.BlockSpec((C, C), const),                             # Wv^T
                pl.BlockSpec((C, C), const),                             # Wproj^T
                pl.BlockSpec((1, C), const),                             # bq (scale folded)
                pl.BlockSpec((1, C), const),                             # bk
                pl.BlockSpec((1, C), const),                             # bv
                pl.BlockSpec((1, C), const),                             # bproj
            ],
            out_specs=pl.BlockSpec((1, q_tile, C), lambda b, qi: (b, qi, 0)),
            scratch_shapes=[
                pltpu.VMEM((C, n_pad), cdt),     # K^T, resident across query tiles
                pltpu.VMEM((n_pad, C), cdt),     # V,   resident across query tiles
                pltpu.VMEM((q_tile, C), cdt),    # per-head AV staging buffer
            ],
        ),
        compiler_params=pltpu.CompilerParams(
            dimension_semantics=("parallel", "arbitrary"),
            vmem_limit_bytes=vmem_limit),
    )(x_p, x_p, w_q_t, w_k_t, w_v_t, w_p_t, b_q, b_k, b_v, b_p)

    return out[:, :N, :] if n_pad != N else out


def reference_mhsa(x, w_qkv, b_qkv, w_proj, b_proj, *, num_heads):
    """Pure-JAX reference mirroring the PyTorch forward exactly (f32)."""
    B, N, C = x.shape
    hd = C // num_heads
    qkv = jnp.einsum("bnc,oc->bno", x, w_qkv) + b_qkv             # [B, N, 3C]
    qkv = qkv.reshape(B, N, 3, num_heads, hd).transpose(2, 0, 3, 1, 4)
    q, k, v = qkv[0], qkv[1], qkv[2]                               # [B, H, N, hd]
    attn = jnp.einsum("bhnd,bhmd->bhnm", q, k) * (hd ** -0.5)
    attn = jax.nn.softmax(attn, axis=-1)
    out = jnp.einsum("bhnm,bhmd->bhnd", attn, v)                   # [B, H, N, hd]
    out = out.transpose(0, 2, 1, 3).reshape(B, N, C)
    out = jnp.einsum("bnc,oc->bno", out, w_proj) + b_proj
    return out


if __name__ == "__main__":
    # Small, ViT-like shapes.  N = 200 is deliberately NOT a multiple of 128 so the
    # pad + key-mask path (ViT's ragged N = 197) is exercised; C is lane-width 128.
    B, N, C = 2, 200, 128
    num_heads = 4

    key = jax.random.PRNGKey(0)
    kx, kw1, kb1, kw2, kb2 = jax.random.split(key, 5)

    x = jax.random.normal(kx, (B, N, C), dtype=jnp.float32)
    # torch.nn.Linear-shaped parameters.
    w_qkv = jax.random.normal(kw1, (3 * C, C), dtype=jnp.float32) * 0.05
    b_qkv = jax.random.normal(kb1, (3 * C,), dtype=jnp.float32) * 0.05
    w_proj = jax.random.normal(kw2, (C, C), dtype=jnp.float32) * 0.05
    b_proj = jax.random.normal(kb2, (C,), dtype=jnp.float32) * 0.05

    out = multi_head_self_attention(x, w_qkv, b_qkv, w_proj, b_proj,
                                    num_heads=num_heads)
    out = jax.block_until_ready(out)

    ref = reference_mhsa(x, w_qkv, b_qkv, w_proj, b_proj, num_heads=num_heads)
    assert out.shape == (B, N, C)
    # Tolerance accounts for bf16 MXU operands and the EUP approximate reciprocal
    # in the softmax normalization (reference is all-f32).
    err = float(jnp.max(jnp.abs(out.astype(jnp.float32) - ref)))
    assert err < 2e-2, f"mismatch vs JAX reference: max abs err {err}"

    print("KERNEL_OK")
</pallas_src>

<mosaic_0001>
module attributes {stable_mosaic.version = 11 : i64} {
  func.func @mhsa_kernel(%arg0: i32, %arg1: i32, %arg2: memref<1x128x128xbf16, #tpu.memory_space<vmem>>, %arg3: memref<1x256x128xbf16, #tpu.memory_space<vmem>>, %arg4: memref<128x128xbf16, #tpu.memory_space<vmem>>, %arg5: memref<128x128xbf16, #tpu.memory_space<vmem>>, %arg6: memref<128x128xbf16, #tpu.memory_space<vmem>>, %arg7: memref<128x128xbf16, #tpu.memory_space<vmem>>, %arg8: memref<1x128xf32, #tpu.memory_space<vmem>>, %arg9: memref<1x128xf32, #tpu.memory_space<vmem>>, %arg10: memref<1x128xf32, #tpu.memory_space<vmem>>, %arg11: memref<1x128xf32, #tpu.memory_space<vmem>>, %arg12: memref<1x128x128xf32, #tpu.memory_space<vmem>>, %arg13: memref<128x256xbf16, #tpu.memory_space<vmem>>, %arg14: memref<256x128xbf16, #tpu.memory_space<vmem>>, %arg15: memref<128x128xbf16, #tpu.memory_space<vmem>>) attributes {dimension_semantics = [#tpu.dimension_semantics<parallel>, #tpu.dimension_semantics<arbitrary>], iteration_bounds = array<i64: 2, 2>, scalar_prefetch = 0 : i64, scratch_operands = 3 : i64, tpu.core_type = #tpu.core_type<tc>, window_params = [{transform_indices = @transform_0, window_bounds = array<i64: 1, 128, 128>}, {transform_indices = @transform_1, window_bounds = array<i64: 1, 256, 128>}, {pipeline_mode = #tpu.pipeline_mode<synchronous>, transform_indices = @transform_2, window_bounds = array<i64: 128, 128>}, {pipeline_mode = #tpu.pipeline_mode<synchronous>, transform_indices = @transform_3, window_bounds = array<i64: 128, 128>}, {pipeline_mode = #tpu.pipeline_mode<synchronous>, transform_indices = @transform_4, window_bounds = array<i64: 128, 128>}, {pipeline_mode = #tpu.pipeline_mode<synchronous>, transform_indices = @transform_5, window_bounds = array<i64: 128, 128>}, {pipeline_mode = #tpu.pipeline_mode<synchronous>, transform_indices = @transform_6, window_bounds = array<i64: 1, 128>}, {pipeline_mode = #tpu.pipeline_mode<synchronous>, transform_indices = @transform_7, window_bounds = array<i64: 1, 128>}, {pipeline_mode = #tpu.pipeline_mode<synchronous>, transform_indices = @transform_8, window_bounds = array<i64: 1, 128>}, {pipeline_mode = #tpu.pipeline_mode<synchronous>, transform_indices = @transform_9, window_bounds = array<i64: 1, 128>}, {transform_indices = @transform_10, window_bounds = array<i64: 1, 128, 128>}]} {
    %c0_i32 = arith.constant 0 : i32
    %0 = arith.cmpi eq, %arg1, %c0_i32 : i32
    %1 = arith.extui %0 : i1 to i32
    %c0_i32_0 = arith.constant 0 : i32
    %2 = arith.cmpi ne, %1, %c0_i32_0 : i32
    scf.if %2 {
      %c0_61 = arith.constant 0 : index
      %c0_62 = arith.constant 0 : index
      %c0_63 = arith.constant 0 : index
      %116 = vector.load %arg3[%c0_61, %c0_62, %c0_63] : memref<1x256x128xbf16, #tpu.memory_space<vmem>>, vector<1x256x128xbf16>
      %117 = vector.shape_cast %116 : vector<1x256x128xbf16> to vector<256x128xbf16>
      %c0_64 = arith.constant 0 : index
      %c0_65 = arith.constant 0 : index
      %118 = vector.load %arg5[%c0_64, %c0_65] : memref<128x128xbf16, #tpu.memory_space<vmem>>, vector<128x128xbf16>
      %cst_66 = arith.constant dense<0.000000e+00> : vector<256x128xf32>
      %119 = tpu.matmul %117, %118, %cst_66 {dimension_numbers = #tpu.dot_dimension_numbers<[1], [0], [0], [1], [0, 0, 1, 1], [], []>} : vector<256x128xbf16>, vector<128x128xbf16>, vector<256x128xf32> -> vector<256x128xf32>
      %c0_67 = arith.constant 0 : index
      %c0_68 = arith.constant 0 : index
      %120 = vector.load %arg9[%c0_67, %c0_68] : memref<1x128xf32, #tpu.memory_space<vmem>>, vector<1x128xf32>
      %121 = vector.shape_cast %120 : vector<1x128xf32> to vector<128xf32>
      %122 = vector.shape_cast %121 : vector<128xf32> to vector<1x128xf32>
      %123 = vector.broadcast %122 : vector<1x128xf32> to vector<256x128xf32>
      %124 = arith.addf %119, %123 : vector<256x128xf32>
      %c0_69 = arith.constant 0 : index
      %c0_70 = arith.constant 0 : index
      %125 = vector.load %arg6[%c0_69, %c0_70] : memref<128x128xbf16, #tpu.memory_space<vmem>>, vector<128x128xbf16>
      %cst_71 = arith.constant dense<0.000000e+00> : vector<256x128xf32>
      %126 = tpu.matmul %117, %125, %cst_71 {dimension_numbers = #tpu.dot_dimension_numbers<[1], [0], [0], [1], [0, 0, 1, 1], [], []>} : vector<256x128xbf16>, vector<128x128xbf16>, vector<256x128xf32> -> vector<256x128xf32>
      %c0_72 = arith.constant 0 : index
      %c0_73 = arith.constant 0 : index
      %127 = vector.load %arg10[%c0_72, %c0_73] : memref<1x128xf32, #tpu.memory_space<vmem>>, vector<1x128xf32>
      %128 = vector.shape_cast %127 : vector<1x128xf32> to vector<128xf32>
      %129 = vector.shape_cast %128 : vector<128xf32> to vector<1x128xf32>
      %130 = vector.broadcast %129 : vector<1x128xf32> to vector<256x128xf32>
      %131 = arith.addf %126, %130 : vector<256x128xf32>
      %132 = arith.truncf %124 : vector<256x128xf32> to vector<256x128xbf16>
      %133 = tpu.transpose %132, [1, 0] : vector<256x128xbf16> -> vector<128x256xbf16>
      %c0_74 = arith.constant 0 : index
      %c0_75 = arith.constant 0 : index
      %134 = vector.load %arg13[%c0_74, %c0_75] : memref<128x256xbf16, #tpu.memory_space<vmem>>, vector<128x256xbf16>
      tpu.vector_store %arg13[%c0_74, %c0_75], %133 {strides = array<i32>} : memref<128x256xbf16, #tpu.memory_space<vmem>>, vector<128x256xbf16>,
      %135 = arith.truncf %131 : vector<256x128xf32> to vector<256x128xbf16>
      %c0_76 = arith.constant 0 : index
      %c0_77 = arith.constant 0 : index
      %136 = vector.load %arg14[%c0_76, %c0_77] : memref<256x128xbf16, #tpu.memory_space<vmem>>, vector<256x128xbf16>
      tpu.vector_store %arg14[%c0_76, %c0_77], %135 {strides = array<i32>} : memref<256x128xbf16, #tpu.memory_space<vmem>>, vector<256x128xbf16>,
    } else {
    }
    %c0 = arith.constant 0 : index
    %c0_1 = arith.constant 0 : index
    %c0_2 = arith.constant 0 : index
    %3 = vector.load %arg2[%c0, %c0_1, %c0_2] : memref<1x128x128xbf16, #tpu.memory_space<vmem>>, vector<1x128x128xbf16>
    %4 = vector.shape_cast %3 : vector<1x128x128xbf16> to vector<128x128xbf16>
    %c0_3 = arith.constant 0 : index
    %c0_4 = arith.constant 0 : index
    %5 = vector.load %arg4[%c0_3, %c0_4] : memref<128x128xbf16, #tpu.memory_space<vmem>>, vector<128x128xbf16>
    %cst = arith.constant dense<0.000000e+00> : vector<128x128xf32>
    %6 = tpu.matmul %4, %5, %cst {dimension_numbers = #tpu.dot_dimension_numbers<[1], [0], [0], [1], [0, 0, 1, 1], [], []>} : vector<128x128xbf16>, vector<128x128xbf16>, vector<128x128xf32> -> vector<128x128xf32>
    %c0_5 = arith.constant 0 : index
    %c0_6 = arith.constant 0 : index
    %7 = vector.load %arg8[%c0_5, %c0_6] : memref<1x128xf32, #tpu.memory_space<vmem>>, vector<1x128xf32>
    %8 = vector.shape_cast %7 : vector<1x128xf32> to vector<128xf32>
    %9 = vector.shape_cast %8 : vector<128xf32> to vector<1x128xf32>
    %10 = vector.broadcast %9 : vector<1x128xf32> to vector<128x128xf32>
    %11 = arith.addf %6, %10 : vector<128x128xf32>
    %12 = arith.truncf %11 : vector<128x128xf32> to vector<128x128xbf16>
    %13 = vector.extract_strided_slice %12 {offsets = [0, 0], sizes = [128, 32], strides = [1, 1]} : vector<128x128xbf16> to vector<128x32xbf16>
    %c0_7 = arith.constant 0 : index
    %c0_8 = arith.constant 0 : index
    %14 = vector.load %arg13[%c0_7, %c0_8] : memref<128x256xbf16, #tpu.memory_space<vmem>>, vector<32x256xbf16>
    %cst_9 = arith.constant dense<0.000000e+00> : vector<128x256xf32>
    %15 = tpu.matmul %13, %14, %cst_9 {dimension_numbers = #tpu.dot_dimension_numbers<[1], [0], [0], [1], [0, 0, 1, 1], [], []>} : vector<128x32xbf16>, vector<32x256xbf16>, vector<128x256xf32> -> vector<128x256xf32>
    %16 = tpu.iota {dimensions = array<i32: 1>} : vector<128x256xi32>
    %c200_i32 = arith.constant 200 : i32
    %17 = vector.broadcast %c200_i32 : i32 to vector<128x256xi32>
    %18 = arith.cmpi slt, %16, %17 : vector<128x256xi32>
    %cst_10 = arith.constant -1.000000e+30 : f32
    %19 = vector.broadcast %cst_10 : f32 to vector<128x256xf32>
    %20 = arith.select %18, %15, %19 : vector<128x256xi1>, vector<128x256xf32>
    %cst_11 = arith.constant dense<0xFF800000> : vector<128xf32>
    %21 = vector.multi_reduction <maximumf>, %20, %cst_11 [1] : vector<128x256xf32> to vector<128xf32>
    %22 = vector.shape_cast %21 : vector<128xf32> to vector<128x1xf32>
    %23 = vector.broadcast %22 : vector<128x1xf32> to vector<128x256xf32>
    %24 = arith.subf %20, %23 : vector<128x256xf32>
    %25 = math.exp %24 : vector<128x256xf32>
    %cst_12 = arith.constant dense<0.000000e+00> : vector<128xf32>
    %26 = vector.multi_reduction <add>, %25, %cst_12 [1] : vector<128x256xf32> to vector<128xf32>
    %27 = vector.shape_cast %26 : vector<128xf32> to vector<128x1xf32>
    %28 = tpu.reciprocal %27 {approx = true} : vector<128x1xf32> -> vector<128x1xf32>
    %29 = arith.truncf %25 : vector<128x256xf32> to vector<128x256xbf16>
    %c0_13 = arith.constant 0 : index
    %c0_14 = arith.constant 0 : index
    %30 = vector.load %arg14[%c0_13, %c0_14] : memref<256x128xbf16, #tpu.memory_space<vmem>>, vector<256x32xbf16>
    %cst_15 = arith.constant dense<0.000000e+00> : vector<128x32xf32>
    %31 = tpu.matmul %29, %30, %cst_15 {dimension_numbers = #tpu.dot_dimension_numbers<[1], [0], [0], [1], [0, 0, 1, 1], [], []>} : vector<128x256xbf16>, vector<256x32xbf16>, vector<128x32xf32> -> vector<128x32xf32>
    %32 = vector.broadcast %28 : vector<128x1xf32> to vector<128x32xf32>
    %33 = arith.mulf %31, %32 : vector<128x32xf32>
    %34 = arith.truncf %33 : vector<128x32xf32> to vector<128x32xbf16>
    %c0_16 = arith.constant 0 : index
    %c0_17 = arith.constant 0 : index
    %35 = vector.load %arg15[%c0_16, %c0_17] : memref<128x128xbf16, #tpu.memory_space<vmem>>, vector<128x32xbf16>
    tpu.vector_store %arg15[%c0_16, %c0_17], %34 {strides = array<i32>} : memref<128x128xbf16, #tpu.memory_space<vmem>>, vector<128x32xbf16>,
    %36 = vector.extract_strided_slice %12 {offsets = [0, 32], sizes = [128, 32], strides = [1, 1]} : vector<128x128xbf16> to vector<128x32xbf16>
    %c32 = arith.constant 32 : index
    %c0_18 = arith.constant 0 : index
    %37 = vector.load %arg13[%c32, %c0_18] : memref<128x256xbf16, #tpu.memory_space<vmem>>, vector<32x256xbf16>
    %cst_19 = arith.constant dense<0.000000e+00> : vector<128x256xf32>
    %38 = tpu.matmul %36, %37, %cst_19 {dimension_numbers = #tpu.dot_dimension_numbers<[1], [0], [0], [1], [0, 0, 1, 1], [], []>} : vector<128x32xbf16>, vector<32x256xbf16>, vector<128x256xf32> -> vector<128x256xf32>
    %39 = tpu.iota {dimensions = array<i32: 1>} : vector<128x256xi32>
    %c200_i32_20 = arith.constant 200 : i32
    %40 = vector.broadcast %c200_i32_20 : i32 to vector<128x256xi32>
    %41 = arith.cmpi slt, %39, %40 : vector<128x256xi32>
    %cst_21 = arith.constant -1.000000e+30 : f32
    %42 = vector.broadcast %cst_21 : f32 to vector<128x256xf32>
    %43 = arith.select %41, %38, %42 : vector<128x256xi1>, vector<128x256xf32>
    %cst_22 = arith.constant dense<0xFF800000> : vector<128xf32>
    %44 = vector.multi_reduction <maximumf>, %43, %cst_22 [1] : vector<128x256xf32> to vector<128xf32>
    %45 = vector.shape_cast %44 : vector<128xf32> to vector<128x1xf32>
    %46 = vector.broadcast %45 : vector<128x1xf32> to vector<128x256xf32>
    %47 = arith.subf %43, %46 : vector<128x256xf32>
    %48 = math.exp %47 : vector<128x256xf32>
    %cst_23 = arith.constant dense<0.000000e+00> : vector<128xf32>
    %49 = vector.multi_reduction <add>, %48, %cst_23 [1] : vector<128x256xf32> to vector<128xf32>
    %50 = vector.shape_cast %49 : vector<128xf32> to vector<128x1xf32>
    %51 = tpu.reciprocal %50 {approx = true} : vector<128x1xf32> -> vector<128x1xf32>
    %52 = arith.truncf %48 : vector<128x256xf32> to vector<128x256xbf16>
    %c0_24 = arith.constant 0 : index
    %c32_25 = arith.constant 32 : index
    %53 = vector.load %arg14[%c0_24, %c32_25] : memref<256x128xbf16, #tpu.memory_space<vmem>>, vector<256x32xbf16>
    %cst_26 = arith.constant dense<0.000000e+00> : vector<128x32xf32>
    %54 = tpu.matmul %52, %53, %cst_26 {dimension_numbers = #tpu.dot_dimension_numbers<[1], [0], [0], [1], [0, 0, 1, 1], [], []>} : vector<128x256xbf16>, vector<256x32xbf16>, vector<128x32xf32> -> vector<128x32xf32>
    %55 = vector.broadcast %51 : vector<128x1xf32> to vector<128x32xf32>
    %56 = arith.mulf %54, %55 : vector<128x32xf32>
    %57 = arith.truncf %56 : vector<128x32xf32> to vector<128x32xbf16>
    %c0_27 = arith.constant 0 : index
    %c32_28 = arith.constant 32 : index
    %58 = vector.load %arg15[%c0_27, %c32_28] : memref<128x128xbf16, #tpu.memory_space<vmem>>, vector<128x32xbf16>
    tpu.vector_store %arg15[%c0_27, %c32_28], %57 {strides = array<i32>} : memref<128x128xbf16, #tpu.memory_space<vmem>>, vector<128x32xbf16>,
    %59 = vector.extract_strided_slice %12 {offsets = [0, 64], sizes = [128, 32], strides = [1, 1]} : vector<128x128xbf16> to vector<128x32xbf16>
    %c64 = arith.constant 64 : index
    %c0_29 = arith.constant 0 : index
    %60 = vector.load %arg13[%c64, %c0_29] : memref<128x256xbf16, #tpu.memory_space<vmem>>, vector<32x256xbf16>
    %cst_30 = arith.constant dense<0.000000e+00> : vector<128x256xf32>
    %61 = tpu.matmul %59, %60, %cst_30 {dimension_numbers = #tpu.dot_dimension_numbers<[1], [0], [0], [1], [0, 0, 1, 1], [], []>} : vector<128x32xbf16>, vector<32x256xbf16>, vector<128x256xf32> -> vector<128x256xf32>
    %62 = tpu.iota {dimensions = array<i32: 1>} : vector<128x256xi32>
    %c200_i32_31 = arith.constant 200 : i32
    %63 = vector.broadcast %c200_i32_31 : i32 to vector<128x256xi32>
    %64 = arith.cmpi slt, %62, %63 : vector<128x256xi32>
    %cst_32 = arith.constant -1.000000e+30 : f32
    %65 = vector.broadcast %cst_32 : f32 to vector<128x256xf32>
    %66 = arith.select %64, %61, %65 : vector<128x256xi1>, vector<128x256xf32>
    %cst_33 = arith.constant dense<0xFF800000> : vector<128xf32>
    %67 = vector.multi_reduction <maximumf>, %66, %cst_33 [1] : vector<128x256xf32> to vector<128xf32>
    %68 = vector.shape_cast %67 : vector<128xf32> to vector<128x1xf32>
    %69 = vector.broadcast %68 : vector<128x1xf32> to vector<128x256xf32>
    %70 = arith.subf %66, %69 : vector<128x256xf32>
    %71 = math.exp %70 : vector<128x256xf32>
    %cst_34 = arith.constant dense<0.000000e+00> : vector<128xf32>
    %72 = vector.multi_reduction <add>, %71, %cst_34 [1] : vector<128x256xf32> to vector<128xf32>
    %73 = vector.shape_cast %72 : vector<128xf32> to vector<128x1xf32>
    %74 = tpu.reciprocal %73 {approx = true} : vector<128x1xf32> -> vector<128x1xf32>
    %75 = arith.truncf %71 : vector<128x256xf32> to vector<128x256xbf16>
    %c0_35 = arith.constant 0 : index
    %c64_36 = arith.constant 64 : index
    %76 = vector.load %arg14[%c0_35, %c64_36] : memref<256x128xbf16, #tpu.memory_space<vmem>>, vector<256x32xbf16>
    %cst_37 = arith.constant dense<0.000000e+00> : vector<128x32xf32>
    %77 = tpu.matmul %75, %76, %cst_37 {dimension_numbers = #tpu.dot_dimension_numbers<[1], [0], [0], [1], [0, 0, 1, 1], [], []>} : vector<128x256xbf16>, vector<256x32xbf16>, vector<128x32xf32> -> vector<128x32xf32>
    %78 = vector.broadcast %74 : vector<128x1xf32> to vector<128x32xf32>
    %79 = arith.mulf %77, %78 : vector<128x32xf32>
    %80 = arith.truncf %79 : vector<128x32xf32> to vector<128x32xbf16>
    %c0_38 = arith.constant 0 : index
    %c64_39 = arith.constant 64 : index
    %81 = vector.load %arg15[%c0_38, %c64_39] : memref<128x128xbf16, #tpu.memory_space<vmem>>, vector<128x32xbf16>
    tpu.vector_store %arg15[%c0_38, %c64_39], %80 {strides = array<i32>} : memref<128x128xbf16, #tpu.memory_space<vmem>>, vector<128x32xbf16>,
    %82 = vector.extract_strided_slice %12 {offsets = [0, 96], sizes = [128, 32], strides = [1, 1]} : vector<128x128xbf16> to vector<128x32xbf16>
    %c96 = arith.constant 96 : index
    %c0_40 = arith.constant 0 : index
    %83 = vector.load %arg13[%c96, %c0_40] : memref<128x256xbf16, #tpu.memory_space<vmem>>, vector<32x256xbf16>
    %cst_41 = arith.constant dense<0.000000e+00> : vector<128x256xf32>
    %84 = tpu.matmul %82, %83, %cst_41 {dimension_numbers = #tpu.dot_dimension_numbers<[1], [0], [0], [1], [0, 0, 1, 1], [], []>} : vector<128x32xbf16>, vector<32x256xbf16>, vector<128x256xf32> -> vector<128x256xf32>
    %85 = tpu.iota {dimensions = array<i32: 1>} : vector<128x256xi32>
    %c200_i32_42 = arith.constant 200 : i32
    %86 = vector.broadcast %c200_i32_42 : i32 to vector<128x256xi32>
    %87 = arith.cmpi slt, %85, %86 : vector<128x256xi32>
    %cst_43 = arith.constant -1.000000e+30 : f32
    %88 = vector.broadcast %cst_43 : f32 to vector<128x256xf32>
    %89 = arith.select %87, %84, %88 : vector<128x256xi1>, vector<128x256xf32>
    %cst_44 = arith.constant dense<0xFF800000> : vector<128xf32>
    %90 = vector.multi_reduction <maximumf>, %89, %cst_44 [1] : vector<128x256xf32> to vector<128xf32>
    %91 = vector.shape_cast %90 : vector<128xf32> to vector<128x1xf32>
    %92 = vector.broadcast %91 : vector<128x1xf32> to vector<128x256xf32>
    %93 = arith.subf %89, %92 : vector<128x256xf32>
    %94 = math.exp %93 : vector<128x256xf32>
    %cst_45 = arith.constant dense<0.000000e+00> : vector<128xf32>
    %95 = vector.multi_reduction <add>, %94, %cst_45 [1] : vector<128x256xf32> to vector<128xf32>
    %96 = vector.shape_cast %95 : vector<128xf32> to vector<128x1xf32>
    %97 = tpu.reciprocal %96 {approx = true} : vector<128x1xf32> -> vector<128x1xf32>
    %98 = arith.truncf %94 : vector<128x256xf32> to vector<128x256xbf16>
    %c0_46 = arith.constant 0 : index
    %c96_47 = arith.constant 96 : index
    %99 = vector.load %arg14[%c0_46, %c96_47] : memref<256x128xbf16, #tpu.memory_space<vmem>>, vector<256x32xbf16>
    %cst_48 = arith.constant dense<0.000000e+00> : vector<128x32xf32>
    %100 = tpu.matmul %98, %99, %cst_48 {dimension_numbers = #tpu.dot_dimension_numbers<[1], [0], [0], [1], [0, 0, 1, 1], [], []>} : vector<128x256xbf16>, vector<256x32xbf16>, vector<128x32xf32> -> vector<128x32xf32>
    %101 = vector.broadcast %97 : vector<128x1xf32> to vector<128x32xf32>
    %102 = arith.mulf %100, %101 : vector<128x32xf32>
    %103 = arith.truncf %102 : vector<128x32xf32> to vector<128x32xbf16>
    %c0_49 = arith.constant 0 : index
    %c96_50 = arith.constant 96 : index
    %104 = vector.load %arg15[%c0_49, %c96_50] : memref<128x128xbf16, #tpu.memory_space<vmem>>, vector<128x32xbf16>
    tpu.vector_store %arg15[%c0_49, %c96_50], %103 {strides = array<i32>} : memref<128x128xbf16, #tpu.memory_space<vmem>>, vector<128x32xbf16>,
    %c0_51 = arith.constant 0 : index
    %c0_52 = arith.constant 0 : index
    %105 = vector.load %arg15[%c0_51, %c0_52] : memref<128x128xbf16, #tpu.memory_space<vmem>>, vector<128x128xbf16>
    %c0_53 = arith.constant 0 : index
    %c0_54 = arith.constant 0 : index
    %106 = vector.load %arg7[%c0_53, %c0_54] : memref<128x128xbf16, #tpu.memory_space<vmem>>, vector<128x128xbf16>
    %cst_55 = arith.constant dense<0.000000e+00> : vector<128x128xf32>
    %107 = tpu.matmul %105, %106, %cst_55 {dimension_numbers = #tpu.dot_dimension_numbers<[1], [0], [0], [1], [0, 0, 1, 1], [], []>} : vector<128x128xbf16>, vector<128x128xbf16>, vector<128x128xf32> -> vector<128x128xf32>
    %c0_56 = arith.constant 0 : index
    %c0_57 = arith.constant 0 : index
    %108 = vector.load %arg11[%c0_56, %c0_57] : memref<1x128xf32, #tpu.memory_space<vmem>>, vector<1x128xf32>
    %109 = vector.shape_cast %108 : vector<1x128xf32> to vector<128xf32>
    %110 = vector.shape_cast %109 : vector<128xf32> to vector<1x128xf32>
    %111 = vector.broadcast %110 : vector<1x128xf32> to vector<128x128xf32>
    %112 = arith.addf %107, %111 : vector<128x128xf32>
    %c0_58 = arith.constant 0 : index
    %c0_59 = arith.constant 0 : index
    %c0_60 = arith.constant 0 : index
    %113 = vector.load %arg12[%c0_58, %c0_59, %c0_60] : memref<1x128x128xf32, #tpu.memory_space<vmem>>, vector<1x128x128xf32>
    %114 = vector.shape_cast %113 : vector<1x128x128xf32> to vector<128x128xf32>
    %115 = vector.shape_cast %112 : vector<128x128xf32> to vector<1x128x128xf32>
    tpu.vector_store %arg12[%c0_58, %c0_59, %c0_60], %115 {strides = array<i32>} : memref<1x128x128xf32, #tpu.memory_space<vmem>>, vector<1x128x128xf32>,
    return
  }
  func.func @transform_0(%arg0: i32, %arg1: i32) -> (i32, i32, i32) {
    %c0_i32 = arith.constant 0 : i32
    %c0_i32_0 = arith.constant 0 : i32
    return %arg0, %arg1, %c0_i32 : i32, i32, i32
  }
  func.func @transform_1(%arg0: i32, %arg1: i32) -> (i32, i32, i32) {
    %c0_i32 = arith.constant 0 : i32
    %c0_i32_0 = arith.constant 0 : i32
    %c0_i32_1 = arith.constant 0 : i32
    return %arg0, %c0_i32, %c0_i32_0 : i32, i32, i32
  }
  func.func @transform_2(%arg0: i32, %arg1: i32) -> (i32, i32) {
    %c0_i32 = arith.constant 0 : i32
    %c0_i32_0 = arith.constant 0 : i32
    %c0_i32_1 = arith.constant 0 : i32
    return %c0_i32, %c0_i32_0 : i32, i32
  }
  func.func @transform_3(%arg0: i32, %arg1: i32) -> (i32, i32) {
    %c0_i32 = arith.constant 0 : i32
    %c0_i32_0 = arith.constant 0 : i32
    %c0_i32_1 = arith.constant 0 : i32
    return %c0_i32, %c0_i32_0 : i32, i32
  }
  func.func @transform_4(%arg0: i32, %arg1: i32) -> (i32, i32) {
    %c0_i32 = arith.constant 0 : i32
    %c0_i32_0 = arith.constant 0 : i32
    %c0_i32_1 = arith.constant 0 : i32
    return %c0_i32, %c0_i32_0 : i32, i32
  }
  func.func @transform_5(%arg0: i32, %arg1: i32) -> (i32, i32) {
    %c0_i32 = arith.constant 0 : i32
    %c0_i32_0 = arith.constant 0 : i32
    %c0_i32_1 = arith.constant 0 : i32
    return %c0_i32, %c0_i32_0 : i32, i32
  }
  func.func @transform_6(%arg0: i32, %arg1: i32) -> (i32, i32) {
    %c0_i32 = arith.constant 0 : i32
    %c0_i32_0 = arith.constant 0 : i32
    %c0_i32_1 = arith.constant 0 : i32
    return %c0_i32, %c0_i32_0 : i32, i32
  }
  func.func @transform_7(%arg0: i32, %arg1: i32) -> (i32, i32) {
    %c0_i32 = arith.constant 0 : i32
    %c0_i32_0 = arith.constant 0 : i32
    %c0_i32_1 = arith.constant 0 : i32
    return %c0_i32, %c0_i32_0 : i32, i32
  }
  func.func @transform_8(%arg0: i32, %arg1: i32) -> (i32, i32) {
    %c0_i32 = arith.constant 0 : i32
    %c0_i32_0 = arith.constant 0 : i32
    %c0_i32_1 = arith.constant 0 : i32
    return %c0_i32, %c0_i32_0 : i32, i32
  }
  func.func @transform_9(%arg0: i32, %arg1: i32) -> (i32, i32) {
    %c0_i32 = arith.constant 0 : i32
    %c0_i32_0 = arith.constant 0 : i32
    %c0_i32_1 = arith.constant 0 : i32
    return %c0_i32, %c0_i32_0 : i32, i32
  }
  func.func @transform_10(%arg0: i32, %arg1: i32) -> (i32, i32, i32) {
    %c0_i32 = arith.constant 0 : i32
    %c0_i32_0 = arith.constant 0 : i32
    return %arg0, %arg1, %c0_i32 : i32, i32, i32
  }
}

</mosaic_0001>

<llo_original>
// kernel: tpu_custom_call.1
$region0: #{tpu_custom_call.1}
  #allocation0 [shape = 'u32[]', space=smem, size = 0x4, offset = 0x4, fixed_abs, tag = 'smem constant byte address 0x4 - core index']
  #allocation1 [shape = 'u32[144,128]{1,0:T(1,128)}', space=vmem, size = 0x12000, scoped, tag = 'internal scratch']
  #allocation2 [shape = 'bf16[128,256]{1,0:T(16,128)(2,1)}', space=vmem, size = 0x10000, scoped, tag = 'scratch operand']
  #allocation3 [shape = 'bf16[256,128]{1,0:T(16,128)(2,1)}', space=vmem, size = 0x10000, scoped, tag = 'scratch operand']
  #allocation4 [shape = 'bf16[128,128]{1,0:T(16,128)(2,1)}', space=vmem, size = 0x8000, scoped, tag = 'scratch operand']
  %s0 = inlined_call_operand.hbm [shape: bf16[2,256,128], index: 0, kind: input, shape index: {}]
  %s1 = inlined_call_operand.hbm [shape: bf16[2,256,128], index: 1, kind: input, shape index: {}]
  %s2 = inlined_call_operand.hbm [shape: bf16[128,128], index: 2, kind: input, shape index: {}]
  %s3 = inlined_call_operand.hbm [shape: bf16[128,128], index: 3, kind: input, shape index: {}]
  %s4 = inlined_call_operand.hbm [shape: bf16[128,128], index: 4, kind: input, shape index: {}]
  %s5 = inlined_call_operand.hbm [shape: bf16[128,128], index: 5, kind: input, shape index: {}]
  %s6 = inlined_call_operand.vmem [shape: f32[1,128], index: 6, kind: input, shape index: {}]
  %s7 = inlined_call_operand.vmem [shape: f32[1,128], index: 7, kind: input, shape index: {}]
  %s8 = inlined_call_operand.vmem [shape: f32[1,128], index: 8, kind: input, shape index: {}]
  %s9 = inlined_call_operand.vmem [shape: f32[1,128], index: 9, kind: input, shape index: {}]
  %s10 = inlined_call_operand.hbm [shape: f32[2,256,128], index: 10, kind: output, shape index: {}]
  %s11 = sld [smem:[#allocation0]]
  $region101: #{tpu_custom_call.1} parent=0
    _
  %s13 = ssub.s32 1, %s11
  %s14 = scalar_select 0, %s13, %s11
  $region1: #{tpu_custom_call.1} parent=0
    #allocation5 [shape = 'u8[65536]{0}', space=vmem, size = 0x10000, scoped, tag = 'input window, operand 0']
    #allocation6 [shape = 's32[2]{0}', space=sflag, size = 0x8, scoped, tag = 'scoped memory for tpu_custom_call.1']
    #allocation7 [shape = 's32[2]{0}', space=sflag, size = 0x8, scoped, tag = 'scoped memory for tpu_custom_call.1']
    #allocation8 [shape = 'u8[131072]{0}', space=vmem, size = 0x20000, scoped, tag = 'input window, operand 1']
    #allocation9 [shape = 's32[2]{0}', space=sflag, size = 0x8, scoped, tag = 'scoped memory for tpu_custom_call.1']
    #allocation10 [shape = 'u8[32768]{0}', space=vmem, size = 0x8000, scoped, tag = 'input window, operand 2, single buffered']
    #allocation11 [shape = 'u8[32768]{0}', space=vmem, size = 0x8000, scoped, tag = 'input window, operand 3, single buffered']
    #allocation12 [shape = 's32[1]{0}', space=sflag, size = 0x4, scoped, tag = 'scoped memory for tpu_custom_call.1']
    #allocation13 [shape = 'u8[32768]{0}', space=vmem, size = 0x8000, scoped, tag = 'input window, operand 4, single buffered']
    #allocation14 [shape = 'u8[32768]{0}', space=vmem, size = 0x8000, scoped, tag = 'input window, operand 5, single buffered']
    #allocation15 [shape = 's32[1]{0}', space=sflag, size = 0x4, scoped, tag = 'scoped memory for tpu_custom_call.1']
    #allocation16 [shape = 'u8[131072]{0}', space=vmem, size = 0x20000, scoped, tag = 'output window, operand 0']
    %15 = vsyncpa [#allocation6], 0
    %s16 = scalar_lea.sflag [#allocation6], 1
    %17 = vsyncpa %s16, 0
    %18 = vsyncpa [#allocation9], 0
    %s19 = scalar_lea.sflag [#allocation9], 1
    %20 = vsyncpa %s19, 0
    %21 = vsyncpa [#allocation12], 0
    %22 = vsyncpa [#allocation15], 0
    %23 = vsyncpa [#allocation7], 0
    %s24 = scalar_lea.sflag [#allocation7], 1
    %25 = vsyncpa %s24, 0
    loop: start=0, step=1, limit=6
    $region2: #{tpu_custom_call.1} parent=1 // loop_pre_header
      _
    $region3: #{tpu_custom_call.1} parent=1 // loop_header
      %s27 = sphi 0, %s31
      %p28 = scmp.ge.s32.totalorder %s27, 6
      %s34 = sphi 0, %s46
      %s35 = sphi 0, %s42
      %s36 = sphi 0, %s34
      %s37 = sphi 0, %s35
      %s38 = sphi 0, %s36
      %s39 = sphi 0, %s37
      %s51 = sphi 0, %s53
      %s54 = sphi 0, %s51
      %s55 = sphi 0, %s54
      %s71 = sphi 0, %s55
      %s77 = sphi 0, %s79
      %s80 = sphi 0, %s77
      %s81 = sphi 0, %s80
      %s97 = sphi 0, %s81
      %s101 = sphi 0, %s101
      %s103 = sphi 0, %s101
      %s104 = sphi 0, %s103
      %s118 = sphi 0, %s104
      %s122 = sphi 0, %s122
      %s124 = sphi 0, %s122
      %s125 = sphi 0, %s124
      %s139 = sphi 0, %s125
      %s143 = sphi 0, %s143
      %s145 = sphi 0, %s143
      %s146 = sphi 0, %s145
      %s160 = sphi 0, %s146
      %s164 = sphi 0, %s164
      %s166 = sphi 0, %s164
      %s167 = sphi 0, %s166
      %s181 = sphi 0, %s167
      %s185 = sphi 0, %s185
      %s187 = sphi 0, %s185
      %s188 = sphi 0, %s187
      %s202 = sphi 0, %s188
      %s206 = sphi 0, %s206
      %s208 = sphi 0, %s206
      %s209 = sphi 0, %s208
      %s223 = sphi 0, %s209
      %s227 = sphi 0, %s227
      %s229 = sphi 0, %s227
      %s230 = sphi 0, %s229
      %s244 = sphi 0, %s230
      %s248 = sphi 0, %s248
      %s250 = sphi 0, %s248
      %s251 = sphi 0, %s250
      %s265 = sphi 0, %s251
      %s273 = sphi 0, %s275
      %s276 = sphi 0, %s273
      %s277 = sphi 0, %s276
      %s293 = sphi 0, %s277
    $region4: #{tpu_custom_call.1} parent=1 // loop_header_branch
      %30 = sbr.rel (%p28) target = $region8
    $region5: #{tpu_custom_call.1} parent=1 // loop_body
      %s32 = ssub.s32 %s27, 1
      %s33 = ssub.s32 %s27, 2
      %s40 = sadd.s32 1, %s35
      %p41 = scmp.ge.s32.totalorder %s40, 2
      %s42 = scalar_select %p41, 0, %s40
      %s43 = sadd.s32 1, %s34
      %s44 = scalar_select %p41, %s43, %s34
      %p45 = scmp.ge.s32.totalorder %s44, 2
      %s46 = scalar_select %p45, 0, %s44
      %s47 = ssub.s32 %s34, %s46
      %s48 = ssub.s32 %s35, %s42
      %s49 = sor.u32 %s47, %s48
      %p50 = scmp.eq.s32.totalorder %s49, 0
      %s52 = sadd.s32 %s51, 1
      %s53 = scalar_select %p50, %s51, %s52
      %p56 = pneg %p50
      %p57 = scmp.eq.s32.totalorder %s27, 3
      %p58 = por %p56, %p57
      %p59 = scmp.ne.s32.totalorder %s51, %s54
      %p60 = scmp.eq.s32.totalorder %s27, 0
      %p61 = por %p59, %p60
      %p62 = scmp.ne.s32.totalorder %s51, %s54
      %p63 = scmp.eq.s32.totalorder %s32, 3
      %p64 = por %p62, %p63
      %p65 = scmp.ne.s32.totalorder %s54, %s55
      %p66 = scmp.eq.s32.totalorder %s32, 0
      %p67 = por %p65, %p66
      %p68 = scmp.ne.s32.totalorder %s54, %s55
      %p69 = scmp.eq.s32.totalorder %s33, 3
      %p70 = por %p68, %p69
      %p72 = scmp.ne.s32.totalorder %s55, %s71
      %p73 = scmp.eq.s32.totalorder %s33, 0
      %p74 = por %p72, %p73
      %s75 = ssub.s32 %s34, %s46
      %p76 = scmp.eq.s32.totalorder %s75, 0
      %s78 = sadd.s32 %s77, 1
      %s79 = scalar_select %p76, %s77, %s78
      %p82 = pneg %p76
      %p83 = scmp.eq.s32.totalorder %s27, 3
      %p84 = por %p82, %p83
      %p85 = scmp.ne.s32.totalorder %s77, %s80
      %p86 = scmp.eq.s32.totalorder %s27, 0
      %p87 = por %p85, %p86
      %p88 = scmp.ne.s32.totalorder %s77, %s80
      %p89 = scmp.eq.s32.totalorder %s32, 3
      %p90 = por %p88, %p89
      %p91 = scmp.ne.s32.totalorder %s80, %s81
      %p92 = scmp.eq.s32.totalorder %s32, 0
      %p93 = por %p91, %p92
      %p94 = scmp.ne.s32.totalorder %s80, %s81
      %p95 = scmp.eq.s32.totalorder %s33, 3
      %p96 = por %p94, %p95
      %p98 = scmp.ne.s32.totalorder %s81, %s97
      %p99 = scmp.eq.s32.totalorder %s33, 0
      %p100 = por %p98, %p99
      %s102 = sadd.s32 %s101, 1
      %p105 = scmp.eq.s32.totalorder %s27, 3
      %p106 = scmp.ne.s32.totalorder %s101, %s103
      %p107 = scmp.eq.s32.totalorder %s27, 0
      %p108 = por %p106, %p107
      %p109 = scmp.ne.s32.totalorder %s101, %s103
      %p110 = scmp.eq.s32.totalorder %s32, 3
      %p111 = por %p109, %p110
      %p112 = scmp.ne.s32.totalorder %s103, %s104
      %p113 = scmp.eq.s32.totalorder %s32, 0
      %p114 = por %p112, %p113
      %p115 = scmp.ne.s32.totalorder %s103, %s104
      %p116 = scmp.eq.s32.totalorder %s33, 3
      %p117 = por %p115, %p116
      %p119 = scmp.ne.s32.totalorder %s104, %s118
      %p120 = scmp.eq.s32.totalorder %s33, 0
      %p121 = por %p119, %p120
      %s123 = sadd.s32 %s122, 1
      %p126 = scmp.eq.s32.totalorder %s27, 3
      %p127 = scmp.ne.s32.totalorder %s122, %s124
      %p128 = scmp.eq.s32.totalorder %s27, 0
      %p129 = por %p127, %p128
      %p130 = scmp.ne.s32.totalorder %s122, %s124
      %p131 = scmp.eq.s32.totalorder %s32, 3
      %p132 = por %p130, %p131
      %p133 = scmp.ne.s32.totalorder %s124, %s125
      %p134 = scmp.eq.s32.totalorder %s32, 0
      %p135 = por %p133, %p134
      %p136 = scmp.ne.s32.totalorder %s124, %s125
      %p137 = scmp.eq.s32.totalorder %s33, 3
      %p138 = por %p136, %p137
      %p140 = scmp.ne.s32.totalorder %s125, %s139
      %p141 = scmp.eq.s32.totalorder %s33, 0
      %p142 = por %p140, %p141
      %s144 = sadd.s32 %s143, 1
      %p147 = scmp.eq.s32.totalorder %s27, 3
      %p148 = scmp.ne.s32.totalorder %s143, %s145
      %p149 = scmp.eq.s32.totalorder %s27, 0
      %p150 = por %p148, %p149
      %p151 = scmp.ne.s32.totalorder %s143, %s145
      %p152 = scmp.eq.s32.totalorder %s32, 3
      %p153 = por %p151, %p152
      %p154 = scmp.ne.s32.totalorder %s145, %s146
      %p155 = scmp.eq.s32.totalorder %s32, 0
      %p156 = por %p154, %p155
      %p157 = scmp.ne.s32.totalorder %s145, %s146
      %p158 = scmp.eq.s32.totalorder %s33, 3
      %p159 = por %p157, %p158
      %p161 = scmp.ne.s32.totalorder %s146, %s160
      %p162 = scmp.eq.s32.totalorder %s33, 0
      %p163 = por %p161, %p162
      %s165 = sadd.s32 %s164, 1
      %p168 = scmp.eq.s32.totalorder %s27, 3
      %p169 = scmp.ne.s32.totalorder %s164, %s166
      %p170 = scmp.eq.s32.totalorder %s27, 0
      %p171 = por %p169, %p170
      %p172 = scmp.ne.s32.totalorder %s164, %s166
      %p173 = scmp.eq.s32.totalorder %s32, 3
      %p174 = por %p172, %p173
      %p175 = scmp.ne.s32.totalorder %s166, %s167
      %p176 = scmp.eq.s32.totalorder %s32, 0
      %p177 = por %p175, %p176
      %p178 = scmp.ne.s32.totalorder %s166, %s167
      %p179 = scmp.eq.s32.totalorder %s33, 3
      %p180 = por %p178, %p179
      %p182 = scmp.ne.s32.totalorder %s167, %s181
      %p183 = scmp.eq.s32.totalorder %s33, 0
      %p184 = por %p182, %p183
      %s186 = sadd.s32 %s185, 1
      %p189 = scmp.eq.s32.totalorder %s27, 3
      %p190 = scmp.ne.s32.totalorder %s185, %s187
      %p191 = scmp.eq.s32.totalorder %s27, 0
      %p192 = por %p190, %p191
      %p193 = scmp.ne.s32.totalorder %s185, %s187
      %p194 = scmp.eq.s32.totalorder %s32, 3
      %p195 = por %p193, %p194
      %p196 = scmp.ne.s32.totalorder %s187, %s188
      %p197 = scmp.eq.s32.totalorder %s32, 0
      %p198 = por %p196, %p197
      %p199 = scmp.ne.s32.totalorder %s187, %s188
      %p200 = scmp.eq.s32.totalorder %s33, 3
      %p201 = por %p199, %p200
      %p203 = scmp.ne.s32.totalorder %s188, %s202
      %p204 = scmp.eq.s32.totalorder %s33, 0
      %p205 = por %p203, %p204
      %s207 = sadd.s32 %s206, 1
      %p210 = scmp.eq.s32.totalorder %s27, 3
      %p211 = scmp.ne.s32.totalorder %s206, %s208
      %p212 = scmp.eq.s32.totalorder %s27, 0
      %p213 = por %p211, %p212
      %p214 = scmp.ne.s32.totalorder %s206, %s208
      %p215 = scmp.eq.s32.totalorder %s32, 3
      %p216 = por %p214, %p215
      %p217 = scmp.ne.s32.totalorder %s208, %s209
      %p218 = scmp.eq.s32.totalorder %s32, 0
      %p219 = por %p217, %p218
      %p220 = scmp.ne.s32.totalorder %s208, %s209
      %p221 = scmp.eq.s32.totalorder %s33, 3
      %p222 = por %p220, %p221
      %p224 = scmp.ne.s32.totalorder %s209, %s223
      %p225 = scmp.eq.s32.totalorder %s33, 0
      %p226 = por %p224, %p225
      %s228 = sadd.s32 %s227, 1
      %p231 = scmp.eq.s32.totalorder %s27, 3
      %p232 = scmp.ne.s32.totalorder %s227, %s229
      %p233 = scmp.eq.s32.totalorder %s27, 0
      %p234 = por %p232, %p233
      %p235 = scmp.ne.s32.totalorder %s227, %s229
      %p236 = scmp.eq.s32.totalorder %s32, 3
      %p237 = por %p235, %p236
      %p238 = scmp.ne.s32.totalorder %s229, %s230
      %p239 = scmp.eq.s32.totalorder %s32, 0
      %p240 = por %p238, %p239
      %p241 = scmp.ne.s32.totalorder %s229, %s230
      %p242 = scmp.eq.s32.totalorder %s33, 3
      %p243 = por %p241, %p242
      %p245 = scmp.ne.s32.totalorder %s230, %s244
      %p246 = scmp.eq.s32.totalorder %s33, 0
      %p247 = por %p245, %p246
      %s249 = sadd.s32 %s248, 1
      %p252 = scmp.eq.s32.totalorder %s27, 3
      %p253 = scmp.ne.s32.totalorder %s248, %s250
      %p254 = scmp.eq.s32.totalorder %s27, 0
      %p255 = por %p253, %p254
      %p256 = scmp.ne.s32.totalorder %s248, %s250
      %p257 = scmp.eq.s32.totalorder %s32, 3
      %p258 = por %p256, %p257
      %p259 = scmp.ne.s32.totalorder %s250, %s251
      %p260 = scmp.eq.s32.totalorder %s32, 0
      %p261 = por %p259, %p260
      %p262 = scmp.ne.s32.totalorder %s250, %s251
      %p263 = scmp.eq.s32.totalorder %s33, 3
      %p264 = por %p262, %p263
      %p266 = scmp.ne.s32.totalorder %s251, %s265
      %p267 = scmp.eq.s32.totalorder %s33, 0
      %p268 = por %p266, %p267
      %s269 = ssub.s32 %s34, %s46
      %s270 = ssub.s32 %s35, %s42
      %s271 = sor.u32 %s269, %s270
      %p272 = scmp.eq.s32.totalorder %s271, 0
      %s274 = sadd.s32 %s273, 1
      %s275 = scalar_select %p272, %s273, %s274
      %p278 = pneg %p272
      %p279 = scmp.eq.s32.totalorder %s27, 3
      %p280 = por %p278, %p279
      %p281 = scmp.ne.s32.totalorder %s273, %s276
      %p282 = scmp.eq.s32.totalorder %s27, 0
      %p283 = por %p281, %p282
      %p284 = scmp.ne.s32.totalorder %s273, %s276
      %p285 = scmp.eq.s32.totalorder %s32, 3
      %p286 = por %p284, %p285
      %p287 = scmp.ne.s32.totalorder %s276, %s277
      %p288 = scmp.eq.s32.totalorder %s32, 0
      %p289 = por %p287, %p288
      %p290 = scmp.ne.s32.totalorder %s276, %s277
      %p291 = scmp.eq.s32.totalorder %s33, 3
      %p292 = por %p290, %p291
      %p294 = scmp.ne.s32.totalorder %s277, %s293
      %p295 = scmp.eq.s32.totalorder %s33, 0
      %p296 = por %p294, %p295
      %p297 = scmp.le.s32.totalorder 1, %s27
      %p298 = scmp.lt.s32.totalorder %s27, 5
      %p299 = pnand %p297, %p298
      %p300 = pneg %p299
      // Predicated region
      $region9: #{tpu_custom_call.1} parent=5 // pred_check
        _
      $region10: #{tpu_custom_call.1} parent=5 // pred_check_branch
        %302 = sbr.rel (%p299) target = $region12
      $region11: #{tpu_custom_call.1} parent=5 // pred_region
        %s303 = ssub.s32 %s27, 1
        // Predicated region
        $region13: #{tpu_custom_call.1} parent=11 // pred_check
          %p304 = pneg %p114
        $region14: #{tpu_custom_call.1} parent=11 // pred_check_branch
          %306 = sbr.rel (%p304) target = $region16
        $region15: #{tpu_custom_call.1} parent=11 // pred_region
          %s308 = ssub.s32 1024, 1024
          %309 = vsyncadd [#allocation9], %s308
          %s310 = sshll.u32 [#allocation10], 4
          %s311 = int_to_ptr.vmem [resolvable:$true] %s310
          %316 = dma.hbm_to_vmem [thread:$0]  %s2, 1024, %s311, [#allocation9], 64, 64, 4
        $region16: #{tpu_custom_call.1} parent=11 // pred_fallthru
          _
        // Predicated region
        $region17: #{tpu_custom_call.1} parent=11 // pred_check
          %p317 = pneg %p135
        $region18: #{tpu_custom_call.1} parent=11 // pred_check_branch
          %319 = sbr.rel (%p317) target = $region20
        $region19: #{tpu_custom_call.1} parent=11 // pred_region
          %s321 = ssub.s32 1024, 1024
          %322 = vsyncadd [#allocation12], %s321
          %s323 = sshll.u32 [#allocation11], 4
          %s324 = int_to_ptr.vmem [resolvable:$true] %s323
          %329 = dma.hbm_to_vmem [thread:$0]  %s3, 1024, %s324, [#allocation12], 64, 64, 4
        $region20: #{tpu_custom_call.1} parent=11 // pred_fallthru
          _
        // Predicated region
        $region21: #{tpu_custom_call.1} parent=11 // pred_check
          %p330 = pneg %p156
        $region22: #{tpu_custom_call.1} parent=11 // pred_check_branch
          %332 = sbr.rel (%p330) target = $region24
        $region23: #{tpu_custom_call.1} parent=11 // pred_region
          %s334 = ssub.s32 1024, 1024
          %335 = vsyncadd [#allocation12], %s334
          %s336 = sshll.u32 [#allocation13], 4
          %s337 = int_to_ptr.vmem [resolvable:$true] %s336
          %342 = dma.hbm_to_vmem [thread:$0]  %s4, 1024, %s337, [#allocation12], 64, 64, 4
        $region24: #{tpu_custom_call.1} parent=11 // pred_fallthru
          _
        // Predicated region
        $region25: #{tpu_custom_call.1} parent=11 // pred_check
          %p343 = pneg %p177
        $region26: #{tpu_custom_call.1} parent=11 // pred_check_branch
          %345 = sbr.rel (%p343) target = $region28
        $region27: #{tpu_custom_call.1} parent=11 // pred_region
          %s347 = ssub.s32 1024, 1024
          %348 = vsyncadd [#allocation15], %s347
          %s349 = sshll.u32 [#allocation14], 4
          %s350 = int_to_ptr.vmem [resolvable:$true] %s349
          %355 = dma.hbm_to_vmem [thread:$0]  %s5, 1024, %s350, [#allocation15], 64, 64, 4
        $region28: #{tpu_custom_call.1} parent=11 // pred_fallthru
          _
        // Predicated region
        $region29: #{tpu_custom_call.1} parent=11 // pred_check
          %p356 = pneg %p198
        $region30: #{tpu_custom_call.1} parent=11 // pred_check_branch
          %358 = sbr.rel (%p356) target = $region32
        $region31: #{tpu_custom_call.1} parent=11 // pred_region
          _
        $region32: #{tpu_custom_call.1} parent=11 // pred_fallthru
          _
        // Predicated region
        $region33: #{tpu_custom_call.1} parent=11 // pred_check
          %p359 = pneg %p219
        $region34: #{tpu_custom_call.1} parent=11 // pred_check_branch
          %361 = sbr.rel (%p359) target = $region36
        $region35: #{tpu_custom_call.1} parent=11 // pred_region
          _
        $region36: #{tpu_custom_call.1} parent=11 // pred_fallthru
          _
        // Predicated region
        $region37: #{tpu_custom_call.1} parent=11 // pred_check
          %p362 = pneg %p240
        $region38: #{tpu_custom_call.1} parent=11 // pred_check_branch
          %364 = sbr.rel (%p362) target = $region40
        $region39: #{tpu_custom_call.1} parent=11 // pred_region
          _
        $region40: #{tpu_custom_call.1} parent=11 // pred_fallthru
          _
        // Predicated region
        $region41: #{tpu_custom_call.1} parent=11 // pred_check
          %p365 = pneg %p261
        $region42: #{tpu_custom_call.1} parent=11 // pred_check_branch
          %367 = sbr.rel (%p365) target = $region44
        $region43: #{tpu_custom_call.1} parent=11 // pred_region
          _
        $region44: #{tpu_custom_call.1} parent=11 // pred_fallthru
          _
      $region12: #{tpu_custom_call.1} parent=5 // pred_fallthru
        _
      %p368 = scmp.lt.s32.totalorder %s27, 4
      // Predicated region
      $region45: #{tpu_custom_call.1} parent=5 // pred_check
        %p369 = pneg %p368
      $region46: #{tpu_custom_call.1} parent=5 // pred_check_branch
        %371 = sbr.rel (%p369) target = $region48
      $region47: #{tpu_custom_call.1} parent=5 // pred_region
        // Predicated region
        $region49: #{tpu_custom_call.1} parent=47 // pred_check
          %p372 = pneg %p61
        $region50: #{tpu_custom_call.1} parent=47 // pred_check_branch
          %374 = sbr.rel (%p372) target = $region52
        $region51: #{tpu_custom_call.1} parent=47 // pred_region
          %s375 = sand.u32 %s51, 1
          %s376 = scalar_lea.sflag [#allocation6], %s375
          %s377 = sand.u32 %s51, 1
          %s378 = smul.addr %s377, 64
          %s379 = scalar_lea.vmem [#allocation5], %s378
          %s380 = smul.u32 16, %s35
          %s382 = ssub.s32 1024, 1024
          %383 = vsyncadd %s376, %s382
          %s384 = smul.addr %s34, 32
          %s385 = sadd.s32 %s380, %s384
          %s386 = smul.addr %s385, 64
          %s387 = scalar_lea.hbm %s0, %s386
          %s388 = sshll.u32 %s379, 4
          %s389 = int_to_ptr.vmem [resolvable:$true] %s388
          %394 = dma.hbm_to_vmem [thread:$0]  %s387, 1024, %s389, %s376, 64, 64, 4
        $region52: #{tpu_custom_call.1} parent=47 // pred_fallthru
          _
        // Predicated region
        $region53: #{tpu_custom_call.1} parent=47 // pred_check
          %p395 = pneg %p87
        $region54: #{tpu_custom_call.1} parent=47 // pred_check_branch
          %397 = sbr.rel (%p395) target = $region56
        $region55: #{tpu_custom_call.1} parent=47 // pred_region
          %s398 = sand.u32 %s27, 1
          %s399 = scalar_lea.sflag [#allocation9], %s398
          %s400 = sand.u32 %s77, 1
          %s401 = smul.addr %s400, 128
          %s402 = scalar_lea.vmem [#allocation8], %s401
          %s404 = ssub.s32 2048, 2048
          %405 = vsyncadd %s399, %s404
          %s406 = smul.addr %s34, 32
          %s407 = smul.addr %s406, 64
          %s408 = scalar_lea.hbm %s1, %s407
          %s409 = sshll.u32 %s402, 4
          %s410 = int_to_ptr.vmem [resolvable:$true] %s409
          %415 = dma.hbm_to_vmem [thread:$0]  %s408, 2048, %s410, %s399, 64, 64, 4
        $region56: #{tpu_custom_call.1} parent=47 // pred_fallthru
          _
      $region48: #{tpu_custom_call.1} parent=5 // pred_fallthru
        _
      %p416 = scmp.le.s32.totalorder 1, %s27
      %p417 = scmp.lt.s32.totalorder %s27, 5
      %p418 = pnand %p416, %p417
      %p419 = pneg %p418
      // Predicated region
      $region57: #{tpu_custom_call.1} parent=5 // pred_check
        _
      $region58: #{tpu_custom_call.1} parent=5 // pred_check_branch
        %421 = sbr.rel (%p418) target = $region60
      $region59: #{tpu_custom_call.1} parent=5 // pred_region
        %s422 = ssub.s32 %s27, 1
        %s423 = sand.u32 %s54, 1
        %s424 = scalar_lea.sflag [#allocation6], %s423
        %s425 = sand.u32 %s54, 1
        %s426 = smul.addr %s425, 64
        %s427 = scalar_lea.vmem [#allocation5], %s426
        // Predicated region
        $region61: #{tpu_custom_call.1} parent=59 // pred_check
          %p428 = pneg %p67
        $region62: #{tpu_custom_call.1} parent=59 // pred_check_branch
          %430 = sbr.rel (%p428) target = $region64
        $region63: #{tpu_custom_call.1} parent=59 // pred_region
          %431 = dma.done %s424, 1024
        $region64: #{tpu_custom_call.1} parent=59 // pred_fallthru
          _
        %s432 = sand.u32 %s32, 1
        %s433 = scalar_lea.sflag [#allocation9], %s432
        %s434 = sand.u32 %s80, 1
        %s435 = smul.addr %s434, 128
        %s436 = scalar_lea.vmem [#allocation8], %s435
        // Predicated region
        $region65: #{tpu_custom_call.1} parent=59 // pred_check
          %p437 = pneg %p93
        $region66: #{tpu_custom_call.1} parent=59 // pred_check_branch
          %439 = sbr.rel (%p437) target = $region68
        $region67: #{tpu_custom_call.1} parent=59 // pred_region
          %440 = dma.done %s433, 2048
        $region68: #{tpu_custom_call.1} parent=59 // pred_fallthru
          _
        // Predicated region
        $region69: #{tpu_custom_call.1} parent=59 // pred_check
          %p441 = pneg %p114
        $region70: #{tpu_custom_call.1} parent=59 // pred_check_branch
          %443 = sbr.rel (%p441) target = $region72
        $region71: #{tpu_custom_call.1} parent=59 // pred_region
          %444 = dma.done [#allocation9], 1024
        $region72: #{tpu_custom_call.1} parent=59 // pred_fallthru
          _
        // Predicated region
        $region73: #{tpu_custom_call.1} parent=59 // pred_check
          %p445 = pneg %p135
        $region74: #{tpu_custom_call.1} parent=59 // pred_check_branch
          %447 = sbr.rel (%p445) target = $region76
        $region75: #{tpu_custom_call.1} parent=59 // pred_region
          %448 = dma.done [#allocation12], 1024
        $region76: #{tpu_custom_call.1} parent=59 // pred_fallthru
          _
        // Predicated region
        $region77: #{tpu_custom_call.1} parent=59 // pred_check
          %p449 = pneg %p156
        $region78: #{tpu_custom_call.1} parent=59 // pred_check_branch
          %451 = sbr.rel (%p449) target = $region80
        $region79: #{tpu_custom_call.1} parent=59 // pred_region
          %452 = dma.done [#allocation12], 1024
        $region80: #{tpu_custom_call.1} parent=59 // pred_fallthru
          _
        // Predicated region
        $region81: #{tpu_custom_call.1} parent=59 // pred_check
          %p453 = pneg %p177
        $region82: #{tpu_custom_call.1} parent=59 // pred_check_branch
          %455 = sbr.rel (%p453) target = $region84
        $region83: #{tpu_custom_call.1} parent=59 // pred_region
          %456 = dma.done [#allocation15], 1024
        $region84: #{tpu_custom_call.1} parent=59 // pred_fallthru
          _
        %s457 = sand.u32 %s54, 1
        %s458 = scalar_lea.sflag [#allocation6], %s457
        %s459 = sand.u32 %s54, 1
        %s460 = smul.addr %s459, 64
        %s461 = scalar_lea.vmem [#allocation5], %s460
        %p462 = pneg %p67
        %p463 = pneg %p64
        %s464 = sand.u32 %s32, 1
        %s465 = scalar_lea.sflag [#allocation9], %s464
        %s466 = sand.u32 %s80, 1
        %s467 = smul.addr %s466, 128
        %s468 = scalar_lea.vmem [#allocation8], %s467
        %p469 = pneg %p93
        %p470 = pneg %p90
        %p471 = pneg %p114
        %p472 = pneg %p111
        %p473 = pneg %p135
        %p474 = pneg %p132
        %p475 = pneg %p156
        %p476 = pneg %p153
        %p477 = pneg %p177
        %p478 = pneg %p174
        %p479 = pneg %p198
        %p480 = pneg %p195
        %p481 = pneg %p219
        %p482 = pneg %p216
        %p483 = pneg %p240
        %p484 = pneg %p237
        %p485 = pneg %p261
        %p486 = pneg %p258
        %p487 = pneg %p289
        %p488 = pneg %p286
        %s489 = sand.u32 %s276, 1
        %s490 = scalar_lea.sflag [#allocation7], %s489
        %s491 = sand.u32 %s276, 1
        %s492 = smul.addr %s491, 128
        %s493 = scalar_lea.vmem [#allocation16], %s492
        %s494 = smul.u32 16, %s37
        %s495 = smul.u32 16, %s37
        %p497 = scmp.eq.s32.totalorder %s37, 0
        // Predicated region
        $region85: #{tpu_custom_call.1} parent=59 // pred_check
          %p498 = pneg %p497
        $region86: #{tpu_custom_call.1} parent=59 // pred_check_branch
          %500 = sbr.rel (%p498) target = $region88
        $region87: #{tpu_custom_call.1} parent=59 // pred_region
          %v501 = vld [vmem:[%s436] sm:$0xf]
          %v502 = vld [vmem:[%s436 + $0x4] sm:$0xf]
          %v503 = vld [vmem:[%s436 + $0x8] sm:$0xf]
          %v504 = vld [vmem:[%s436 + $0xc] sm:$0xf]
          %v505 = vld [vmem:[%s436 + $0x10] sm:$0xf]
          %v506 = vld [vmem:[%s436 + $0x14] sm:$0xf]
          %v507 = vld [vmem:[%s436 + $0x18] sm:$0xf]
          %v508 = vld [vmem:[%s436 + $0x1c] sm:$0xf]
          %v509 = vld [vmem:[%s436 + $0x20] sm:$0xf]
          %v510 = vld [vmem:[%s436 + $0x24] sm:$0xf]
          %v511 = vld [vmem:[%s436 + $0x28] sm:$0xf]
          %v512 = vld [vmem:[%s436 + $0x2c] sm:$0xf]
          %v513 = vld [vmem:[%s436 + $0x30] sm:$0xf]
          %v514 = vld [vmem:[%s436 + $0x34] sm:$0xf]
          %v515 = vld [vmem:[%s436 + $0x38] sm:$0xf]
          %v516 = vld [vmem:[%s436 + $0x3c] sm:$0xf]
          %v517 = vld [vmem:[%s436 + $0x40] sm:$0xf]
          %v518 = vld [vmem:[%s436 + $0x44] sm:$0xf]
          %v519 = vld [vmem:[%s436 + $0x48] sm:$0xf]
          %v520 = vld [vmem:[%s436 + $0x4c] sm:$0xf]
          %v521 = vld [vmem:[%s436 + $0x50] sm:$0xf]
          %v522 = vld [vmem:[%s436 + $0x54] sm:$0xf]
          %v523 = vld [vmem:[%s436 + $0x58] sm:$0xf]
          %v524 = vld [vmem:[%s436 + $0x5c] sm:$0xf]
          %v525 = vld [vmem:[%s436 + $0x60] sm:$0xf]
          %v526 = vld [vmem:[%s436 + $0x64] sm:$0xf]
          %v527 = vld [vmem:[%s436 + $0x68] sm:$0xf]
          %v528 = vld [vmem:[%s436 + $0x6c] sm:$0xf]
          %v529 = vld [vmem:[%s436 + $0x70] sm:$0xf]
          %v530 = vld [vmem:[%s436 + $0x74] sm:$0xf]
          %v531 = vld [vmem:[%s436 + $0x78] sm:$0xf]
          %v532 = vld [vmem:[%s436 + $0x7c] sm:$0xf]
          %v533 = vld [vmem:[#allocation11] sm:$0xf]
          %v534 = vld [vmem:[#allocation11 + $0x4] sm:$0xf]
          %v535 = vld [vmem:[#allocation11 + $0x8] sm:$0xf]
          %v536 = vld [vmem:[#allocation11 + $0xc] sm:$0xf]
          %v537 = vld [vmem:[#allocation11 + $0x10] sm:$0xf]
          %v538 = vld [vmem:[#allocation11 + $0x14] sm:$0xf]
          %v539 = vld [vmem:[#allocation11 + $0x18] sm:$0xf]
          %v540 = vld [vmem:[#allocation11 + $0x1c] sm:$0xf]
          %v541 = vld [vmem:[#allocation11 + $0x20] sm:$0xf]
          %v542 = vld [vmem:[#allocation11 + $0x24] sm:$0xf]
          %v543 = vld [vmem:[#allocation11 + $0x28] sm:$0xf]
          %v544 = vld [vmem:[#allocation11 + $0x2c] sm:$0xf]
          %v545 = vld [vmem:[#allocation11 + $0x30] sm:$0xf]
          %v546 = vld [vmem:[#allocation11 + $0x34] sm:$0xf]
          %v547 = vld [vmem:[#allocation11 + $0x38] sm:$0xf]
          %v548 = vld [vmem:[#allocation11 + $0x3c] sm:$0xf]
          %v549 = vld [vmem:[%s7] sm:$0x1]
          %v551 = vlaneseq
          %v552 = vshrl.u32 %v551, 7
          %v553 = vsub.s32 0, %v552
          %v554 = vrot.slane %v549, %v553
          %v588 = vunpack.c.l.b16 %v501
          %v589 = vunpack.c.l.b16 %v502
          %v590 = vunpack.c.l.b16 %v503
          %v591 = vunpack.c.l.b16 %v504
          %v592 = vunpack.c.l.b16 %v505
          %v593 = vunpack.c.l.b16 %v506
          %v594 = vunpack.c.l.b16 %v507
          %v595 = vunpack.c.l.b16 %v508
          %v596 = vunpack.c.l.b16 %v509
          %v597 = vunpack.c.l.b16 %v510
          %v598 = vunpack.c.l.b16 %v511
          %v599 = vunpack.c.l.b16 %v512
          %v600 = vunpack.c.l.b16 %v513
          %v601 = vunpack.c.l.b16 %v514
          %v602 = vunpack.c.l.b16 %v515
          %v603 = vunpack.c.l.b16 %v516
          %v604 = vunpack.c.l.b16 %v517
          %v605 = vunpack.c.l.b16 %v518
          %v606 = vunpack.c.l.b16 %v519
          %v607 = vunpack.c.l.b16 %v520
          %v608 = vunpack.c.l.b16 %v521
          %v609 = vunpack.c.l.b16 %v522
          %v610 = vunpack.c.l.b16 %v523
          %v611 = vunpack.c.l.b16 %v524
          %v612 = vunpack.c.l.b16 %v525
          %v613 = vunpack.c.l.b16 %v526
          %v614 = vunpack.c.l.b16 %v527
          %v615 = vunpack.c.l.b16 %v528
          %v616 = vunpack.c.l.b16 %v529
          %v617 = vunpack.c.l.b16 %v530
          %v618 = vunpack.c.l.b16 %v531
          %v619 = vunpack.c.l.b16 %v532
          %v620 = vpack.c.b16 %v589, %v588
          %v621 = vpack.c.b16 %v591, %v590
          %v622 = vpack.c.b16 %v593, %v592
          %v623 = vpack.c.b16 %v595, %v594
          %v624 = vpack.c.b16 %v597, %v596
          %v625 = vpack.c.b16 %v599, %v598
          %v626 = vpack.c.b16 %v601, %v600
          %v627 = vpack.c.b16 %v603, %v602
          %v628 = vpack.c.b16 %v605, %v604
          %v629 = vpack.c.b16 %v607, %v606
          %v630 = vpack.c.b16 %v609, %v608
          %v631 = vpack.c.b16 %v611, %v610
          %v632 = vpack.c.b16 %v613, %v612
          %v633 = vpack.c.b16 %v615, %v614
          %v634 = vpack.c.b16 %v617, %v616
          %v635 = vpack.c.b16 %v619, %v618
          %v668 = vunpack.c.l.b16 %v533
          %v669 = vunpack.c.l.b16 %v534
          %v670 = vunpack.c.l.b16 %v535
          %v671 = vunpack.c.l.b16 %v536
          %v672 = vunpack.c.l.b16 %v537
          %v673 = vunpack.c.l.b16 %v538
          %v674 = vunpack.c.l.b16 %v539
          %v675 = vunpack.c.l.b16 %v540
          %v676 = vunpack.c.l.b16 %v541
          %v677 = vunpack.c.l.b16 %v542
          %v678 = vunpack.c.l.b16 %v543
          %v679 = vunpack.c.l.b16 %v544
          %v680 = vunpack.c.l.b16 %v545
          %v681 = vunpack.c.l.b16 %v546
          %v682 = vunpack.c.l.b16 %v547
          %v683 = vunpack.c.l.b16 %v548
          %v684 = vpack.c.b16 %v669, %v668
          %v685 = vpack.c.b16 %v671, %v670
          %v686 = vpack.c.b16 %v673, %v672
          %v687 = vpack.c.b16 %v675, %v674
          %v688 = vpack.c.b16 %v677, %v676
          %v689 = vpack.c.b16 %v679, %v678
          %v690 = vpack.c.b16 %v681, %v680
          %v691 = vpack.c.b16 %v683, %v682
          %700 = vmatprep.subr.bf16.mxu0 0
          %701 = vmatpush1.bf16.msra.mxu0 %v684
          %702 = vmatprep.subr.bf16.mxu0 0
          %703 = vmatpush1.bf16.msra.mxu0 %v685
          %704 = vmatprep.subr.bf16.mxu0 0
          %705 = vmatpush1.bf16.msra.mxu0 %v686
          %706 = vmatprep.subr.bf16.mxu0 0
          %707 = vmatpush1.bf16.msra.mxu0 %v687
          %708 = vmatprep.subr.bf16.mxu0 0
          %709 = vmatpush1.bf16.msra.mxu0 %v688
          %710 = vmatprep.subr.bf16.mxu0 0
          %711 = vmatpush1.bf16.msra.mxu0 %v689
          %712 = vmatprep.subr.bf16.mxu0 0
          %713 = vmatpush1.bf16.msra.mxu0 %v690
          %714 = vmatprep.subr.bf16.mxu0 0
          %715 = vmatpush1.bf16.msra.mxu0 %v691
          %716 = vmatprep.subr.bf16.mxu0 0
          %717 = vmatpush1.bf16.msra.mxu0 0
          %718 = vmatprep.subr.bf16.mxu0 0
          %719 = vmatpush1.bf16.msra.mxu0 0
          %720 = vmatprep.subr.bf16.mxu0 0
          %721 = vmatpush1.bf16.msra.mxu0 0
          %722 = vmatprep.subr.bf16.mxu0 0
          %723 = vmatpush1.bf16.msra.mxu0 0
          %724 = vmatprep.subr.bf16.mxu0 0
          %725 = vmatpush1.bf16.msra.mxu0 0
          %726 = vmatprep.subr.bf16.mxu0 0
          %727 = vmatpush1.bf16.msra.mxu0 0
          %728 = vmatprep.subr.bf16.mxu0 0
          %729 = vmatpush1.bf16.msra.mxu0 0
          %730 = vmatprep.subr.bf16.mxu0 0
          %731 = vmatpush1.bf16.msra.mxu0 0
          %732 = vmatprep.mubr.bf16.mxu0 0
          %733 = vmatmul.mubr.bf16.gmra.mrb[0].mxu0 %v620
          %v734 = vpop.f32.mrb[0].mxu0
          %v735 = vadd.f32 %v554, %v734
          %v736 = vpop.f32.mrb[0].mxu0
          %v737 = vpop.f32.mrb[0].mxu0
          %v738 = vadd.f32 %v554, %v737
          %v739 = vpop.f32.mrb[0].mxu0
          %740 = vmatprep.mubr.bf16.mxu0 0
          %741 = vmatmul.mubr.bf16.gmra.mrb[0].mxu0 %v621
          %v742 = vpop.f32.mrb[0].mxu0
          %v743 = vadd.f32 %v554, %v742
          %v744 = vpop.f32.mrb[0].mxu0
          %v745 = vpop.f32.mrb[0].mxu0
          %v746 = vadd.f32 %v554, %v745
          %v747 = vpop.f32.mrb[0].mxu0
          %748 = vmatprep.mubr.bf16.mxu0 0
          %749 = vmatmul.mubr.bf16.gmra.mrb[0].mxu0 %v622
          %v750 = vpop.f32.mrb[0].mxu0
          %v751 = vadd.f32 %v554, %v750
          %v752 = vpop.f32.mrb[0].mxu0
          %v753 = vpop.f32.mrb[0].mxu0
          %v754 = vadd.f32 %v554, %v753
          %v755 = vpop.f32.mrb[0].mxu0
          %756 = vmatprep.mubr.bf16.mxu0 0
          %757 = vmatmul.mubr.bf16.gmra.mrb[0].mxu0 %v623
          %v758 = vpop.f32.mrb[0].mxu0
          %v759 = vadd.f32 %v554, %v758
          %v760 = vpop.f32.mrb[0].mxu0
          %v761 = vpop.f32.mrb[0].mxu0
          %v762 = vadd.f32 %v554, %v761
          %v763 = vpop.f32.mrb[0].mxu0
          %764 = vmatprep.mubr.bf16.mxu0 0
          %765 = vmatmul.mubr.bf16.gmra.mrb[0].mxu0 %v624
          %v766 = vpop.f32.mrb[0].mxu0
          %v767 = vadd.f32 %v554, %v766
          %v768 = vpop.f32.mrb[0].mxu0
          %v769 = vpop.f32.mrb[0].mxu0
          %v770 = vadd.f32 %v554, %v769
          %v771 = vpop.f32.mrb[0].mxu0
          %772 = vmatprep.mubr.bf16.mxu0 0
          %773 = vmatmul.mubr.bf16.gmra.mrb[0].mxu0 %v625
          %v774 = vpop.f32.mrb[0].mxu0
          %v775 = vadd.f32 %v554, %v774
          %v776 = vpop.f32.mrb[0].mxu0
          %v777 = vpop.f32.mrb[0].mxu0
          %v778 = vadd.f32 %v554, %v777
          %v779 = vpop.f32.mrb[0].mxu0
          %780 = vmatprep.mubr.bf16.mxu0 0
          %781 = vmatmul.mubr.bf16.gmra.mrb[0].mxu0 %v626
          %v782 = vpop.f32.mrb[0].mxu0
          %v783 = vadd.f32 %v554, %v782
          %v784 = vpop.f32.mrb[0].mxu0
          %v785 = vpop.f32.mrb[0].mxu0
          %v786 = vadd.f32 %v554, %v785
          %v787 = vpop.f32.mrb[0].mxu0
          %788 = vmatprep.mubr.bf16.mxu0 0
          %789 = vmatmul.mubr.bf16.gmra.mrb[0].mxu0 %v627
          %v790 = vpop.f32.mrb[0].mxu0
          %v791 = vadd.f32 %v554, %v790
          %v792 = vpop.f32.mrb[0].mxu0
          %v793 = vpop.f32.mrb[0].mxu0
          %v794 = vadd.f32 %v554, %v793
          %v795 = vpop.f32.mrb[0].mxu0
          %796 = vmatprep.mubr.bf16.mxu0 0
          %797 = vmatmul.mubr.bf16.gmra.mrb[0].mxu0 %v628
          %v798 = vpop.f32.mrb[0].mxu0
          %v799 = vadd.f32 %v554, %v798
          %v800 = vpop.f32.mrb[0].mxu0
          %v801 = vpop.f32.mrb[0].mxu0
          %v802 = vadd.f32 %v554, %v801
          %v803 = vpop.f32.mrb[0].mxu0
          %804 = vmatprep.mubr.bf16.mxu0 0
          %805 = vmatmul.mubr.bf16.gmra.mrb[0].mxu0 %v629
          %v806 = vpop.f32.mrb[0].mxu0
          %v807 = vadd.f32 %v554, %v806
          %v808 = vpop.f32.mrb[0].mxu0
          %v809 = vpop.f32.mrb[0].mxu0
          %v810 = vadd.f32 %v554, %v809
          %v811 = vpop.f32.mrb[0].mxu0
          %812 = vmatprep.mubr.bf16.mxu0 0
          %813 = vmatmul.mubr.bf16.gmra.mrb[0].mxu0 %v630
          %v814 = vpop.f32.mrb[0].mxu0
          %v815 = vadd.f32 %v554, %v814
          %v816 = vpop.f32.mrb[0].mxu0
          %v817 = vpop.f32.mrb[0].mxu0
          %v818 = vadd.f32 %v554, %v817
          %v819 = vpop.f32.mrb[0].mxu0
          %820 = vmatprep.mubr.bf16.mxu0 0
          %821 = vmatmul.mubr.bf16.gmra.mrb[0].mxu0 %v631
          %v822 = vpop.f32.mrb[0].mxu0
          %v823 = vadd.f32 %v554, %v822
          %v824 = vpop.f32.mrb[0].mxu0
          %v825 = vpop.f32.mrb[0].mxu0
          %v826 = vadd.f32 %v554, %v825
          %v827 = vpop.f32.mrb[0].mxu0
          %828 = vmatprep.mubr.bf16.mxu0 0
          %829 = vmatmul.mubr.bf16.gmra.mrb[0].mxu0 %v632
          %v830 = vpop.f32.mrb[0].mxu0
          %v831 = vadd.f32 %v554, %v830
          %v832 = vpop.f32.mrb[0].mxu0
          %v833 = vpop.f32.mrb[0].mxu0
          %v834 = vadd.f32 %v554, %v833
          %v835 = vpop.f32.mrb[0].mxu0
          %836 = vmatprep.mubr.bf16.mxu0 0
          %837 = vmatmul.mubr.bf16.gmra.mrb[0].mxu0 %v633
          %v838 = vpop.f32.mrb[0].mxu0
          %v839 = vadd.f32 %v554, %v838
          %v840 = vpop.f32.mrb[0].mxu0
          %v841 = vpop.f32.mrb[0].mxu0
          %v842 = vadd.f32 %v554, %v841
          %v843 = vpop.f32.mrb[0].mxu0
          %844 = vmatprep.mubr.bf16.mxu0 0
          %845 = vmatmul.mubr.bf16.gmra.mrb[0].mxu0 %v634
          %v846 = vpop.f32.mrb[0].mxu0
          %v847 = vadd.f32 %v554, %v846
          %v848 = vpop.f32.mrb[0].mxu0
          %v849 = vpop.f32.mrb[0].mxu0
          %v850 = vadd.f32 %v554, %v849
          %v851 = vpop.f32.mrb[0].mxu0
          %852 = vmatprep.mubr.bf16.mxu0 0
          %853 = vmatmul.mubr.bf16.gmra.mrb[0].mxu0 %v635
          %v854 = vpop.f32.mrb[0].mxu0
          %v855 = vadd.f32 %v554, %v854
          %v856 = vpop.f32.mrb[0].mxu0
          %v857 = vpop.f32.mrb[0].mxu0
          %v858 = vadd.f32 %v554, %v857
          %v859 = vpop.f32.mrb[0].mxu0
          %860 = vdwg.mxu0
          %v861 = vld [vmem:[#allocation13] sm:$0xf]
          %v862 = vld [vmem:[#allocation13 + $0x4] sm:$0xf]
          %v863 = vld [vmem:[#allocation13 + $0x8] sm:$0xf]
          %v864 = vld [vmem:[#allocation13 + $0xc] sm:$0xf]
          %v865 = vld [vmem:[#allocation13 + $0x10] sm:$0xf]
          %v866 = vld [vmem:[#allocation13 + $0x14] sm:$0xf]
          %v867 = vld [vmem:[#allocation13 + $0x18] sm:$0xf]
          %v868 = vld [vmem:[#allocation13 + $0x1c] sm:$0xf]
          %v869 = vld [vmem:[#allocation13 + $0x20] sm:$0xf]
          %v870 = vld [vmem:[#allocation13 + $0x24] sm:$0xf]
          %v871 = vld [vmem:[#allocation13 + $0x28] sm:$0xf]
          %v872 = vld [vmem:[#allocation13 + $0x2c] sm:$0xf]
          %v873 = vld [vmem:[#allocation13 + $0x30] sm:$0xf]
          %v874 = vld [vmem:[#allocation13 + $0x34] sm:$0xf]
          %v875 = vld [vmem:[#allocation13 + $0x38] sm:$0xf]
          %v876 = vld [vmem:[#allocation13 + $0x3c] sm:$0xf]
          %v877 = vld [vmem:[%s8] sm:$0x1]
          %v879 = vlaneseq
          %v880 = vshrl.u32 %v879, 7
          %v881 = vsub.s32 0, %v880
          %v882 = vrot.slane %v877, %v881
          %v900 = vunpack.c.l.b16 %v861
          %v901 = vunpack.c.l.b16 %v862
          %v902 = vunpack.c.l.b16 %v863
          %v903 = vunpack.c.l.b16 %v864
          %v904 = vunpack.c.l.b16 %v865
          %v905 = vunpack.c.l.b16 %v866
          %v906 = vunpack.c.l.b16 %v867
          %v907 = vunpack.c.l.b16 %v868
          %v908 = vunpack.c.l.b16 %v869
          %v909 = vunpack.c.l.b16 %v870
          %v910 = vunpack.c.l.b16 %v871
          %v911 = vunpack.c.l.b16 %v872
          %v912 = vunpack.c.l.b16 %v873
          %v913 = vunpack.c.l.b16 %v874
          %v914 = vunpack.c.l.b16 %v875
          %v915 = vunpack.c.l.b16 %v876
          %v916 = vpack.c.b16 %v901, %v900
          %v917 = vpack.c.b16 %v903, %v902
          %v918 = vpack.c.b16 %v905, %v904
          %v919 = vpack.c.b16 %v907, %v906
          %v920 = vpack.c.b16 %v909, %v908
          %v921 = vpack.c.b16 %v911, %v910
          %v922 = vpack.c.b16 %v913, %v912
          %v923 = vpack.c.b16 %v915, %v914
          %932 = vmatprep.subr.bf16.mxu0 0
          %933 = vmatpush1.bf16.msra.mxu0 %v916
          %934 = vmatprep.subr.bf16.mxu0 0
          %935 = vmatpush1.bf16.msra.mxu0 %v917
          %936 = vmatprep.subr.bf16.mxu0 0
          %937 = vmatpush1.bf16.msra.mxu0 %v918
          %938 = vmatprep.subr.bf16.mxu0 0
          %939 = vmatpush1.bf16.msra.mxu0 %v919
          %940 = vmatprep.subr.bf16.mxu0 0
          %941 = vmatpush1.bf16.msra.mxu0 %v920
          %942 = vmatprep.subr.bf16.mxu0 0
          %943 = vmatpush1.bf16.msra.mxu0 %v921
          %944 = vmatprep.subr.bf16.mxu0 0
          %945 = vmatpush1.bf16.msra.mxu0 %v922
          %946 = vmatprep.subr.bf16.mxu0 0
          %947 = vmatpush1.bf16.msra.mxu0 %v923
          %948 = vmatprep.subr.bf16.mxu0 0
          %949 = vmatpush1.bf16.msra.mxu0 0
          %950 = vmatprep.subr.bf16.mxu0 0
          %951 = vmatpush1.bf16.msra.mxu0 0
          %952 = vmatprep.subr.bf16.mxu0 0
          %953 = vmatpush1.bf16.msra.mxu0 0
          %954 = vmatprep.subr.bf16.mxu0 0
          %955 = vmatpush1.bf16.msra.mxu0 0
          %956 = vmatprep.subr.bf16.mxu0 0
          %957 = vmatpush1.bf16.msra.mxu0 0
          %958 = vmatprep.subr.bf16.mxu0 0
          %959 = vmatpush1.bf16.msra.mxu0 0
          %960 = vmatprep.subr.bf16.mxu0 0
          %961 = vmatpush1.bf16.msra.mxu0 0
          %962 = vmatprep.subr.bf16.mxu0 0
          %963 = vmatpush1.bf16.msra.mxu0 0
          %964 = vmatprep.mubr.bf16.mxu0 0
          %965 = vmatmul.mubr.bf16.gmra.mrb[0].mxu0 %v620
          %v966 = vpop.f32.mrb[0].mxu0
          %v967 = vadd.f32 %v882, %v966
          %v968 = vpop.f32.mrb[0].mxu0
          %v969 = vpop.f32.mrb[0].mxu0
          %v970 = vadd.f32 %v882, %v969
          %v971 = vpop.f32.mrb[0].mxu0
          %972 = vmatprep.mubr.bf16.mxu0 0
          %973 = vmatmul.mubr.bf16.gmra.mrb[0].mxu0 %v621
          %v974 = vpop.f32.mrb[0].mxu0
          %v975 = vadd.f32 %v882, %v974
          %v976 = vpop.f32.mrb[0].mxu0
          %v977 = vpop.f32.mrb[0].mxu0
          %v978 = vadd.f32 %v882, %v977
          %v979 = vpop.f32.mrb[0].mxu0
          %980 = vmatprep.mubr.bf16.mxu0 0
          %981 = vmatmul.mubr.bf16.gmra.mrb[0].mxu0 %v622
          %v982 = vpop.f32.mrb[0].mxu0
          %v983 = vadd.f32 %v882, %v982
          %v984 = vpop.f32.mrb[0].mxu0
          %v985 = vpop.f32.mrb[0].mxu0
          %v986 = vadd.f32 %v882, %v985
          %v987 = vpop.f32.mrb[0].mxu0
          %988 = vmatprep.mubr.bf16.mxu0 0
          %989 = vmatmul.mubr.bf16.gmra.mrb[0].mxu0 %v623
          %v990 = vpop.f32.mrb[0].mxu0
          %v991 = vadd.f32 %v882, %v990
          %v992 = vpop.f32.mrb[0].mxu0
          %v993 = vpop.f32.mrb[0].mxu0
          %v994 = vadd.f32 %v882, %v993
          %v995 = vpop.f32.mrb[0].mxu0
          %996 = vmatprep.mubr.bf16.mxu0 0
          %997 = vmatmul.mubr.bf16.gmra.mrb[0].mxu0 %v624
          %v998 = vpop.f32.mrb[0].mxu0
          %v999 = vadd.f32 %v882, %v998
          %v1000 = vpop.f32.mrb[0].mxu0
          %v1001 = vpop.f32.mrb[0].mxu0
          %v1002 = vadd.f32 %v882, %v1001
          %v1003 = vpop.f32.mrb[0].mxu0
          %1004 = vmatprep.mubr.bf16.mxu0 0
          %1005 = vmatmul.mubr.bf16.gmra.mrb[0].mxu0 %v625
          %v1006 = vpop.f32.mrb[0].mxu0
          %v1007 = vadd.f32 %v882, %v1006
          %v1008 = vpop.f32.mrb[0].mxu0
          %v1009 = vpop.f32.mrb[0].mxu0
          %v1010 = vadd.f32 %v882, %v1009
          %v1011 = vpop.f32.mrb[0].mxu0
          %1012 = vmatprep.mubr.bf16.mxu0 0
          %1013 = vmatmul.mubr.bf16.gmra.mrb[0].mxu0 %v626
          %v1014 = vpop.f32.mrb[0].mxu0
          %v1015 = vadd.f32 %v882, %v1014
          %v1016 = vpop.f32.mrb[0].mxu0
          %v1017 = vpop.f32.mrb[0].mxu0
          %v1018 = vadd.f32 %v882, %v1017
          %v1019 = vpop.f32.mrb[0].mxu0
          %1020 = vmatprep.mubr.bf16.mxu0 0
          %1021 = vmatmul.mubr.bf16.gmra.mrb[0].mxu0 %v627
          %v1022 = vpop.f32.mrb[0].mxu0
          %v1023 = vadd.f32 %v882, %v1022
          %v1024 = vpop.f32.mrb[0].mxu0
          %v1025 = vpop.f32.mrb[0].mxu0
          %v1026 = vadd.f32 %v882, %v1025
          %v1027 = vpop.f32.mrb[0].mxu0
          %1028 = vmatprep.mubr.bf16.mxu0 0
          %1029 = vmatmul.mubr.bf16.gmra.mrb[0].mxu0 %v628
          %v1030 = vpop.f32.mrb[0].mxu0
          %v1031 = vadd.f32 %v882, %v1030
          %v1032 = vpop.f32.mrb[0].mxu0
          %v1033 = vpop.f32.mrb[0].mxu0
          %v1034 = vadd.f32 %v882, %v1033
          %v1035 = vpop.f32.mrb[0].mxu0
          %1036 = vmatprep.mubr.bf16.mxu0 0
          %1037 = vmatmul.mubr.bf16.gmra.mrb[0].mxu0 %v629
          %v1038 = vpop.f32.mrb[0].mxu0
          %v1039 = vadd.f32 %v882, %v1038
          %v1040 = vpop.f32.mrb[0].mxu0
          %v1041 = vpop.f32.mrb[0].mxu0
          %v1042 = vadd.f32 %v882, %v1041
          %v1043 = vpop.f32.mrb[0].mxu0
          %1044 = vmatprep.mubr.bf16.mxu0 0
          %1045 = vmatmul.mubr.bf16.gmra.mrb[0].mxu0 %v630
          %v1046 = vpop.f32.mrb[0].mxu0
          %v1047 = vadd.f32 %v882, %v1046
          %v1048 = vpop.f32.mrb[0].mxu0
          %v1049 = vpop.f32.mrb[0].mxu0
          %v1050 = vadd.f32 %v882, %v1049
          %v1051 = vpop.f32.mrb[0].mxu0
          %1052 = vmatprep.mubr.bf16.mxu0 0
          %1053 = vmatmul.mubr.bf16.gmra.mrb[0].mxu0 %v631
          %v1054 = vpop.f32.mrb[0].mxu0
          %v1055 = vadd.f32 %v882, %v1054
          %v1056 = vpop.f32.mrb[0].mxu0
          %v1057 = vpop.f32.mrb[0].mxu0
          %v1058 = vadd.f32 %v882, %v1057
          %v1059 = vpop.f32.mrb[0].mxu0
          %1060 = vmatprep.mubr.bf16.mxu0 0
          %1061 = vmatmul.mubr.bf16.gmra.mrb[0].mxu0 %v632
          %v1062 = vpop.f32.mrb[0].mxu0
          %v1063 = vadd.f32 %v882, %v1062
          %v1064 = vpop.f32.mrb[0].mxu0
          %v1065 = vpop.f32.mrb[0].mxu0
          %v1066 = vadd.f32 %v882, %v1065
          %v1067 = vpop.f32.mrb[0].mxu0
          %1068 = vmatprep.mubr.bf16.mxu0 0
          %1069 = vmatmul.mubr.bf16.gmra.mrb[0].mxu0 %v633
          %v1070 = vpop.f32.mrb[0].mxu0
          %v1071 = vadd.f32 %v882, %v1070
          %v1072 = vpop.f32.mrb[0].mxu0
          %v1073 = vpop.f32.mrb[0].mxu0
          %v1074 = vadd.f32 %v882, %v1073
          %v1075 = vpop.f32.mrb[0].mxu0
          %1076 = vmatprep.mubr.bf16.mxu0 0
          %1077 = vmatmul.mubr.bf16.gmra.mrb[0].mxu0 %v634
          %v1078 = vpop.f32.mrb[0].mxu0
          %v1079 = vadd.f32 %v882, %v1078
          %v1080 = vpop.f32.mrb[0].mxu0
          %v1081 = vpop.f32.mrb[0].mxu0
          %v1082 = vadd.f32 %v882, %v1081
          %v1083 = vpop.f32.mrb[0].mxu0
          %1084 = vmatprep.mubr.bf16.mxu0 0
          %1085 = vmatmul.mubr.bf16.gmra.mrb[0].mxu0 %v635
          %v1086 = vpop.f32.mrb[0].mxu0
          %v1087 = vadd.f32 %v882, %v1086
          %v1088 = vpop.f32.mrb[0].mxu0
          %v1089 = vpop.f32.mrb[0].mxu0
          %v1090 = vadd.f32 %v882, %v1089
          %v1091 = vpop.f32.mrb[0].mxu0
          %1092 = vdwg.mxu0
          %v1093 = vpack.c.bf16 %v738, %v735
          %v1094 = vpack.c.bf16 %v746, %v743
          %v1095 = vpack.c.bf16 %v754, %v751
          %v1096 = vpack.c.bf16 %v762, %v759
          %v1097 = vpack.c.bf16 %v770, %v767
          %v1098 = vpack.c.bf16 %v778, %v775
          %v1099 = vpack.c.bf16 %v786, %v783
          %v1100 = vpack.c.bf16 %v794, %v791
          %v1101 = vpack.c.bf16 %v802, %v799
          %v1102 = vpack.c.bf16 %v810, %v807
          %v1103 = vpack.c.bf16 %v818, %v815
          %v1104 = vpack.c.bf16 %v826, %v823
          %v1105 = vpack.c.bf16 %v834, %v831
          %v1106 = vpack.c.bf16 %v842, %v839
          %v1107 = vpack.c.bf16 %v850, %v847
          %v1108 = vpack.c.bf16 %v858, %v855
          %1109 = vxpose.xlu0.c.b16.start [1/8] %v1093, 128
          %1110 = vxpose.xlu0.c.b16.cont [2/8] %v1094, 128
          %1111 = vxpose.xlu0.c.b16.cont [3/8] %v1095, 128
          %1112 = vxpose.xlu0.c.b16.cont [4/8] %v1096, 128
          %1113 = vxpose.xlu0.c.b16.cont [5/8] %v1097, 128
          %1114 = vxpose.xlu0.c.b16.cont [6/8] %v1098, 128
          %1115 = vxpose.xlu0.c.b16.cont [7/8] %v1099, 128
          %1116 = vxpose.xlu0.c.b16.end [8/8] %v1100, 128
          %v1117 = vpop.trf.xlu0
          %v1118 = vpop.trf.xlu0
          %v1119 = vpop.trf.xlu0
          %v1120 = vpop.trf.xlu0
          %v1121 = vpop.trf.xlu0
          %v1122 = vpop.trf.xlu0
          %v1123 = vpop.trf.xlu0
          %v1124 = vpop.trf.xlu0
          %1125 = vxpose.xlu0.c.b16.start [1/8] %v1101, 128
          %1126 = vxpose.xlu0.c.b16.cont [2/8] %v1102, 128
          %1127 = vxpose.xlu0.c.b16.cont [3/8] %v1103, 128
          %1128 = vxpose.xlu0.c.b16.cont [4/8] %v1104, 128
          %1129 = vxpose.xlu0.c.b16.cont [5/8] %v1105, 128
          %1130 = vxpose.xlu0.c.b16.cont [6/8] %v1106, 128
          %1131 = vxpose.xlu0.c.b16.cont [7/8] %v1107, 128
          %1132 = vxpose.xlu0.c.b16.end [8/8] %v1108, 128
          %v1133 = vpop.trf.xlu0
          %v1134 = vpop.trf.xlu0
          %v1135 = vpop.trf.xlu0
          %v1136 = vpop.trf.xlu0
          %v1137 = vpop.trf.xlu0
          %v1138 = vpop.trf.xlu0
          %v1139 = vpop.trf.xlu0
          %v1140 = vpop.trf.xlu0
          %1141 = vst [vmem:[#allocation2] sm:$0xff] %v1117
          %1142 = vst [vmem:[#allocation2 + $0x8] sm:$0xff] %v1133
          %1143 = vst [vmem:[#allocation2 + $0x10] sm:$0xff] %v1118
          %1144 = vst [vmem:[#allocation2 + $0x18] sm:$0xff] %v1134
          %1145 = vst [vmem:[#allocation2 + $0x20] sm:$0xff] %v1119
          %1146 = vst [vmem:[#allocation2 + $0x28] sm:$0xff] %v1135
          %1147 = vst [vmem:[#allocation2 + $0x30] sm:$0xff] %v1120
          %1148 = vst [vmem:[#allocation2 + $0x38] sm:$0xff] %v1136
          %1149 = vst [vmem:[#allocation2 + $0x40] sm:$0xff] %v1121
          %1150 = vst [vmem:[#allocation2 + $0x48] sm:$0xff] %v1137
          %1151 = vst [vmem:[#allocation2 + $0x50] sm:$0xff] %v1122
          %1152 = vst [vmem:[#allocation2 + $0x58] sm:$0xff] %v1138
          %1153 = vst [vmem:[#allocation2 + $0x60] sm:$0xff] %v1123
          %1154 = vst [vmem:[#allocation2 + $0x68] sm:$0xff] %v1139
          %1155 = vst [vmem:[#allocation2 + $0x70] sm:$0xff] %v1124
          %1156 = vst [vmem:[#allocation2 + $0x78] sm:$0xff] %v1140
          %v1157 = vpack.c.bf16 %v970, %v967
          %v1158 = vpack.c.bf16 %v978, %v975
          %v1159 = vpack.c.bf16 %v986, %v983
          %v1160 = vpack.c.bf16 %v994, %v991
          %v1161 = vpack.c.bf16 %v1002, %v999
          %v1162 = vpack.c.bf16 %v1010, %v1007
          %v1163 = vpack.c.bf16 %v1018, %v1015
          %v1164 = vpack.c.bf16 %v1026, %v1023
          %v1165 = vpack.c.bf16 %v1034, %v1031
          %v1166 = vpack.c.bf16 %v1042, %v1039
          %v1167 = vpack.c.bf16 %v1050, %v1047
          %v1168 = vpack.c.bf16 %v1058, %v1055
          %v1169 = vpack.c.bf16 %v1066, %v1063
          %v1170 = vpack.c.bf16 %v1074, %v1071
          %v1171 = vpack.c.bf16 %v1082, %v1079
          %v1172 = vpack.c.bf16 %v1090, %v1087
          %1173 = vst [vmem:[#allocation3] sm:$0xff] %v1157
          %1174 = vst [vmem:[#allocation3 + $0x8] sm:$0xff] %v1158
          %1175 = vst [vmem:[#allocation3 + $0x10] sm:$0xff] %v1159
          %1176 = vst [vmem:[#allocation3 + $0x18] sm:$0xff] %v1160
          %1177 = vst [vmem:[#allocation3 + $0x20] sm:$0xff] %v1161
          %1178 = vst [vmem:[#allocation3 + $0x28] sm:$0xff] %v1162
          %1179 = vst [vmem:[#allocation3 + $0x30] sm:$0xff] %v1163
          %1180 = vst [vmem:[#allocation3 + $0x38] sm:$0xff] %v1164
          %1181 = vst [vmem:[#allocation3 + $0x40] sm:$0xff] %v1165
          %1182 = vst [vmem:[#allocation3 + $0x48] sm:$0xff] %v1166
          %1183 = vst [vmem:[#allocation3 + $0x50] sm:$0xff] %v1167
          %1184 = vst [vmem:[#allocation3 + $0x58] sm:$0xff] %v1168
          %1185 = vst [vmem:[#allocation3 + $0x60] sm:$0xff] %v1169
          %1186 = vst [vmem:[#allocation3 + $0x68] sm:$0xff] %v1170
          %1187 = vst [vmem:[#allocation3 + $0x70] sm:$0xff] %v1171
          %1188 = vst [vmem:[#allocation3 + $0x78] sm:$0xff] %v1172
        $region88: #{tpu_custom_call.1} parent=59 // pred_fallthru
          _
        %v1189 = vld [vmem:[%s427] sm:$0xf]
        %v1190 = vld [vmem:[%s427 + $0x4] sm:$0xf]
        %v1191 = vld [vmem:[%s427 + $0x8] sm:$0xf]
        %v1192 = vld [vmem:[%s427 + $0xc] sm:$0xf]
        %v1193 = vld [vmem:[%s427 + $0x10] sm:$0xf]
        %v1194 = vld [vmem:[%s427 + $0x14] sm:$0xf]
        %v1195 = vld [vmem:[%s427 + $0x18] sm:$0xf]
        %v1196 = vld [vmem:[%s427 + $0x1c] sm:$0xf]
        %v1197 = vld [vmem:[%s427 + $0x20] sm:$0xf]
        %v1198 = vld [vmem:[%s427 + $0x24] sm:$0xf]
        %v1199 = vld [vmem:[%s427 + $0x28] sm:$0xf]
        %v1200 = vld [vmem:[%s427 + $0x2c] sm:$0xf]
        %v1201 = vld [vmem:[%s427 + $0x30] sm:$0xf]
        %v1202 = vld [vmem:[%s427 + $0x34] sm:$0xf]
        %v1203 = vld [vmem:[%s427 + $0x38] sm:$0xf]
        %v1204 = vld [vmem:[%s427 + $0x3c] sm:$0xf]
        %v1205 = vld [vmem:[#allocation10] sm:$0xf]
        %v1206 = vld [vmem:[#allocation10 + $0x4] sm:$0xf]
        %v1207 = vld [vmem:[#allocation10 + $0x8] sm:$0xf]
        %v1208 = vld [vmem:[#allocation10 + $0xc] sm:$0xf]
        %v1209 = vld [vmem:[#allocation10 + $0x10] sm:$0xf]
        %v1210 = vld [vmem:[#allocation10 + $0x14] sm:$0xf]
        %v1211 = vld [vmem:[#allocation10 + $0x18] sm:$0xf]
        %v1212 = vld [vmem:[#allocation10 + $0x1c] sm:$0xf]
        %v1213 = vld [vmem:[#allocation10 + $0x20] sm:$0xf]
        %v1214 = vld [vmem:[#allocation10 + $0x24] sm:$0xf]
        %v1215 = vld [vmem:[#allocation10 + $0x28] sm:$0xf]
        %v1216 = vld [vmem:[#allocation10 + $0x2c] sm:$0xf]
        %v1217 = vld [vmem:[#allocation10 + $0x30] sm:$0xf]
        %v1218 = vld [vmem:[#allocation10 + $0x34] sm:$0xf]
        %v1219 = vld [vmem:[#allocation10 + $0x38] sm:$0xf]
        %v1220 = vld [vmem:[#allocation10 + $0x3c] sm:$0xf]
        %v1221 = vld [vmem:[%s6] sm:$0x1]
        %v1223 = vlaneseq
        %v1224 = vshrl.u32 %v1223, 7
        %v1225 = vsub.s32 0, %v1224
        %v1226 = vrot.slane %v1221, %v1225
        %v1244 = vunpack.c.l.b16 %v1189
        %v1245 = vunpack.c.l.b16 %v1190
        %v1246 = vunpack.c.l.b16 %v1191
        %v1247 = vunpack.c.l.b16 %v1192
        %v1248 = vunpack.c.l.b16 %v1193
        %v1249 = vunpack.c.l.b16 %v1194
        %v1250 = vunpack.c.l.b16 %v1195
        %v1251 = vunpack.c.l.b16 %v1196
        %v1252 = vunpack.c.l.b16 %v1197
        %v1253 = vunpack.c.l.b16 %v1198
        %v1254 = vunpack.c.l.b16 %v1199
        %v1255 = vunpack.c.l.b16 %v1200
        %v1256 = vunpack.c.l.b16 %v1201
        %v1257 = vunpack.c.l.b16 %v1202
        %v1258 = vunpack.c.l.b16 %v1203
        %v1259 = vunpack.c.l.b16 %v1204
        %v1260 = vpack.c.b16 %v1245, %v1244
        %v1261 = vpack.c.b16 %v1247, %v1246
        %v1262 = vpack.c.b16 %v1249, %v1248
        %v1263 = vpack.c.b16 %v1251, %v1250
        %v1264 = vpack.c.b16 %v1253, %v1252
        %v1265 = vpack.c.b16 %v1255, %v1254
        %v1266 = vpack.c.b16 %v1257, %v1256
        %v1267 = vpack.c.b16 %v1259, %v1258
        %v1292 = vunpack.c.l.b16 %v1205
        %v1293 = vunpack.c.l.b16 %v1206
        %v1294 = vunpack.c.l.b16 %v1207
        %v1295 = vunpack.c.l.b16 %v1208
        %v1296 = vunpack.c.l.b16 %v1209
        %v1297 = vunpack.c.l.b16 %v1210
        %v1298 = vunpack.c.l.b16 %v1211
        %v1299 = vunpack.c.l.b16 %v1212
        %v1300 = vunpack.c.l.b16 %v1213
        %v1301 = vunpack.c.l.b16 %v1214
        %v1302 = vunpack.c.l.b16 %v1215
        %v1303 = vunpack.c.l.b16 %v1216
        %v1304 = vunpack.c.l.b16 %v1217
        %v1305 = vunpack.c.l.b16 %v1218
        %v1306 = vunpack.c.l.b16 %v1219
        %v1307 = vunpack.c.l.b16 %v1220
        %v1308 = vpack.c.b16 %v1293, %v1292
        %v1309 = vpack.c.b16 %v1295, %v1294
        %v1310 = vpack.c.b16 %v1297, %v1296
        %v1311 = vpack.c.b16 %v1299, %v1298
        %v1312 = vpack.c.b16 %v1301, %v1300
        %v1313 = vpack.c.b16 %v1303, %v1302
        %v1314 = vpack.c.b16 %v1305, %v1304
        %v1315 = vpack.c.b16 %v1307, %v1306
        %1324 = vmatprep.subr.bf16.mxu0 0
        %1325 = vmatpush1.bf16.msra.mxu0 %v1308
        %1326 = vmatprep.subr.bf16.mxu0 0
        %1327 = vmatpush1.bf16.msra.mxu0 %v1309
        %1328 = vmatprep.subr.bf16.mxu0 0
        %1329 = vmatpush1.bf16.msra.mxu0 %v1310
        %1330 = vmatprep.subr.bf16.mxu0 0
        %1331 = vmatpush1.bf16.msra.mxu0 %v1311
        %1332 = vmatprep.subr.bf16.mxu0 0
        %1333 = vmatpush1.bf16.msra.mxu0 %v1312
        %1334 = vmatprep.subr.bf16.mxu0 0
        %1335 = vmatpush1.bf16.msra.mxu0 %v1313
        %1336 = vmatprep.subr.bf16.mxu0 0
        %1337 = vmatpush1.bf16.msra.mxu0 %v1314
        %1338 = vmatprep.subr.bf16.mxu0 0
        %1339 = vmatpush1.bf16.msra.mxu0 %v1315
        %1340 = vmatprep.subr.bf16.mxu0 0
        %1341 = vmatpush1.bf16.msra.mxu0 0
        %1342 = vmatprep.subr.bf16.mxu0 0
        %1343 = vmatpush1.bf16.msra.mxu0 0
        %1344 = vmatprep.subr.bf16.mxu0 0
        %1345 = vmatpush1.bf16.msra.mxu0 0
        %1346 = vmatprep.subr.bf16.mxu0 0
        %1347 = vmatpush1.bf16.msra.mxu0 0
        %1348 = vmatprep.subr.bf16.mxu0 0
        %1349 = vmatpush1.bf16.msra.mxu0 0
        %1350 = vmatprep.subr.bf16.mxu0 0
        %1351 = vmatpush1.bf16.msra.mxu0 0
        %1352 = vmatprep.subr.bf16.mxu0 0
        %1353 = vmatpush1.bf16.msra.mxu0 0
        %1354 = vmatprep.subr.bf16.mxu0 0
        %1355 = vmatpush1.bf16.msra.mxu0 0
        %1356 = vmatprep.mubr.bf16.mxu0 0
        %1357 = vmatmul.mubr.bf16.gmra.mrb[0].mxu0 %v1260
        %v1358 = vpop.f32.mrb[0].mxu0
        %v1359 = vadd.f32 %v1226, %v1358
        %v1360 = vpop.f32.mrb[0].mxu0
        %v1361 = vpop.f32.mrb[0].mxu0
        %v1362 = vadd.f32 %v1226, %v1361
        %v1363 = vpop.f32.mrb[0].mxu0
        %1364 = vmatprep.mubr.bf16.mxu0 0
        %1365 = vmatmul.mubr.bf16.gmra.mrb[0].mxu0 %v1261
        %v1366 = vpop.f32.mrb[0].mxu0
        %v1367 = vadd.f32 %v1226, %v1366
        %v1368 = vpop.f32.mrb[0].mxu0
        %v1369 = vpop.f32.mrb[0].mxu0
        %v1370 = vadd.f32 %v1226, %v1369
        %v1371 = vpop.f32.mrb[0].mxu0
        %1372 = vmatprep.mubr.bf16.mxu0 0
        %1373 = vmatmul.mubr.bf16.gmra.mrb[0].mxu0 %v1262
        %v1374 = vpop.f32.mrb[0].mxu0
        %v1375 = vadd.f32 %v1226, %v1374
        %v1376 = vpop.f32.mrb[0].mxu0
        %v1377 = vpop.f32.mrb[0].mxu0
        %v1378 = vadd.f32 %v1226, %v1377
        %v1379 = vpop.f32.mrb[0].mxu0
        %1380 = vmatprep.mubr.bf16.mxu0 0
        %1381 = vmatmul.mubr.bf16.gmra.mrb[0].mxu0 %v1263
        %v1382 = vpop.f32.mrb[0].mxu0
        %v1383 = vadd.f32 %v1226, %v1382
        %v1384 = vpop.f32.mrb[0].mxu0
        %v1385 = vpop.f32.mrb[0].mxu0
        %v1386 = vadd.f32 %v1226, %v1385
        %v1387 = vpop.f32.mrb[0].mxu0
        %1388 = vmatprep.mubr.bf16.mxu0 0
        %1389 = vmatmul.mubr.bf16.gmra.mrb[0].mxu0 %v1264
        %v1390 = vpop.f32.mrb[0].mxu0
        %v1391 = vadd.f32 %v1226, %v1390
        %v1392 = vpop.f32.mrb[0].mxu0
        %v1393 = vpop.f32.mrb[0].mxu0
        %v1394 = vadd.f32 %v1226, %v1393
        %v1395 = vpop.f32.mrb[0].mxu0
        %1396 = vmatprep.mubr.bf16.mxu0 0
        %1397 = vmatmul.mubr.bf16.gmra.mrb[0].mxu0 %v1265
        %v1398 = vpop.f32.mrb[0].mxu0
        %v1399 = vadd.f32 %v1226, %v1398
        %v1400 = vpop.f32.mrb[0].mxu0
        %v1401 = vpop.f32.mrb[0].mxu0
        %v1402 = vadd.f32 %v1226, %v1401
        %v1403 = vpop.f32.mrb[0].mxu0
        %1404 = vmatprep.mubr.bf16.mxu0 0
        %1405 = vmatmul.mubr.bf16.gmra.mrb[0].mxu0 %v1266
        %v1406 = vpop.f32.mrb[0].mxu0
        %v1407 = vadd.f32 %v1226, %v1406
        %v1408 = vpop.f32.mrb[0].mxu0
        %v1409 = vpop.f32.mrb[0].mxu0
        %v1410 = vadd.f32 %v1226, %v1409
        %v1411 = vpop.f32.mrb[0].mxu0
        %1412 = vmatprep.mubr.bf16.mxu0 0
        %1413 = vmatmul.mubr.bf16.gmra.mrb[0].mxu0 %v1267
        %v1414 = vpop.f32.mrb[0].mxu0
        %v1415 = vadd.f32 %v1226, %v1414
        %v1416 = vpop.f32.mrb[0].mxu0
        %v1417 = vpop.f32.mrb[0].mxu0
        %v1418 = vadd.f32 %v1226, %v1417
        %v1419 = vpop.f32.mrb[0].mxu0
        %1420 = vdwg.mxu0
        %v1421 = vpack.c.bf16 %v1362, %v1359
        %v1422 = vpack.c.bf16 %v1370, %v1367
        %v1423 = vpack.c.bf16 %v1378, %v1375
        %v1424 = vpack.c.bf16 %v1386, %v1383
        %v1425 = vpack.c.bf16 %v1394, %v1391
        %v1426 = vpack.c.bf16 %v1402, %v1399
        %v1427 = vpack.c.bf16 %v1410, %v1407
        %v1428 = vpack.c.bf16 %v1418, %v1415
        %v1429 = vld [vmem:[#allocation2] sm:$0xff]
        %v1430 = vld [vmem:[#allocation2 + $0x8] sm:$0xff]
        %v1431 = vld [vmem:[#allocation2 + $0x10] sm:$0xff]
        %v1432 = vld [vmem:[#allocation2 + $0x18] sm:$0xff]
        %vm1433 = vcmask 261120
        %v1435 = vsel %vm1433, %v1421, 0
        %v1438 = vsel %vm1433, %v1422, 0
        %v1441 = vsel %vm1433, %v1423, 0
        %v1444 = vsel %vm1433, %v1424, 0
        %v1447 = vsel %vm1433, %v1425, 0
        %v1450 = vsel %vm1433, %v1426, 0
        %v1453 = vsel %vm1433, %v1427, 0
        %v1456 = vsel %vm1433, %v1428, 0
        %1458 = vmatprep.subr.bf16.mxu0 %v1430
        %1459 = vmatpush1.bf16.msra.mxu0 %v1429
        %1460 = vmatprep.subr.bf16.mxu0 %v1432
        %1461 = vmatpush1.bf16.msra.mxu0 %v1431
        %1462 = vmatprep.subr.bf16.mxu0 0
        %1463 = vmatpush1.bf16.msra.mxu0 0
        %1464 = vmatprep.subr.bf16.mxu0 0
        %1465 = vmatpush1.bf16.msra.mxu0 0
        %1466 = vmatprep.subr.bf16.mxu0 0
        %1467 = vmatpush1.bf16.msra.mxu0 0
        %1468 = vmatprep.subr.bf16.mxu0 0
        %1469 = vmatpush1.bf16.msra.mxu0 0
        %1470 = vmatprep.subr.bf16.mxu0 0
        %1471 = vmatpush1.bf16.msra.mxu0 0
        %1472 = vmatprep.subr.bf16.mxu0 0
        %1473 = vmatpush1.bf16.msra.mxu0 0
        %1474 = vmatprep.subr.bf16.mxu0 0
        %1475 = vmatpush1.bf16.msra.mxu0 0
        %1476 = vmatprep.subr.bf16.mxu0 0
        %1477 = vmatpush1.bf16.msra.mxu0 0
        %1478 = vmatprep.subr.bf16.mxu0 0
        %1479 = vmatpush1.bf16.msra.mxu0 0
        %1480 = vmatprep.subr.bf16.mxu0 0
        %1481 = vmatpush1.bf16.msra.mxu0 0
        %1482 = vmatprep.subr.bf16.mxu0 0
        %1483 = vmatpush1.bf16.msra.mxu0 0
        %1484 = vmatprep.subr.bf16.mxu0 0
        %1485 = vmatpush1.bf16.msra.mxu0 0
        %1486 = vmatprep.subr.bf16.mxu0 0
        %1487 = vmatpush1.bf16.msra.mxu0 0
        %1488 = vmatprep.subr.bf16.mxu0 0
        %1489 = vmatpush1.bf16.msra.mxu0 0
        %1490 = vmatprep.mubr.bf16.mxu0 0
        %1491 = vmatmul.mubr.bf16.gmra.mrb[0].mxu0 %v1435
        %v1492 = vpop.f32.mrb[0].mxu0
        %v1493 = vadd.f32 0.0, %v1492
        %v1494 = vpop.f32.mrb[0].mxu0
        %v1495 = vadd.f32 0.0, %v1494
        %v1496 = vpop.f32.mrb[0].mxu0
        %v1497 = vadd.f32 0.0, %v1496
        %v1498 = vpop.f32.mrb[0].mxu0
        %v1499 = vadd.f32 0.0, %v1498
        %1500 = vmatprep.mubr.bf16.mxu0 0
        %1501 = vmatmul.mubr.bf16.gmra.mrb[0].mxu0 %v1438
        %v1502 = vpop.f32.mrb[0].mxu0
        %v1503 = vadd.f32 0.0, %v1502
        %v1504 = vpop.f32.mrb[0].mxu0
        %v1505 = vadd.f32 0.0, %v1504
        %v1506 = vpop.f32.mrb[0].mxu0
        %v1507 = vadd.f32 0.0, %v1506
        %v1508 = vpop.f32.mrb[0].mxu0
        %v1509 = vadd.f32 0.0, %v1508
        %1510 = vmatprep.mubr.bf16.mxu0 0
        %1511 = vmatmul.mubr.bf16.gmra.mrb[0].mxu0 %v1441
        %v1512 = vpop.f32.mrb[0].mxu0
        %v1513 = vadd.f32 0.0, %v1512
        %v1514 = vpop.f32.mrb[0].mxu0
        %v1515 = vadd.f32 0.0, %v1514
        %v1516 = vpop.f32.mrb[0].mxu0
        %v1517 = vadd.f32 0.0, %v1516
        %v1518 = vpop.f32.mrb[0].mxu0
        %v1519 = vadd.f32 0.0, %v1518
        %1520 = vmatprep.mubr.bf16.mxu0 0
        %1521 = vmatmul.mubr.bf16.gmra.mrb[0].mxu0 %v1444
        %v1522 = vpop.f32.mrb[0].mxu0
        %v1523 = vadd.f32 0.0, %v1522
        %v1524 = vpop.f32.mrb[0].mxu0
        %v1525 = vadd.f32 0.0, %v1524
        %v1526 = vpop.f32.mrb[0].mxu0
        %v1527 = vadd.f32 0.0, %v1526
        %v1528 = vpop.f32.mrb[0].mxu0
        %v1529 = vadd.f32 0.0, %v1528
        %1530 = vmatprep.mubr.bf16.mxu0 0
        %1531 = vmatmul.mubr.bf16.gmra.mrb[0].mxu0 %v1447
        %v1532 = vpop.f32.mrb[0].mxu0
        %v1533 = vadd.f32 0.0, %v1532
        %v1534 = vpop.f32.mrb[0].mxu0
        %v1535 = vadd.f32 0.0, %v1534
        %v1536 = vpop.f32.mrb[0].mxu0
        %v1537 = vadd.f32 0.0, %v1536
        %v1538 = vpop.f32.mrb[0].mxu0
        %v1539 = vadd.f32 0.0, %v1538
        %1540 = vmatprep.mubr.bf16.mxu0 0
        %1541 = vmatmul.mubr.bf16.gmra.mrb[0].mxu0 %v1450
        %v1542 = vpop.f32.mrb[0].mxu0
        %v1543 = vadd.f32 0.0, %v1542
        %v1544 = vpop.f32.mrb[0].mxu0
        %v1545 = vadd.f32 0.0, %v1544
        %v1546 = vpop.f32.mrb[0].mxu0
        %v1547 = vadd.f32 0.0, %v1546
        %v1548 = vpop.f32.mrb[0].mxu0
        %v1549 = vadd.f32 0.0, %v1548
        %1550 = vmatprep.mubr.bf16.mxu0 0
        %1551 = vmatmul.mubr.bf16.gmra.mrb[0].mxu0 %v1453
        %v1552 = vpop.f32.mrb[0].mxu0
        %v1553 = vadd.f32 0.0, %v1552
        %v1554 = vpop.f32.mrb[0].mxu0
        %v1555 = vadd.f32 0.0, %v1554
        %v1556 = vpop.f32.mrb[0].mxu0
        %v1557 = vadd.f32 0.0, %v1556
        %v1558 = vpop.f32.mrb[0].mxu0
        %v1559 = vadd.f32 0.0, %v1558
        %1560 = vmatprep.mubr.bf16.mxu0 0
        %1561 = vmatmul.mubr.bf16.gmra.mrb[0].mxu0 %v1456
        %v1562 = vpop.f32.mrb[0].mxu0
        %v1563 = vadd.f32 0.0, %v1562
        %v1564 = vpop.f32.mrb[0].mxu0
        %v1565 = vadd.f32 0.0, %v1564
        %v1566 = vpop.f32.mrb[0].mxu0
        %v1567 = vadd.f32 0.0, %v1566
        %v1568 = vpop.f32.mrb[0].mxu0
        %v1569 = vadd.f32 0.0, %v1568
        %1570 = vdwg.mxu0
        %v1571 = vlaneseq
        %v1572 = vand.u32 %v1571, 127
        %v1573 = vadd.s32 %v1572, 128
        %vm1574 = vcmp.lt.s32.totalorder %v1572, 200
        %vm1575 = vcmp.lt.s32.totalorder %v1573, 200
        %v1576 = vsel %vm1574, %v1493, -1e+30
        %v1577 = vsel %vm1575, %v1495, -1e+30
        %v1578 = vsel %vm1574, %v1497, -1e+30
        %v1579 = vsel %vm1575, %v1499, -1e+30
        %v1580 = vsel %vm1574, %v1503, -1e+30
        %v1581 = vsel %vm1575, %v1505, -1e+30
        %v1582 = vsel %vm1574, %v1507, -1e+30
        %v1583 = vsel %vm1575, %v1509, -1e+30
        %v1584 = vsel %vm1574, %v1513, -1e+30
        %v1585 = vsel %vm1575, %v1515, -1e+30
        %v1586 = vsel %vm1574, %v1517, -1e+30
        %v1587 = vsel %vm1575, %v1519, -1e+30
        %v1588 = vsel %vm1574, %v1523, -1e+30
        %v1589 = vsel %vm1575, %v1525, -1e+30
        %v1590 = vsel %vm1574, %v1527, -1e+30
        %v1591 = vsel %vm1575, %v1529, -1e+30
        %v1592 = vsel %vm1574, %v1533, -1e+30
        %v1593 = vsel %vm1575, %v1535, -1e+30
        %v1594 = vsel %vm1574, %v1537, -1e+30
        %v1595 = vsel %vm1575, %v1539, -1e+30
        %v1596 = vsel %vm1574, %v1543, -1e+30
        %v1597 = vsel %vm1575, %v1545, -1e+30
        %v1598 = vsel %vm1574, %v1547, -1e+30
        %v1599 = vsel %vm1575, %v1549, -1e+30
        %v1600 = vsel %vm1574, %v1553, -1e+30
        %v1601 = vsel %vm1575, %v1555, -1e+30
        %v1602 = vsel %vm1574, %v1557, -1e+30
        %v1603 = vsel %vm1575, %v1559, -1e+30
        %v1604 = vsel %vm1574, %v1563, -1e+30
        %v1605 = vsel %vm1575, %v1565, -1e+30
        %v1606 = vsel %vm1574, %v1567, -1e+30
        %v1607 = vsel %vm1575, %v1569, -1e+30
        %v1608 = vmax.f32 %v1576, %v1577
        %1609 = vmax.xlane.f32.xlu0 %v1608
        %v1610 = vpop.xlane.xlu0 %1609
        %v1611 = vmax.f32 %v1578, %v1579
        %1612 = vmax.xlane.f32.xlu0 %v1611
        %v1613 = vpop.xlane.xlu0 %1612
        %v1614 = vmax.f32 %v1580, %v1581
        %1615 = vmax.xlane.f32.xlu0 %v1614
        %v1616 = vpop.xlane.xlu0 %1615
        %v1617 = vmax.f32 %v1582, %v1583
        %1618 = vmax.xlane.f32.xlu0 %v1617
        %v1619 = vpop.xlane.xlu0 %1618
        %v1620 = vmax.f32 %v1584, %v1585
        %1621 = vmax.xlane.f32.xlu0 %v1620
        %v1622 = vpop.xlane.xlu0 %1621
        %v1623 = vmax.f32 %v1586, %v1587
        %1624 = vmax.xlane.f32.xlu0 %v1623
        %v1625 = vpop.xlane.xlu0 %1624
        %v1626 = vmax.f32 %v1588, %v1589
        %1627 = vmax.xlane.f32.xlu0 %v1626
        %v1628 = vpop.xlane.xlu0 %1627
        %v1629 = vmax.f32 %v1590, %v1591
        %1630 = vmax.xlane.f32.xlu0 %v1629
        %v1631 = vpop.xlane.xlu0 %1630
        %v1632 = vmax.f32 %v1592, %v1593
        %1633 = vmax.xlane.f32.xlu0 %v1632
        %v1634 = vpop.xlane.xlu0 %1633
        %v1635 = vmax.f32 %v1594, %v1595
        %1636 = vmax.xlane.f32.xlu0 %v1635
        %v1637 = vpop.xlane.xlu0 %1636
        %v1638 = vmax.f32 %v1596, %v1597
        %1639 = vmax.xlane.f32.xlu0 %v1638
        %v1640 = vpop.xlane.xlu0 %1639
        %v1641 = vmax.f32 %v1598, %v1599
        %1642 = vmax.xlane.f32.xlu0 %v1641
        %v1643 = vpop.xlane.xlu0 %1642
        %v1644 = vmax.f32 %v1600, %v1601
        %1645 = vmax.xlane.f32.xlu0 %v1644
        %v1646 = vpop.xlane.xlu0 %1645
        %v1647 = vmax.f32 %v1602, %v1603
        %1648 = vmax.xlane.f32.xlu0 %v1647
        %v1649 = vpop.xlane.xlu0 %1648
        %v1650 = vmax.f32 %v1604, %v1605
        %1651 = vmax.xlane.f32.xlu0 %v1650
        %v1652 = vpop.xlane.xlu0 %1651
        %v1653 = vmax.f32 %v1606, %v1607
        %1654 = vmax.xlane.f32.xlu0 %v1653
        %v1655 = vpop.xlane.xlu0 %1654
        %v1656 = vsub.f32 %v1576, %v1610
        %v1657 = vsub.f32 %v1577, %v1610
        %v1658 = vsub.f32 %v1578, %v1613
        %v1659 = vsub.f32 %v1579, %v1613
        %v1660 = vsub.f32 %v1580, %v1616
        %v1661 = vsub.f32 %v1581, %v1616
        %v1662 = vsub.f32 %v1582, %v1619
        %v1663 = vsub.f32 %v1583, %v1619
        %v1664 = vsub.f32 %v1584, %v1622
        %v1665 = vsub.f32 %v1585, %v1622
        %v1666 = vsub.f32 %v1586, %v1625
        %v1667 = vsub.f32 %v1587, %v1625
        %v1668 = vsub.f32 %v1588, %v1628
        %v1669 = vsub.f32 %v1589, %v1628
        %v1670 = vsub.f32 %v1590, %v1631
        %v1671 = vsub.f32 %v1591, %v1631
        %v1672 = vsub.f32 %v1592, %v1634
        %v1673 = vsub.f32 %v1593, %v1634
        %v1674 = vsub.f32 %v1594, %v1637
        %v1675 = vsub.f32 %v1595, %v1637
        %v1676 = vsub.f32 %v1596, %v1640
        %v1677 = vsub.f32 %v1597, %v1640
        %v1678 = vsub.f32 %v1598, %v1643
        %v1679 = vsub.f32 %v1599, %v1643
        %v1680 = vsub.f32 %v1600, %v1646
        %v1681 = vsub.f32 %v1601, %v1646
        %v1682 = vsub.f32 %v1602, %v1649
        %v1683 = vsub.f32 %v1603, %v1649
        %v1684 = vsub.f32 %v1604, %v1652
        %v1685 = vsub.f32 %v1605, %v1652
        %v1686 = vsub.f32 %v1606, %v1655
        %v1687 = vsub.f32 %v1607, %v1655
        %v1688 = vmul.f32 %v1656, 1.442695
        %v1689 = vpow.pop %v1688
        %v1690 = vmul.f32 %v1657, 1.442695
        %v1691 = vpow.pop %v1690
        %v1692 = vmul.f32 %v1658, 1.442695
        %v1693 = vpow.pop %v1692
        %v1694 = vmul.f32 %v1659, 1.442695
        %v1695 = vpow.pop %v1694
        %v1696 = vmul.f32 %v1660, 1.442695
        %v1697 = vpow.pop %v1696
        %v1698 = vmul.f32 %v1661, 1.442695
        %v1699 = vpow.pop %v1698
        %v1700 = vmul.f32 %v1662, 1.442695
        %v1701 = vpow.pop %v1700
        %v1702 = vmul.f32 %v1663, 1.442695
        %v1703 = vpow.pop %v1702
        %v1704 = vmul.f32 %v1664, 1.442695
        %v1705 = vpow.pop %v1704
        %v1706 = vmul.f32 %v1665, 1.442695
        %v1707 = vpow.pop %v1706
        %v1708 = vmul.f32 %v1666, 1.442695
        %v1709 = vpow.pop %v1708
        %v1710 = vmul.f32 %v1667, 1.442695
        %v1711 = vpow.pop %v1710
        %v1712 = vmul.f32 %v1668, 1.442695
        %v1713 = vpow.pop %v1712
        %v1714 = vmul.f32 %v1669, 1.442695
        %v1715 = vpow.pop %v1714
        %v1716 = vmul.f32 %v1670, 1.442695
        %v1717 = vpow.pop %v1716
        %v1718 = vmul.f32 %v1671, 1.442695
        %v1719 = vpow.pop %v1718
        %v1720 = vmul.f32 %v1672, 1.442695
        %v1721 = vpow.pop %v1720
        %v1722 = vmul.f32 %v1673, 1.442695
        %v1723 = vpow.pop %v1722
        %v1724 = vmul.f32 %v1674, 1.442695
        %v1725 = vpow.pop %v1724
        %v1726 = vmul.f32 %v1675, 1.442695
        %v1727 = vpow.pop %v1726
        %v1728 = vmul.f32 %v1676, 1.442695
        %v1729 = vpow.pop %v1728
        %v1730 = vmul.f32 %v1677, 1.442695
        %v1731 = vpow.pop %v1730
        %v1732 = vmul.f32 %v1678, 1.442695
        %v1733 = vpow.pop %v1732
        %v1734 = vmul.f32 %v1679, 1.442695
        %v1735 = vpow.pop %v1734
        %v1736 = vmul.f32 %v1680, 1.442695
        %v1737 = vpow.pop %v1736
        %v1738 = vmul.f32 %v1681, 1.442695
        %v1739 = vpow.pop %v1738
        %v1740 = vmul.f32 %v1682, 1.442695
        %v1741 = vpow.pop %v1740
        %v1742 = vmul.f32 %v1683, 1.442695
        %v1743 = vpow.pop %v1742
        %v1744 = vmul.f32 %v1684, 1.442695
        %v1745 = vpow.pop %v1744
        %v1746 = vmul.f32 %v1685, 1.442695
        %v1747 = vpow.pop %v1746
        %v1748 = vmul.f32 %v1686, 1.442695
        %v1749 = vpow.pop %v1748
        %v1750 = vmul.f32 %v1687, 1.442695
        %v1751 = vpow.pop %v1750
        %v1752 = vadd.f32 %v1689, %v1691
        %1753 = vadd.xlane.f32.xlu0 %v1752
        %v1754 = vpop.xlane.xlu0 %1753
        %v1755 = vadd.f32 %v1693, %v1695
        %1756 = vadd.xlane.f32.xlu0 %v1755
        %v1757 = vpop.xlane.xlu0 %1756
        %v1758 = vadd.f32 %v1697, %v1699
        %1759 = vadd.xlane.f32.xlu0 %v1758
        %v1760 = vpop.xlane.xlu0 %1759
        %v1761 = vadd.f32 %v1701, %v1703
        %1762 = vadd.xlane.f32.xlu0 %v1761
        %v1763 = vpop.xlane.xlu0 %1762
        %v1764 = vadd.f32 %v1705, %v1707
        %1765 = vadd.xlane.f32.xlu0 %v1764
        %v1766 = vpop.xlane.xlu0 %1765
        %v1767 = vadd.f32 %v1709, %v1711
        %1768 = vadd.xlane.f32.xlu0 %v1767
        %v1769 = vpop.xlane.xlu0 %1768
        %v1770 = vadd.f32 %v1713, %v1715
        %1771 = vadd.xlane.f32.xlu0 %v1770
        %v1772 = vpop.xlane.xlu0 %1771
        %v1773 = vadd.f32 %v1717, %v1719
        %1774 = vadd.xlane.f32.xlu0 %v1773
        %v1775 = vpop.xlane.xlu0 %1774
        %v1776 = vadd.f32 %v1721, %v1723
        %1777 = vadd.xlane.f32.xlu0 %v1776
        %v1778 = vpop.xlane.xlu0 %1777
        %v1779 = vadd.f32 %v1725, %v1727
        %1780 = vadd.xlane.f32.xlu0 %v1779
        %v1781 = vpop.xlane.xlu0 %1780
        %v1782 = vadd.f32 %v1729, %v1731
        %1783 = vadd.xlane.f32.xlu0 %v1782
        %v1784 = vpop.xlane.xlu0 %1783
        %v1785 = vadd.f32 %v1733, %v1735
        %1786 = vadd.xlane.f32.xlu0 %v1785
        %v1787 = vpop.xlane.xlu0 %1786
        %v1788 = vadd.f32 %v1737, %v1739
        %1789 = vadd.xlane.f32.xlu0 %v1788
        %v1790 = vpop.xlane.xlu0 %1789
        %v1791 = vadd.f32 %v1741, %v1743
        %1792 = vadd.xlane.f32.xlu0 %v1791
        %v1793 = vpop.xlane.xlu0 %1792
        %v1794 = vadd.f32 %v1745, %v1747
        %1795 = vadd.xlane.f32.xlu0 %v1794
        %v1796 = vpop.xlane.xlu0 %1795
        %v1797 = vadd.f32 %v1749, %v1751
        %1798 = vadd.xlane.f32.xlu0 %v1797
        %v1799 = vpop.xlane.xlu0 %1798
        %v1800 = vrcp.pop %v1754
        %v1801 = vrcp.pop %v1757
        %v1802 = vrcp.pop %v1760
        %v1803 = vrcp.pop %v1763
        %v1804 = vrcp.pop %v1766
        %v1805 = vrcp.pop %v1769
        %v1806 = vrcp.pop %v1772
        %v1807 = vrcp.pop %v1775
        %v1808 = vrcp.pop %v1778
        %v1809 = vrcp.pop %v1781
        %v1810 = vrcp.pop %v1784
        %v1811 = vrcp.pop %v1787
        %v1812 = vrcp.pop %v1790
        %v1813 = vrcp.pop %v1793
        %v1814 = vrcp.pop %v1796
        %v1815 = vrcp.pop %v1799
        %v1816 = vpack.c.bf16 %v1693, %v1689
        %v1817 = vpack.c.bf16 %v1695, %v1691
        %v1818 = vpack.c.bf16 %v1701, %v1697
        %v1819 = vpack.c.bf16 %v1703, %v1699
        %v1820 = vpack.c.bf16 %v1709, %v1705
        %v1821 = vpack.c.bf16 %v1711, %v1707
        %v1822 = vpack.c.bf16 %v1717, %v1713
        %v1823 = vpack.c.bf16 %v1719, %v1715
        %v1824 = vpack.c.bf16 %v1725, %v1721
        %v1825 = vpack.c.bf16 %v1727, %v1723
        %v1826 = vpack.c.bf16 %v1733, %v1729
        %v1827 = vpack.c.bf16 %v1735, %v1731
        %v1828 = vpack.c.bf16 %v1741, %v1737
        %v1829 = vpack.c.bf16 %v1743, %v1739
        %v1830 = vpack.c.bf16 %v1749, %v1745
        %v1831 = vpack.c.bf16 %v1751, %v1747
        %v1832 = vld [vmem:[#allocation3] sm:$0xff]
        %v1833 = vld [vmem:[#allocation3 + $0x8] sm:$0xff]
        %v1834 = vld [vmem:[#allocation3 + $0x10] sm:$0xff]
        %v1835 = vld [vmem:[#allocation3 + $0x18] sm:$0xff]
        %v1836 = vld [vmem:[#allocation3 + $0x20] sm:$0xff]
        %v1837 = vld [vmem:[#allocation3 + $0x28] sm:$0xff]
        %v1838 = vld [vmem:[#allocation3 + $0x30] sm:$0xff]
        %v1839 = vld [vmem:[#allocation3 + $0x38] sm:$0xff]
        %v1840 = vld [vmem:[#allocation3 + $0x40] sm:$0xff]
        %v1841 = vld [vmem:[#allocation3 + $0x48] sm:$0xff]
        %v1842 = vld [vmem:[#allocation3 + $0x50] sm:$0xff]
        %v1843 = vld [vmem:[#allocation3 + $0x58] sm:$0xff]
        %v1844 = vld [vmem:[#allocation3 + $0x60] sm:$0xff]
        %v1845 = vld [vmem:[#allocation3 + $0x68] sm:$0xff]
        %v1846 = vld [vmem:[#allocation3 + $0x70] sm:$0xff]
        %v1847 = vld [vmem:[#allocation3 + $0x78] sm:$0xff]
        %1848 = vmatprep.subr.bf16.mxu0 0
        %1849 = vmatpush1.bf16.msra.mxu0 %v1832
        %1850 = vmatprep.subr.bf16.mxu0 0
        %1851 = vmatpush1.bf16.msra.mxu0 %v1833
        %1852 = vmatprep.subr.bf16.mxu0 0
        %1853 = vmatpush1.bf16.msra.mxu0 %v1834
        %1854 = vmatprep.subr.bf16.mxu0 0
        %1855 = vmatpush1.bf16.msra.mxu0 %v1835
        %1856 = vmatprep.subr.bf16.mxu0 0
        %1857 = vmatpush1.bf16.msra.mxu0 %v1836
        %1858 = vmatprep.subr.bf16.mxu0 0
        %1859 = vmatpush1.bf16.msra.mxu0 %v1837
        %1860 = vmatprep.subr.bf16.mxu0 0
        %1861 = vmatpush1.bf16.msra.mxu0 %v1838
        %1862 = vmatprep.subr.bf16.mxu0 0
        %1863 = vmatpush1.bf16.msra.mxu0 %v1839
        %1864 = vmatprep.subr.bf16.mxu0 0
        %1865 = vmatpush1.bf16.msra.mxu0 %v1840
        %1866 = vmatprep.subr.bf16.mxu0 0
        %1867 = vmatpush1.bf16.msra.mxu0 %v1841
        %1868 = vmatprep.subr.bf16.mxu0 0
        %1869 = vmatpush1.bf16.msra.mxu0 %v1842
        %1870 = vmatprep.subr.bf16.mxu0 0
        %1871 = vmatpush1.bf16.msra.mxu0 %v1843
        %1872 = vmatprep.subr.bf16.mxu0 0
        %1873 = vmatpush1.bf16.msra.mxu0 %v1844
        %1874 = vmatprep.subr.bf16.mxu0 0
        %1875 = vmatpush1.bf16.msra.mxu0 %v1845
        %1876 = vmatprep.subr.bf16.mxu0 0
        %1877 = vmatpush1.bf16.msra.mxu0 %v1846
        %1878 = vmatprep.subr.bf16.mxu0 0
        %1879 = vmatpush1.bf16.msra.mxu0 %v1847
        %1880 = vmatprep.mubr.bf16.mxu0 %v1817
        %1881 = vmatmul.mubr.bf16.gmra.mrb[0].mxu0 %v1816
        %v1882 = vpop.f32.mrb[0].mxu0
        %v1883 = vadd.f32 0.0, %v1882
        %v1884 = vpop.f32.mrb[0].mxu0
        %v1885 = vpop.f32.mrb[0].mxu0
        %v1886 = vadd.f32 0.0, %v1885
        %v1887 = vpop.f32.mrb[0].mxu0
        %1888 = vmatprep.mubr.bf16.mxu0 %v1819
        %1889 = vmatmul.mubr.bf16.gmra.mrb[0].mxu0 %v1818
        %v1890 = vpop.f32.mrb[0].mxu0
        %v1891 = vadd.f32 0.0, %v1890
        %v1892 = vpop.f32.mrb[0].mxu0
        %v1893 = vpop.f32.mrb[0].mxu0
        %v1894 = vadd.f32 0.0, %v1893
        %v1895 = vpop.f32.mrb[0].mxu0
        %1896 = vmatprep.mubr.bf16.mxu0 %v1821
        %1897 = vmatmul.mubr.bf16.gmra.mrb[0].mxu0 %v1820
        %v1898 = vpop.f32.mrb[0].mxu0
        %v1899 = vadd.f32 0.0, %v1898
        %v1900 = vpop.f32.mrb[0].mxu0
        %v1901 = vpop.f32.mrb[0].mxu0
        %v1902 = vadd.f32 0.0, %v1901
        %v1903 = vpop.f32.mrb[0].mxu0
        %1904 = vmatprep.mubr.bf16.mxu0 %v1823
        %1905 = vmatmul.mubr.bf16.gmra.mrb[0].mxu0 %v1822
        %v1906 = vpop.f32.mrb[0].mxu0
        %v1907 = vadd.f32 0.0, %v1906
        %v1908 = vpop.f32.mrb[0].mxu0
        %v1909 = vpop.f32.mrb[0].mxu0
        %v1910 = vadd.f32 0.0, %v1909
        %v1911 = vpop.f32.mrb[0].mxu0
        %1912 = vmatprep.mubr.bf16.mxu0 %v1825
        %1913 = vmatmul.mubr.bf16.gmra.mrb[0].mxu0 %v1824
        %v1914 = vpop.f32.mrb[0].mxu0
        %v1915 = vadd.f32 0.0, %v1914
        %v1916 = vpop.f32.mrb[0].mxu0
        %v1917 = vpop.f32.mrb[0].mxu0
        %v1918 = vadd.f32 0.0, %v1917
        %v1919 = vpop.f32.mrb[0].mxu0
        %1920 = vmatprep.mubr.bf16.mxu0 %v1827
        %1921 = vmatmul.mubr.bf16.gmra.mrb[0].mxu0 %v1826
        %v1922 = vpop.f32.mrb[0].mxu0
        %v1923 = vadd.f32 0.0, %v1922
        %v1924 = vpop.f32.mrb[0].mxu0
        %v1925 = vpop.f32.mrb[0].mxu0
        %v1926 = vadd.f32 0.0, %v1925
        %v1927 = vpop.f32.mrb[0].mxu0
        %1928 = vmatprep.mubr.bf16.mxu0 %v1829
        %1929 = vmatmul.mubr.bf16.gmra.mrb[0].mxu0 %v1828
        %v1930 = vpop.f32.mrb[0].mxu0
        %v1931 = vadd.f32 0.0, %v1930
        %v1932 = vpop.f32.mrb[0].mxu0
        %v1933 = vpop.f32.mrb[0].mxu0
        %v1934 = vadd.f32 0.0, %v1933
        %v1935 = vpop.f32.mrb[0].mxu0
        %1936 = vmatprep.mubr.bf16.mxu0 %v1831
        %1937 = vmatmul.mubr.bf16.gmra.mrb[0].mxu0 %v1830
        %v1938 = vpop.f32.mrb[0].mxu0
        %v1939 = vadd.f32 0.0, %v1938
        %v1940 = vpop.f32.mrb[0].mxu0
        %v1941 = vpop.f32.mrb[0].mxu0
        %v1942 = vadd.f32 0.0, %v1941
        %v1943 = vpop.f32.mrb[0].mxu0
        %1944 = vdwg.mxu0
        %v1945 = vmul.f32 %v1883, %v1800
        %v1946 = vmul.f32 %v1886, %v1801
        %v1947 = vmul.f32 %v1891, %v1802
        %v1948 = vmul.f32 %v1894, %v1803
        %v1949 = vmul.f32 %v1899, %v1804
        %v1950 = vmul.f32 %v1902, %v1805
        %v1951 = vmul.f32 %v1907, %v1806
        %v1952 = vmul.f32 %v1910, %v1807
        %v1953 = vmul.f32 %v1915, %v1808
        %v1954 = vmul.f32 %v1918, %v1809
        %v1955 = vmul.f32 %v1923, %v1810
        %v1956 = vmul.f32 %v1926, %v1811
        %v1957 = vmul.f32 %v1931, %v1812
        %v1958 = vmul.f32 %v1934, %v1813
        %v1959 = vmul.f32 %v1939, %v1814
        %v1960 = vmul.f32 %v1942, %v1815
        %v1961 = vpack.c.bf16 %v1946, %v1945
        %v1962 = vpack.c.bf16 %v1948, %v1947
        %v1963 = vpack.c.bf16 %v1950, %v1949
        %v1964 = vpack.c.bf16 %v1952, %v1951
        %v1965 = vpack.c.bf16 %v1954, %v1953
        %v1966 = vpack.c.bf16 %v1956, %v1955
        %v1967 = vpack.c.bf16 %v1958, %v1957
        %v1968 = vpack.c.bf16 %v1960, %v1959
        %1969 = vst.msk [vmem:[#allocation4] sm:$0xff] %vm1433, %v1961
        %1970 = vst.msk [vmem:[#allocation4 + $0x8] sm:$0xff] %vm1433, %v1962
        %1971 = vst.msk [vmem:[#allocation4 + $0x10] sm:$0xff] %vm1433, %v1963
        %1972 = vst.msk [vmem:[#allocation4 + $0x18] sm:$0xff] %vm1433, %v1964
        %1973 = vst.msk [vmem:[#allocation4 + $0x20] sm:$0xff] %vm1433, %v1965
        %1974 = vst.msk [vmem:[#allocation4 + $0x28] sm:$0xff] %vm1433, %v1966
        %1975 = vst.msk [vmem:[#allocation4 + $0x30] sm:$0xff] %vm1433, %v1967
        %1976 = vst.msk [vmem:[#allocation4 + $0x38] sm:$0xff] %vm1433, %v1968
        %v1977 = vld [vmem:[#allocation2 + $0x20] sm:$0xff]
        %v1978 = vld [vmem:[#allocation2 + $0x28] sm:$0xff]
        %v1979 = vld [vmem:[#allocation2 + $0x30] sm:$0xff]
        %v1980 = vld [vmem:[#allocation2 + $0x38] sm:$0xff]
        %1989 = vrot.lane.b32.xlu0 %v1421, 96
        %v1990 = vpop.permute.xlu0 %1989
        %1991 = vrot.lane.b32.xlu0 %v1422, 96
        %v1992 = vpop.permute.xlu0 %1991
        %1993 = vrot.lane.b32.xlu0 %v1423, 96
        %v1994 = vpop.permute.xlu0 %1993
        %1995 = vrot.lane.b32.xlu0 %v1424, 96
        %v1996 = vpop.permute.xlu0 %1995
        %1997 = vrot.lane.b32.xlu0 %v1425, 96
        %v1998 = vpop.permute.xlu0 %1997
        %1999 = vrot.lane.b32.xlu0 %v1426, 96
        %v2000 = vpop.permute.xlu0 %1999
        %2001 = vrot.lane.b32.xlu0 %v1427, 96
        %v2002 = vpop.permute.xlu0 %2001
        %2003 = vrot.lane.b32.xlu0 %v1428, 96
        %v2004 = vpop.permute.xlu0 %2003
        %v2006 = vsel %vm1433, %v1990, 0
        %v2009 = vsel %vm1433, %v1992, 0
        %v2012 = vsel %vm1433, %v1994, 0
        %v2015 = vsel %vm1433, %v1996, 0
        %v2018 = vsel %vm1433, %v1998, 0
        %v2021 = vsel %vm1433, %v2000, 0
        %v2024 = vsel %vm1433, %v2002, 0
        %v2027 = vsel %vm1433, %v2004, 0
        %2029 = vmatprep.subr.bf16.mxu0 %v1978
        %2030 = vmatpush1.bf16.msra.mxu0 %v1977
        %2031 = vmatprep.subr.bf16.mxu0 %v1980
        %2032 = vmatpush1.bf16.msra.mxu0 %v1979
        %2033 = vmatprep.subr.bf16.mxu0 0
        %2034 = vmatpush1.bf16.msra.mxu0 0
        %2035 = vmatprep.subr.bf16.mxu0 0
        %2036 = vmatpush1.bf16.msra.mxu0 0
        %2037 = vmatprep.subr.bf16.mxu0 0
        %2038 = vmatpush1.bf16.msra.mxu0 0
        %2039 = vmatprep.subr.bf16.mxu0 0
        %2040 = vmatpush1.bf16.msra.mxu0 0
        %2041 = vmatprep.subr.bf16.mxu0 0
        %2042 = vmatpush1.bf16.msra.mxu0 0
        %2043 = vmatprep.subr.bf16.mxu0 0
        %2044 = vmatpush1.bf16.msra.mxu0 0
        %2045 = vmatprep.subr.bf16.mxu0 0
        %2046 = vmatpush1.bf16.msra.mxu0 0
        %2047 = vmatprep.subr.bf16.mxu0 0
        %2048 = vmatpush1.bf16.msra.mxu0 0
        %2049 = vmatprep.subr.bf16.mxu0 0
        %2050 = vmatpush1.bf16.msra.mxu0 0
        %2051 = vmatprep.subr.bf16.mxu0 0
        %2052 = vmatpush1.bf16.msra.mxu0 0
        %2053 = vmatprep.subr.bf16.mxu0 0
        %2054 = vmatpush1.bf16.msra.mxu0 0
        %2055 = vmatprep.subr.bf16.mxu0 0
        %2056 = vmatpush1.bf16.msra.mxu0 0
        %2057 = vmatprep.subr.bf16.mxu0 0
        %2058 = vmatpush1.bf16.msra.mxu0 0
        %2059 = vmatprep.subr.bf16.mxu0 0
        %2060 = vmatpush1.bf16.msra.mxu0 0
        %2061 = vmatprep.mubr.bf16.mxu0 0
        %2062 = vmatmul.mubr.bf16.gmra.mrb[0].mxu0 %v2006
        %v2063 = vpop.f32.mrb[0].mxu0
        %v2064 = vadd.f32 0.0, %v2063
        %v2065 = vpop.f32.mrb[0].mxu0
        %v2066 = vadd.f32 0.0, %v2065
        %v2067 = vpop.f32.mrb[0].mxu0
        %v2068 = vadd.f32 0.0, %v2067
        %v2069 = vpop.f32.mrb[0].mxu0
        %v2070 = vadd.f32 0.0, %v2069
        %2071 = vmatprep.mubr.bf16.mxu0 0
        %2072 = vmatmul.mubr.bf16.gmra.mrb[0].mxu0 %v2009
        %v2073 = vpop.f32.mrb[0].mxu0
        %v2074 = vadd.f32 0.0, %v2073
        %v2075 = vpop.f32.mrb[0].mxu0
        %v2076 = vadd.f32 0.0, %v2075
        %v2077 = vpop.f32.mrb[0].mxu0
        %v2078 = vadd.f32 0.0, %v2077
        %v2079 = vpop.f32.mrb[0].mxu0
        %v2080 = vadd.f32 0.0, %v2079
        %2081 = vmatprep.mubr.bf16.mxu0 0
        %2082 = vmatmul.mubr.bf16.gmra.mrb[0].mxu0 %v2012
        %v2083 = vpop.f32.mrb[0].mxu0
        %v2084 = vadd.f32 0.0, %v2083
        %v2085 = vpop.f32.mrb[0].mxu0
        %v2086 = vadd.f32 0.0, %v2085
        %v2087 = vpop.f32.mrb[0].mxu0
        %v2088 = vadd.f32 0.0, %v2087
        %v2089 = vpop.f32.mrb[0].mxu0
        %v2090 = vadd.f32 0.0, %v2089
        %2091 = vmatprep.mubr.bf16.mxu0 0
        %2092 = vmatmul.mubr.bf16.gmra.mrb[0].mxu0 %v2015
        %v2093 = vpop.f32.mrb[0].mxu0
        %v2094 = vadd.f32 0.0, %v2093
        %v2095 = vpop.f32.mrb[0].mxu0
        %v2096 = vadd.f32 0.0, %v2095
        %v2097 = vpop.f32.mrb[0].mxu0
        %v2098 = vadd.f32 0.0, %v2097
        %v2099 = vpop.f32.mrb[0].mxu0
        %v2100 = vadd.f32 0.0, %v2099
        %2101 = vmatprep.mubr.bf16.mxu0 0
        %2102 = vmatmul.mubr.bf16.gmra.mrb[0].mxu0 %v2018
        %v2103 = vpop.f32.mrb[0].mxu0
        %v2104 = vadd.f32 0.0, %v2103
        %v2105 = vpop.f32.mrb[0].mxu0
        %v2106 = vadd.f32 0.0, %v2105
        %v2107 = vpop.f32.mrb[0].mxu0
        %v2108 = vadd.f32 0.0, %v2107
        %v2109 = vpop.f32.mrb[0].mxu0
        %v2110 = vadd.f32 0.0, %v2109
        %2111 = vmatprep.mubr.bf16.mxu0 0
        %2112 = vmatmul.mubr.bf16.gmra.mrb[0].mxu0 %v2021
        %v2113 = vpop.f32.mrb[0].mxu0
        %v2114 = vadd.f32 0.0, %v2113
        %v2115 = vpop.f32.mrb[0].mxu0
        %v2116 = vadd.f32 0.0, %v2115
        %v2117 = vpop.f32.mrb[0].mxu0
        %v2118 = vadd.f32 0.0, %v2117
        %v2119 = vpop.f32.mrb[0].mxu0
        %v2120 = vadd.f32 0.0, %v2119
        %2121 = vmatprep.mubr.bf16.mxu0 0
        %2122 = vmatmul.mubr.bf16.gmra.mrb[0].mxu0 %v2024
        %v2123 = vpop.f32.mrb[0].mxu0
        %v2124 = vadd.f32 0.0, %v2123
        %v2125 = vpop.f32.mrb[0].mxu0
        %v2126 = vadd.f32 0.0, %v2125
        %v2127 = vpop.f32.mrb[0].mxu0
        %v2128 = vadd.f32 0.0, %v2127
        %v2129 = vpop.f32.mrb[0].mxu0
        %v2130 = vadd.f32 0.0, %v2129
        %2131 = vmatprep.mubr.bf16.mxu0 0
        %2132 = vmatmul.mubr.bf16.gmra.mrb[0].mxu0 %v2027
        %v2133 = vpop.f32.mrb[0].mxu0
        %v2134 = vadd.f32 0.0, %v2133
        %v2135 = vpop.f32.mrb[0].mxu0
        %v2136 = vadd.f32 0.0, %v2135
        %v2137 = vpop.f32.mrb[0].mxu0
        %v2138 = vadd.f32 0.0, %v2137
        %v2139 = vpop.f32.mrb[0].mxu0
        %v2140 = vadd.f32 0.0, %v2139
        %2141 = vdwg.mxu0
        %v2142 = vsel %vm1574, %v2064, -1e+30
        %v2143 = vsel %vm1575, %v2066, -1e+30
        %v2144 = vsel %vm1574, %v2068, -1e+30
        %v2145 = vsel %vm1575, %v2070, -1e+30
        %v2146 = vsel %vm1574, %v2074, -1e+30
        %v2147 = vsel %vm1575, %v2076, -1e+30
        %v2148 = vsel %vm1574, %v2078, -1e+30
        %v2149 = vsel %vm1575, %v2080, -1e+30
        %v2150 = vsel %vm1574, %v2084, -1e+30
        %v2151 = vsel %vm1575, %v2086, -1e+30
        %v2152 = vsel %vm1574, %v2088, -1e+30
        %v2153 = vsel %vm1575, %v2090, -1e+30
        %v2154 = vsel %vm1574, %v2094, -1e+30
        %v2155 = vsel %vm1575, %v2096, -1e+30
        %v2156 = vsel %vm1574, %v2098, -1e+30
        %v2157 = vsel %vm1575, %v2100, -1e+30
        %v2158 = vsel %vm1574, %v2104, -1e+30
        %v2159 = vsel %vm1575, %v2106, -1e+30
        %v2160 = vsel %vm1574, %v2108, -1e+30
        %v2161 = vsel %vm1575, %v2110, -1e+30
        %v2162 = vsel %vm1574, %v2114, -1e+30
        %v2163 = vsel %vm1575, %v2116, -1e+30
        %v2164 = vsel %vm1574, %v2118, -1e+30
        %v2165 = vsel %vm1575, %v2120, -1e+30
        %v2166 = vsel %vm1574, %v2124, -1e+30
        %v2167 = vsel %vm1575, %v2126, -1e+30
        %v2168 = vsel %vm1574, %v2128, -1e+30
        %v2169 = vsel %vm1575, %v2130, -1e+30
        %v2170 = vsel %vm1574, %v2134, -1e+30
        %v2171 = vsel %vm1575, %v2136, -1e+30
        %v2172 = vsel %vm1574, %v2138, -1e+30
        %v2173 = vsel %vm1575, %v2140, -1e+30
        %v2174 = vmax.f32 %v2142, %v2143
        %2175 = vmax.xlane.f32.xlu0 %v2174
        %v2176 = vpop.xlane.xlu0 %2175
        %v2177 = vmax.f32 %v2144, %v2145
        %2178 = vmax.xlane.f32.xlu0 %v2177
        %v2179 = vpop.xlane.xlu0 %2178
        %v2180 = vmax.f32 %v2146, %v2147
        %2181 = vmax.xlane.f32.xlu0 %v2180
        %v2182 = vpop.xlane.xlu0 %2181
        %v2183 = vmax.f32 %v2148, %v2149
        %2184 = vmax.xlane.f32.xlu0 %v2183
        %v2185 = vpop.xlane.xlu0 %2184
        %v2186 = vmax.f32 %v2150, %v2151
        %2187 = vmax.xlane.f32.xlu0 %v2186
        %v2188 = vpop.xlane.xlu0 %2187
        %v2189 = vmax.f32 %v2152, %v2153
        %2190 = vmax.xlane.f32.xlu0 %v2189
        %v2191 = vpop.xlane.xlu0 %2190
        %v2192 = vmax.f32 %v2154, %v2155
        %2193 = vmax.xlane.f32.xlu0 %v2192
        %v2194 = vpop.xlane.xlu0 %2193
        %v2195 = vmax.f32 %v2156, %v2157
        %2196 = vmax.xlane.f32.xlu0 %v2195
        %v2197 = vpop.xlane.xlu0 %2196
        %v2198 = vmax.f32 %v2158, %v2159
        %2199 = vmax.xlane.f32.xlu0 %v2198
        %v2200 = vpop.xlane.xlu0 %2199
        %v2201 = vmax.f32 %v2160, %v2161
        %2202 = vmax.xlane.f32.xlu0 %v2201
        %v2203 = vpop.xlane.xlu0 %2202
        %v2204 = vmax.f32 %v2162, %v2163
        %2205 = vmax.xlane.f32.xlu0 %v2204
        %v2206 = vpop.xlane.xlu0 %2205
        %v2207 = vmax.f32 %v2164, %v2165
        %2208 = vmax.xlane.f32.xlu0 %v2207
        %v2209 = vpop.xlane.xlu0 %2208
        %v2210 = vmax.f32 %v2166, %v2167
        %2211 = vmax.xlane.f32.xlu0 %v2210
        %v2212 = vpop.xlane.xlu0 %2211
        %v2213 = vmax.f32 %v2168, %v2169
        %2214 = vmax.xlane.f32.xlu0 %v2213
        %v2215 = vpop.xlane.xlu0 %2214
        %v2216 = vmax.f32 %v2170, %v2171
        %2217 = vmax.xlane.f32.xlu0 %v2216
        %v2218 = vpop.xlane.xlu0 %2217
        %v2219 = vmax.f32 %v2172, %v2173
        %2220 = vmax.xlane.f32.xlu0 %v2219
        %v2221 = vpop.xlane.xlu0 %2220
        %v2222 = vsub.f32 %v2142, %v2176
        %v2223 = vsub.f32 %v2143, %v2176
        %v2224 = vsub.f32 %v2144, %v2179
        %v2225 = vsub.f32 %v2145, %v2179
        %v2226 = vsub.f32 %v2146, %v2182
        %v2227 = vsub.f32 %v2147, %v2182
        %v2228 = vsub.f32 %v2148, %v2185
        %v2229 = vsub.f32 %v2149, %v2185
        %v2230 = vsub.f32 %v2150, %v2188
        %v2231 = vsub.f32 %v2151, %v2188
        %v2232 = vsub.f32 %v2152, %v2191
        %v2233 = vsub.f32 %v2153, %v2191
        %v2234 = vsub.f32 %v2154, %v2194
        %v2235 = vsub.f32 %v2155, %v2194
        %v2236 = vsub.f32 %v2156, %v2197
        %v2237 = vsub.f32 %v2157, %v2197
        %v2238 = vsub.f32 %v2158, %v2200
        %v2239 = vsub.f32 %v2159, %v2200
        %v2240 = vsub.f32 %v2160, %v2203
        %v2241 = vsub.f32 %v2161, %v2203
        %v2242 = vsub.f32 %v2162, %v2206
        %v2243 = vsub.f32 %v2163, %v2206
        %v2244 = vsub.f32 %v2164, %v2209
        %v2245 = vsub.f32 %v2165, %v2209
        %v2246 = vsub.f32 %v2166, %v2212
        %v2247 = vsub.f32 %v2167, %v2212
        %v2248 = vsub.f32 %v2168, %v2215
        %v2249 = vsub.f32 %v2169, %v2215
        %v2250 = vsub.f32 %v2170, %v2218
        %v2251 = vsub.f32 %v2171, %v2218
        %v2252 = vsub.f32 %v2172, %v2221
        %v2253 = vsub.f32 %v2173, %v2221
        %v2254 = vmul.f32 %v2222, 1.442695
        %v2255 = vpow.pop %v2254
        %v2256 = vmul.f32 %v2223, 1.442695
        %v2257 = vpow.pop %v2256
        %v2258 = vmul.f32 %v2224, 1.442695
        %v2259 = vpow.pop %v2258
        %v2260 = vmul.f32 %v2225, 1.442695
        %v2261 = vpow.pop %v2260
        %v2262 = vmul.f32 %v2226, 1.442695
        %v2263 = vpow.pop %v2262
        %v2264 = vmul.f32 %v2227, 1.442695
        %v2265 = vpow.pop %v2264
        %v2266 = vmul.f32 %v2228, 1.442695
        %v2267 = vpow.pop %v2266
        %v2268 = vmul.f32 %v2229, 1.442695
        %v2269 = vpow.pop %v2268
        %v2270 = vmul.f32 %v2230, 1.442695
        %v2271 = vpow.pop %v2270
        %v2272 = vmul.f32 %v2231, 1.442695
        %v2273 = vpow.pop %v2272
        %v2274 = vmul.f32 %v2232, 1.442695
        %v2275 = vpow.pop %v2274
        %v2276 = vmul.f32 %v2233, 1.442695
        %v2277 = vpow.pop %v2276
        %v2278 = vmul.f32 %v2234, 1.442695
        %v2279 = vpow.pop %v2278
        %v2280 = vmul.f32 %v2235, 1.442695
        %v2281 = vpow.pop %v2280
        %v2282 = vmul.f32 %v2236, 1.442695
        %v2283 = vpow.pop %v2282
        %v2284 = vmul.f32 %v2237, 1.442695
        %v2285 = vpow.pop %v2284
        %v2286 = vmul.f32 %v2238, 1.442695
        %v2287 = vpow.pop %v2286
        %v2288 = vmul.f32 %v2239, 1.442695
        %v2289 = vpow.pop %v2288
        %v2290 = vmul.f32 %v2240, 1.442695
        %v2291 = vpow.pop %v2290
        %v2292 = vmul.f32 %v2241, 1.442695
        %v2293 = vpow.pop %v2292
        %v2294 = vmul.f32 %v2242, 1.442695
        %v2295 = vpow.pop %v2294
        %v2296 = vmul.f32 %v2243, 1.442695
        %v2297 = vpow.pop %v2296
        %v2298 = vmul.f32 %v2244, 1.442695
        %v2299 = vpow.pop %v2298
        %v2300 = vmul.f32 %v2245, 1.442695
        %v2301 = vpow.pop %v2300
        %v2302 = vmul.f32 %v2246, 1.442695
        %v2303 = vpow.pop %v2302
        %v2304 = vmul.f32 %v2247, 1.442695
        %v2305 = vpow.pop %v2304
        %v2306 = vmul.f32 %v2248, 1.442695
        %v2307 = vpow.pop %v2306
        %v2308 = vmul.f32 %v2249, 1.442695
        %v2309 = vpow.pop %v2308
        %v2310 = vmul.f32 %v2250, 1.442695
        %v2311 = vpow.pop %v2310
        %v2312 = vmul.f32 %v2251, 1.442695
        %v2313 = vpow.pop %v2312
        %v2314 = vmul.f32 %v2252, 1.442695
        %v2315 = vpow.pop %v2314
        %v2316 = vmul.f32 %v2253, 1.442695
        %v2317 = vpow.pop %v2316
        %v2318 = vadd.f32 %v2255, %v2257
        %2319 = vadd.xlane.f32.xlu0 %v2318
        %v2320 = vpop.xlane.xlu0 %2319
        %v2321 = vadd.f32 %v2259, %v2261
        %2322 = vadd.xlane.f32.xlu0 %v2321
        %v2323 = vpop.xlane.xlu0 %2322
        %v2324 = vadd.f32 %v2263, %v2265
        %2325 = vadd.xlane.f32.xlu0 %v2324
        %v2326 = vpop.xlane.xlu0 %2325
        %v2327 = vadd.f32 %v2267, %v2269
        %2328 = vadd.xlane.f32.xlu0 %v2327
        %v2329 = vpop.xlane.xlu0 %2328
        %v2330 = vadd.f32 %v2271, %v2273
        %2331 = vadd.xlane.f32.xlu0 %v2330
        %v2332 = vpop.xlane.xlu0 %2331
        %v2333 = vadd.f32 %v2275, %v2277
        %2334 = vadd.xlane.f32.xlu0 %v2333
        %v2335 = vpop.xlane.xlu0 %2334
        %v2336 = vadd.f32 %v2279, %v2281
        %2337 = vadd.xlane.f32.xlu0 %v2336
        %v2338 = vpop.xlane.xlu0 %2337
        %v2339 = vadd.f32 %v2283, %v2285
        %2340 = vadd.xlane.f32.xlu0 %v2339
        %v2341 = vpop.xlane.xlu0 %2340
        %v2342 = vadd.f32 %v2287, %v2289
        %2343 = vadd.xlane.f32.xlu0 %v2342
        %v2344 = vpop.xlane.xlu0 %2343
        %v2345 = vadd.f32 %v2291, %v2293
        %2346 = vadd.xlane.f32.xlu0 %v2345
        %v2347 = vpop.xlane.xlu0 %2346
        %v2348 = vadd.f32 %v2295, %v2297
        %2349 = vadd.xlane.f32.xlu0 %v2348
        %v2350 = vpop.xlane.xlu0 %2349
        %v2351 = vadd.f32 %v2299, %v2301
        %2352 = vadd.xlane.f32.xlu0 %v2351
        %v2353 = vpop.xlane.xlu0 %2352
        %v2354 = vadd.f32 %v2303, %v2305
        %2355 = vadd.xlane.f32.xlu0 %v2354
        %v2356 = vpop.xlane.xlu0 %2355
        %v2357 = vadd.f32 %v2307, %v2309
        %2358 = vadd.xlane.f32.xlu0 %v2357
        %v2359 = vpop.xlane.xlu0 %2358
        %v2360 = vadd.f32 %v2311, %v2313
        %2361 = vadd.xlane.f32.xlu0 %v2360
        %v2362 = vpop.xlane.xlu0 %2361
        %v2363 = vadd.f32 %v2315, %v2317
        %2364 = vadd.xlane.f32.xlu0 %v2363
        %v2365 = vpop.xlane.xlu0 %2364
        %v2366 = vrcp.pop %v2320
        %v2367 = vrcp.pop %v2323
        %v2368 = vrcp.pop %v2326
        %v2369 = vrcp.pop %v2329
        %v2370 = vrcp.pop %v2332
        %v2371 = vrcp.pop %v2335
        %v2372 = vrcp.pop %v2338
        %v2373 = vrcp.pop %v2341
        %v2374 = vrcp.pop %v2344
        %v2375 = vrcp.pop %v2347
        %v2376 = vrcp.pop %v2350
        %v2377 = vrcp.pop %v2353
        %v2378 = vrcp.pop %v2356
        %v2379 = vrcp.pop %v2359
        %v2380 = vrcp.pop %v2362
        %v2381 = vrcp.pop %v2365
        %v2382 = vpack.c.bf16 %v2259, %v2255
        %v2383 = vpack.c.bf16 %v2261, %v2257
        %v2384 = vpack.c.bf16 %v2267, %v2263
        %v2385 = vpack.c.bf16 %v2269, %v2265
        %v2386 = vpack.c.bf16 %v2275, %v2271
        %v2387 = vpack.c.bf16 %v2277, %v2273
        %v2388 = vpack.c.bf16 %v2283, %v2279
        %v2389 = vpack.c.bf16 %v2285, %v2281
        %v2390 = vpack.c.bf16 %v2291, %v2287
        %v2391 = vpack.c.bf16 %v2293, %v2289
        %v2392 = vpack.c.bf16 %v2299, %v2295
        %v2393 = vpack.c.bf16 %v2301, %v2297
        %v2394 = vpack.c.bf16 %v2307, %v2303
        %v2395 = vpack.c.bf16 %v2309, %v2305
        %v2396 = vpack.c.bf16 %v2315, %v2311
        %v2397 = vpack.c.bf16 %v2317, %v2313
        %v2398 = vld [vmem:[#allocation3] sm:$0xff]
        %v2399 = vld [vmem:[#allocation3 + $0x8] sm:$0xff]
        %v2400 = vld [vmem:[#allocation3 + $0x10] sm:$0xff]
        %v2401 = vld [vmem:[#allocation3 + $0x18] sm:$0xff]
        %v2402 = vld [vmem:[#allocation3 + $0x20] sm:$0xff]
        %v2403 = vld [vmem:[#allocation3 + $0x28] sm:$0xff]
        %v2404 = vld [vmem:[#allocation3 + $0x30] sm:$0xff]
        %v2405 = vld [vmem:[#allocation3 + $0x38] sm:$0xff]
        %v2406 = vld [vmem:[#allocation3 + $0x40] sm:$0xff]
        %v2407 = vld [vmem:[#allocation3 + $0x48] sm:$0xff]
        %v2408 = vld [vmem:[#allocation3 + $0x50] sm:$0xff]
        %v2409 = vld [vmem:[#allocation3 + $0x58] sm:$0xff]
        %v2410 = vld [vmem:[#allocation3 + $0x60] sm:$0xff]
        %v2411 = vld [vmem:[#allocation3 + $0x68] sm:$0xff]
        %v2412 = vld [vmem:[#allocation3 + $0x70] sm:$0xff]
        %v2413 = vld [vmem:[#allocation3 + $0x78] sm:$0xff]
        %2430 = vrot.lane.b32.xlu0 %v2398, 96
        %v2431 = vpop.permute.xlu0 %2430
        %2432 = vrot.lane.b32.xlu0 %v2399, 96
        %v2433 = vpop.permute.xlu0 %2432
        %2434 = vrot.lane.b32.xlu0 %v2400, 96
        %v2435 = vpop.permute.xlu0 %2434
        %2436 = vrot.lane.b32.xlu0 %v2401, 96
        %v2437 = vpop.permute.xlu0 %2436
        %2438 = vrot.lane.b32.xlu0 %v2402, 96
        %v2439 = vpop.permute.xlu0 %2438
        %2440 = vrot.lane.b32.xlu0 %v2403, 96
        %v2441 = vpop.permute.xlu0 %2440
        %2442 = vrot.lane.b32.xlu0 %v2404, 96
        %v2443 = vpop.permute.xlu0 %2442
        %2444 = vrot.lane.b32.xlu0 %v2405, 96
        %v2445 = vpop.permute.xlu0 %2444
        %2446 = vrot.lane.b32.xlu0 %v2406, 96
        %v2447 = vpop.permute.xlu0 %2446
        %2448 = vrot.lane.b32.xlu0 %v2407, 96
        %v2449 = vpop.permute.xlu0 %2448
        %2450 = vrot.lane.b32.xlu0 %v2408, 96
        %v2451 = vpop.permute.xlu0 %2450
        %2452 = vrot.lane.b32.xlu0 %v2409, 96
        %v2453 = vpop.permute.xlu0 %2452
        %2454 = vrot.lane.b32.xlu0 %v2410, 96
        %v2455 = vpop.permute.xlu0 %2454
        %2456 = vrot.lane.b32.xlu0 %v2411, 96
        %v2457 = vpop.permute.xlu0 %2456
        %2458 = vrot.lane.b32.xlu0 %v2412, 96
        %v2459 = vpop.permute.xlu0 %2458
        %2460 = vrot.lane.b32.xlu0 %v2413, 96
        %v2461 = vpop.permute.xlu0 %2460
        %2478 = vmatprep.subr.bf16.mxu0 0
        %2479 = vmatpush1.bf16.msra.mxu0 %v2431
        %2480 = vmatprep.subr.bf16.mxu0 0
        %2481 = vmatpush1.bf16.msra.mxu0 %v2433
        %2482 = vmatprep.subr.bf16.mxu0 0
        %2483 = vmatpush1.bf16.msra.mxu0 %v2435
        %2484 = vmatprep.subr.bf16.mxu0 0
        %2485 = vmatpush1.bf16.msra.mxu0 %v2437
        %2486 = vmatprep.subr.bf16.mxu0 0
        %2487 = vmatpush1.bf16.msra.mxu0 %v2439
        %2488 = vmatprep.subr.bf16.mxu0 0
        %2489 = vmatpush1.bf16.msra.mxu0 %v2441
        %2490 = vmatprep.subr.bf16.mxu0 0
        %2491 = vmatpush1.bf16.msra.mxu0 %v2443
        %2492 = vmatprep.subr.bf16.mxu0 0
        %2493 = vmatpush1.bf16.msra.mxu0 %v2445
        %2494 = vmatprep.subr.bf16.mxu0 0
        %2495 = vmatpush1.bf16.msra.mxu0 %v2447
        %2496 = vmatprep.subr.bf16.mxu0 0
        %2497 = vmatpush1.bf16.msra.mxu0 %v2449
        %2498 = vmatprep.subr.bf16.mxu0 0
        %2499 = vmatpush1.bf16.msra.mxu0 %v2451
        %2500 = vmatprep.subr.bf16.mxu0 0
        %2501 = vmatpush1.bf16.msra.mxu0 %v2453
        %2502 = vmatprep.subr.bf16.mxu0 0
        %2503 = vmatpush1.bf16.msra.mxu0 %v2455
        %2504 = vmatprep.subr.bf16.mxu0 0
        %2505 = vmatpush1.bf16.msra.mxu0 %v2457
        %2506 = vmatprep.subr.bf16.mxu0 0
        %2507 = vmatpush1.bf16.msra.mxu0 %v2459
        %2508 = vmatprep.subr.bf16.mxu0 0
        %2509 = vmatpush1.bf16.msra.mxu0 %v2461
        %2510 = vmatprep.mubr.bf16.mxu0 %v2383
        %2511 = vmatmul.mubr.bf16.gmra.mrb[0].mxu0 %v2382
        %v2512 = vpop.f32.mrb[0].mxu0
        %v2513 = vadd.f32 0.0, %v2512
        %v2514 = vpop.f32.mrb[0].mxu0
        %v2515 = vpop.f32.mrb[0].mxu0
        %v2516 = vadd.f32 0.0, %v2515
        %v2517 = vpop.f32.mrb[0].mxu0
        %2518 = vmatprep.mubr.bf16.mxu0 %v2385
        %2519 = vmatmul.mubr.bf16.gmra.mrb[0].mxu0 %v2384
        %v2520 = vpop.f32.mrb[0].mxu0
        %v2521 = vadd.f32 0.0, %v2520
        %v2522 = vpop.f32.mrb[0].mxu0
        %v2523 = vpop.f32.mrb[0].mxu0
        %v2524 = vadd.f32 0.0, %v2523
        %v2525 = vpop.f32.mrb[0].mxu0
        %2526 = vmatprep.mubr.bf16.mxu0 %v2387
        %2527 = vmatmul.mubr.bf16.gmra.mrb[0].mxu0 %v2386
        %v2528 = vpop.f32.mrb[0].mxu0
        %v2529 = vadd.f32 0.0, %v2528
        %v2530 = vpop.f32.mrb[0].mxu0
        %v2531 = vpop.f32.mrb[0].mxu0
        %v2532 = vadd.f32 0.0, %v2531
        %v2533 = vpop.f32.mrb[0].mxu0
        %2534 = vmatprep.mubr.bf16.mxu0 %v2389
        %2535 = vmatmul.mubr.bf16.gmra.mrb[0].mxu0 %v2388
        %v2536 = vpop.f32.mrb[0].mxu0
        %v2537 = vadd.f32 0.0, %v2536
        %v2538 = vpop.f32.mrb[0].mxu0
        %v2539 = vpop.f32.mrb[0].mxu0
        %v2540 = vadd.f32 0.0, %v2539
        %v2541 = vpop.f32.mrb[0].mxu0
        %2542 = vmatprep.mubr.bf16.mxu0 %v2391
        %2543 = vmatmul.mubr.bf16.gmra.mrb[0].mxu0 %v2390
        %v2544 = vpop.f32.mrb[0].mxu0
        %v2545 = vadd.f32 0.0, %v2544
        %v2546 = vpop.f32.mrb[0].mxu0
        %v2547 = vpop.f32.mrb[0].mxu0
        %v2548 = vadd.f32 0.0, %v2547
        %v2549 = vpop.f32.mrb[0].mxu0
        %2550 = vmatprep.mubr.bf16.mxu0 %v2393
        %2551 = vmatmul.mubr.bf16.gmra.mrb[0].mxu0 %v2392
        %v2552 = vpop.f32.mrb[0].mxu0
        %v2553 = vadd.f32 0.0, %v2552
        %v2554 = vpop.f32.mrb[0].mxu0
        %v2555 = vpop.f32.mrb[0].mxu0
        %v2556 = vadd.f32 0.0, %v2555
        %v2557 = vpop.f32.mrb[0].mxu0
        %2558 = vmatprep.mubr.bf16.mxu0 %v2395
        %2559 = vmatmul.mubr.bf16.gmra.mrb[0].mxu0 %v2394
        %v2560 = vpop.f32.mrb[0].mxu0
        %v2561 = vadd.f32 0.0, %v2560
        %v2562 = vpop.f32.mrb[0].mxu0
        %v2563 = vpop.f32.mrb[0].mxu0
        %v2564 = vadd.f32 0.0, %v2563
        %v2565 = vpop.f32.mrb[0].mxu0
        %2566 = vmatprep.mubr.bf16.mxu0 %v2397
        %2567 = vmatmul.mubr.bf16.gmra.mrb[0].mxu0 %v2396
        %v2568 = vpop.f32.mrb[0].mxu0
        %v2569 = vadd.f32 0.0, %v2568
        %v2570 = vpop.f32.mrb[0].mxu0
        %v2571 = vpop.f32.mrb[0].mxu0
        %v2572 = vadd.f32 0.0, %v2571
        %v2573 = vpop.f32.mrb[0].mxu0
        %2574 = vdwg.mxu0
        %v2575 = vmul.f32 %v2513, %v2366
        %v2576 = vmul.f32 %v2516, %v2367
        %v2577 = vmul.f32 %v2521, %v2368
        %v2578 = vmul.f32 %v2524, %v2369
        %v2579 = vmul.f32 %v2529, %v2370
        %v2580 = vmul.f32 %v2532, %v2371
        %v2581 = vmul.f32 %v2537, %v2372
        %v2582 = vmul.f32 %v2540, %v2373
        %v2583 = vmul.f32 %v2545, %v2374
        %v2584 = vmul.f32 %v2548, %v2375
        %v2585 = vmul.f32 %v2553, %v2376
        %v2586 = vmul.f32 %v2556, %v2377
        %v2587 = vmul.f32 %v2561, %v2378
        %v2588 = vmul.f32 %v2564, %v2379
        %v2589 = vmul.f32 %v2569, %v2380
        %v2590 = vmul.f32 %v2572, %v2381
        %v2591 = vpack.c.bf16 %v2576, %v2575
        %v2592 = vpack.c.bf16 %v2578, %v2577
        %v2593 = vpack.c.bf16 %v2580, %v2579
        %v2594 = vpack.c.bf16 %v2582, %v2581
        %v2595 = vpack.c.bf16 %v2584, %v2583
        %v2596 = vpack.c.bf16 %v2586, %v2585
        %v2597 = vpack.c.bf16 %v2588, %v2587
        %v2598 = vpack.c.bf16 %v2590, %v2589
        %2607 = vrot.lane.b32.xlu0 %v2591, 32
        %v2608 = vpop.permute.xlu0 %2607
        %2609 = vrot.lane.b32.xlu0 %v2592, 32
        %v2610 = vpop.permute.xlu0 %2609
        %2611 = vrot.lane.b32.xlu0 %v2593, 32
        %v2612 = vpop.permute.xlu0 %2611
        %2613 = vrot.lane.b32.xlu0 %v2594, 32
        %v2614 = vpop.permute.xlu0 %2613
        %2615 = vrot.lane.b32.xlu0 %v2595, 32
        %v2616 = vpop.permute.xlu0 %2615
        %2617 = vrot.lane.b32.xlu0 %v2596, 32
        %v2618 = vpop.permute.xlu0 %2617
        %2619 = vrot.lane.b32.xlu0 %v2597, 32
        %v2620 = vpop.permute.xlu0 %2619
        %2621 = vrot.lane.b32.xlu0 %v2598, 32
        %v2622 = vpop.permute.xlu0 %2621
        %vm2631 = vcmask 523520
        %2632 = vst.msk [vmem:[#allocation4] sm:$0xff] %vm2631, %v2608
        %2633 = vst.msk [vmem:[#allocation4 + $0x8] sm:$0xff] %vm2631, %v2610
        %2634 = vst.msk [vmem:[#allocation4 + $0x10] sm:$0xff] %vm2631, %v2612
        %2635 = vst.msk [vmem:[#allocation4 + $0x18] sm:$0xff] %vm2631, %v2614
        %2636 = vst.msk [vmem:[#allocation4 + $0x20] sm:$0xff] %vm2631, %v2616
        %2637 = vst.msk [vmem:[#allocation4 + $0x28] sm:$0xff] %vm2631, %v2618
        %2638 = vst.msk [vmem:[#allocation4 + $0x30] sm:$0xff] %vm2631, %v2620
        %2639 = vst.msk [vmem:[#allocation4 + $0x38] sm:$0xff] %vm2631, %v2622
        %v2640 = vld [vmem:[#allocation2 + $0x40] sm:$0xff]
        %v2641 = vld [vmem:[#allocation2 + $0x48] sm:$0xff]
        %v2642 = vld [vmem:[#allocation2 + $0x50] sm:$0xff]
        %v2643 = vld [vmem:[#allocation2 + $0x58] sm:$0xff]
        %2644 = vrot.lane.b32.xlu0 %v1421, 64
        %v2645 = vpop.permute.xlu0 %2644
        %2646 = vrot.lane.b32.xlu0 %v1422, 64
        %v2647 = vpop.permute.xlu0 %2646
        %2648 = vrot.lane.b32.xlu0 %v1423, 64
        %v2649 = vpop.permute.xlu0 %2648
        %2650 = vrot.lane.b32.xlu0 %v1424, 64
        %v2651 = vpop.permute.xlu0 %2650
        %2652 = vrot.lane.b32.xlu0 %v1425, 64
        %v2653 = vpop.permute.xlu0 %2652
        %2654 = vrot.lane.b32.xlu0 %v1426, 64
        %v2655 = vpop.permute.xlu0 %2654
        %2656 = vrot.lane.b32.xlu0 %v1427, 64
        %v2657 = vpop.permute.xlu0 %2656
        %2658 = vrot.lane.b32.xlu0 %v1428, 64
        %v2659 = vpop.permute.xlu0 %2658
        %v2661 = vsel %vm1433, %v2645, 0
        %v2664 = vsel %vm1433, %v2647, 0
        %v2667 = vsel %vm1433, %v2649, 0
        %v2670 = vsel %vm1433, %v2651, 0
        %v2673 = vsel %vm1433, %v2653, 0
        %v2676 = vsel %vm1433, %v2655, 0
        %v2679 = vsel %vm1433, %v2657, 0
        %v2682 = vsel %vm1433, %v2659, 0
        %2684 = vmatprep.subr.bf16.mxu0 %v2641
        %2685 = vmatpush1.bf16.msra.mxu0 %v2640
        %2686 = vmatprep.subr.bf16.mxu0 %v2643
        %2687 = vmatpush1.bf16.msra.mxu0 %v2642
        %2688 = vmatprep.subr.bf16.mxu0 0
        %2689 = vmatpush1.bf16.msra.mxu0 0
        %2690 = vmatprep.subr.bf16.mxu0 0
        %2691 = vmatpush1.bf16.msra.mxu0 0
        %2692 = vmatprep.subr.bf16.mxu0 0
        %2693 = vmatpush1.bf16.msra.mxu0 0
        %2694 = vmatprep.subr.bf16.mxu0 0
        %2695 = vmatpush1.bf16.msra.mxu0 0
        %2696 = vmatprep.subr.bf16.mxu0 0
        %2697 = vmatpush1.bf16.msra.mxu0 0
        %2698 = vmatprep.subr.bf16.mxu0 0
        %2699 = vmatpush1.bf16.msra.mxu0 0
        %2700 = vmatprep.subr.bf16.mxu0 0
        %2701 = vmatpush1.bf16.msra.mxu0 0
        %2702 = vmatprep.subr.bf16.mxu0 0
        %2703 = vmatpush1.bf16.msra.mxu0 0
        %2704 = vmatprep.subr.bf16.mxu0 0
        %2705 = vmatpush1.bf16.msra.mxu0 0
        %2706 = vmatprep.subr.bf16.mxu0 0
        %2707 = vmatpush1.bf16.msra.mxu0 0
        %2708 = vmatprep.subr.bf16.mxu0 0
        %2709 = vmatpush1.bf16.msra.mxu0 0
        %2710 = vmatprep.subr.bf16.mxu0 0
        %2711 = vmatpush1.bf16.msra.mxu0 0
        %2712 = vmatprep.subr.bf16.mxu0 0
        %2713 = vmatpush1.bf16.msra.mxu0 0
        %2714 = vmatprep.subr.bf16.mxu0 0
        %2715 = vmatpush1.bf16.msra.mxu0 0
        %2716 = vmatprep.mubr.bf16.mxu0 0
        %2717 = vmatmul.mubr.bf16.gmra.mrb[0].mxu0 %v2661
        %v2718 = vpop.f32.mrb[0].mxu0
        %v2719 = vadd.f32 0.0, %v2718
        %v2720 = vpop.f32.mrb[0].mxu0
        %v2721 = vadd.f32 0.0, %v2720
        %v2722 = vpop.f32.mrb[0].mxu0
        %v2723 = vadd.f32 0.0, %v2722
        %v2724 = vpop.f32.mrb[0].mxu0
        %v2725 = vadd.f32 0.0, %v2724
        %2726 = vmatprep.mubr.bf16.mxu0 0
        %2727 = vmatmul.mubr.bf16.gmra.mrb[0].mxu0 %v2664
        %v2728 = vpop.f32.mrb[0].mxu0
        %v2729 = vadd.f32 0.0, %v2728
        %v2730 = vpop.f32.mrb[0].mxu0
        %v2731 = vadd.f32 0.0, %v2730
        %v2732 = vpop.f32.mrb[0].mxu0
        %v2733 = vadd.f32 0.0, %v2732
        %v2734 = vpop.f32.mrb[0].mxu0
        %v2735 = vadd.f32 0.0, %v2734
        %2736 = vmatprep.mubr.bf16.mxu0 0
        %2737 = vmatmul.mubr.bf16.gmra.mrb[0].mxu0 %v2667
        %v2738 = vpop.f32.mrb[0].mxu0
        %v2739 = vadd.f32 0.0, %v2738
        %v2740 = vpop.f32.mrb[0].mxu0
        %v2741 = vadd.f32 0.0, %v2740
        %v2742 = vpop.f32.mrb[0].mxu0
        %v2743 = vadd.f32 0.0, %v2742
        %v2744 = vpop.f32.mrb[0].mxu0
        %v2745 = vadd.f32 0.0, %v2744
        %2746 = vmatprep.mubr.bf16.mxu0 0
        %2747 = vmatmul.mubr.bf16.gmra.mrb[0].mxu0 %v2670
        %v2748 = vpop.f32.mrb[0].mxu0
        %v2749 = vadd.f32 0.0, %v2748
        %v2750 = vpop.f32.mrb[0].mxu0
        %v2751 = vadd.f32 0.0, %v2750
        %v2752 = vpop.f32.mrb[0].mxu0
        %v2753 = vadd.f32 0.0, %v2752
        %v2754 = vpop.f32.mrb[0].mxu0
        %v2755 = vadd.f32 0.0, %v2754
        %2756 = vmatprep.mubr.bf16.mxu0 0
        %2757 = vmatmul.mubr.bf16.gmra.mrb[0].mxu0 %v2673
        %v2758 = vpop.f32.mrb[0].mxu0
        %v2759 = vadd.f32 0.0, %v2758
        %v2760 = vpop.f32.mrb[0].mxu0
        %v2761 = vadd.f32 0.0, %v2760
        %v2762 = vpop.f32.mrb[0].mxu0
        %v2763 = vadd.f32 0.0, %v2762
        %v2764 = vpop.f32.mrb[0].mxu0
        %v2765 = vadd.f32 0.0, %v2764
        %2766 = vmatprep.mubr.bf16.mxu0 0
        %2767 = vmatmul.mubr.bf16.gmra.mrb[0].mxu0 %v2676
        %v2768 = vpop.f32.mrb[0].mxu0
        %v2769 = vadd.f32 0.0, %v2768
        %v2770 = vpop.f32.mrb[0].mxu0
        %v2771 = vadd.f32 0.0, %v2770
        %v2772 = vpop.f32.mrb[0].mxu0
        %v2773 = vadd.f32 0.0, %v2772
        %v2774 = vpop.f32.mrb[0].mxu0
        %v2775 = vadd.f32 0.0, %v2774
        %2776 = vmatprep.mubr.bf16.mxu0 0
        %2777 = vmatmul.mubr.bf16.gmra.mrb[0].mxu0 %v2679
        %v2778 = vpop.f32.mrb[0].mxu0
        %v2779 = vadd.f32 0.0, %v2778
        %v2780 = vpop.f32.mrb[0].mxu0
        %v2781 = vadd.f32 0.0, %v2780
        %v2782 = vpop.f32.mrb[0].mxu0
        %v2783 = vadd.f32 0.0, %v2782
        %v2784 = vpop.f32.mrb[0].mxu0
        %v2785 = vadd.f32 0.0, %v2784
        %2786 = vmatprep.mubr.bf16.mxu0 0
        %2787 = vmatmul.mubr.bf16.gmra.mrb[0].mxu0 %v2682
        %v2788 = vpop.f32.mrb[0].mxu0
        %v2789 = vadd.f32 0.0, %v2788
        %v2790 = vpop.f32.mrb[0].mxu0
        %v2791 = vadd.f32 0.0, %v2790
        %v2792 = vpop.f32.mrb[0].mxu0
        %v2793 = vadd.f32 0.0, %v2792
        %v2794 = vpop.f32.mrb[0].mxu0
        %v2795 = vadd.f32 0.0, %v2794
        %2796 = vdwg.mxu0
        %v2797 = vsel %vm1574, %v2719, -1e+30
        %v2798 = vsel %vm1575, %v2721, -1e+30
        %v2799 = vsel %vm1574, %v2723, -1e+30
        %v2800 = vsel %vm1575, %v2725, -1e+30
        %v2801 = vsel %vm1574, %v2729, -1e+30
        %v2802 = vsel %vm1575, %v2731, -1e+30
        %v2803 = vsel %vm1574, %v2733, -1e+30
        %v2804 = vsel %vm1575, %v2735, -1e+30
        %v2805 = vsel %vm1574, %v2739, -1e+30
        %v2806 = vsel %vm1575, %v2741, -1e+30
        %v2807 = vsel %vm1574, %v2743, -1e+30
        %v2808 = vsel %vm1575, %v2745, -1e+30
        %v2809 = vsel %vm1574, %v2749, -1e+30
        %v2810 = vsel %vm1575, %v2751, -1e+30
        %v2811 = vsel %vm1574, %v2753, -1e+30
        %v2812 = vsel %vm1575, %v2755, -1e+30
        %v2813 = vsel %vm1574, %v2759, -1e+30
        %v2814 = vsel %vm1575, %v2761, -1e+30
        %v2815 = vsel %vm1574, %v2763, -1e+30
        %v2816 = vsel %vm1575, %v2765, -1e+30
        %v2817 = vsel %vm1574, %v2769, -1e+30
        %v2818 = vsel %vm1575, %v2771, -1e+30
        %v2819 = vsel %vm1574, %v2773, -1e+30
        %v2820 = vsel %vm1575, %v2775, -1e+30
        %v2821 = vsel %vm1574, %v2779, -1e+30
        %v2822 = vsel %vm1575, %v2781, -1e+30
        %v2823 = vsel %vm1574, %v2783, -1e+30
        %v2824 = vsel %vm1575, %v2785, -1e+30
        %v2825 = vsel %vm1574, %v2789, -1e+30
        %v2826 = vsel %vm1575, %v2791, -1e+30
        %v2827 = vsel %vm1574, %v2793, -1e+30
        %v2828 = vsel %vm1575, %v2795, -1e+30
        %v2829 = vmax.f32 %v2797, %v2798
        %2830 = vmax.xlane.f32.xlu0 %v2829
        %v2831 = vpop.xlane.xlu0 %2830
        %v2832 = vmax.f32 %v2799, %v2800
        %2833 = vmax.xlane.f32.xlu0 %v2832
        %v2834 = vpop.xlane.xlu0 %2833
        %v2835 = vmax.f32 %v2801, %v2802
        %2836 = vmax.xlane.f32.xlu0 %v2835
        %v2837 = vpop.xlane.xlu0 %2836
        %v2838 = vmax.f32 %v2803, %v2804
        %2839 = vmax.xlane.f32.xlu0 %v2838
        %v2840 = vpop.xlane.xlu0 %2839
        %v2841 = vmax.f32 %v2805, %v2806
        %2842 = vmax.xlane.f32.xlu0 %v2841
        %v2843 = vpop.xlane.xlu0 %2842
        %v2844 = vmax.f32 %v2807, %v2808
        %2845 = vmax.xlane.f32.xlu0 %v2844
        %v2846 = vpop.xlane.xlu0 %2845
        %v2847 = vmax.f32 %v2809, %v2810
        %2848 = vmax.xlane.f32.xlu0 %v2847
        %v2849 = vpop.xlane.xlu0 %2848
        %v2850 = vmax.f32 %v2811, %v2812
        %2851 = vmax.xlane.f32.xlu0 %v2850
        %v2852 = vpop.xlane.xlu0 %2851
        %v2853 = vmax.f32 %v2813, %v2814
        %2854 = vmax.xlane.f32.xlu0 %v2853
        %v2855 = vpop.xlane.xlu0 %2854
        %v2856 = vmax.f32 %v2815, %v2816
        %2857 = vmax.xlane.f32.xlu0 %v2856
        %v2858 = vpop.xlane.xlu0 %2857
        %v2859 = vmax.f32 %v2817, %v2818
        %2860 = vmax.xlane.f32.xlu0 %v2859
        %v2861 = vpop.xlane.xlu0 %2860
        %v2862 = vmax.f32 %v2819, %v2820
        %2863 = vmax.xlane.f32.xlu0 %v2862
        %v2864 = vpop.xlane.xlu0 %2863
        %v2865 = vmax.f32 %v2821, %v2822
        %2866 = vmax.xlane.f32.xlu0 %v2865
        %v2867 = vpop.xlane.xlu0 %2866
        %v2868 = vmax.f32 %v2823, %v2824
        %2869 = vmax.xlane.f32.xlu0 %v2868
        %v2870 = vpop.xlane.xlu0 %2869
        %v2871 = vmax.f32 %v2825, %v2826
        %2872 = vmax.xlane.f32.xlu0 %v2871
        %v2873 = vpop.xlane.xlu0 %2872
        %v2874 = vmax.f32 %v2827, %v2828
        %2875 = vmax.xlane.f32.xlu0 %v2874
        %v2876 = vpop.xlane.xlu0 %2875
        %v2877 = vsub.f32 %v2797, %v2831
        %v2878 = vsub.f32 %v2798, %v2831
        %v2879 = vsub.f32 %v2799, %v2834
        %v2880 = vsub.f32 %v2800, %v2834
        %v2881 = vsub.f32 %v2801, %v2837
        %v2882 = vsub.f32 %v2802, %v2837
        %v2883 = vsub.f32 %v2803, %v2840
        %v2884 = vsub.f32 %v2804, %v2840
        %v2885 = vsub.f32 %v2805, %v2843
        %v2886 = vsub.f32 %v2806, %v2843
        %v2887 = vsub.f32 %v2807, %v2846
        %v2888 = vsub.f32 %v2808, %v2846
        %v2889 = vsub.f32 %v2809, %v2849
        %v2890 = vsub.f32 %v2810, %v2849
        %v2891 = vsub.f32 %v2811, %v2852
        %v2892 = vsub.f32 %v2812, %v2852
        %v2893 = vsub.f32 %v2813, %v2855
        %v2894 = vsub.f32 %v2814, %v2855
        %v2895 = vsub.f32 %v2815, %v2858
        %v2896 = vsub.f32 %v2816, %v2858
        %v2897 = vsub.f32 %v2817, %v2861
        %v2898 = vsub.f32 %v2818, %v2861
        %v2899 = vsub.f32 %v2819, %v2864
        %v2900 = vsub.f32 %v2820, %v2864
        %v2901 = vsub.f32 %v2821, %v2867
        %v2902 = vsub.f32 %v2822, %v2867
        %v2903 = vsub.f32 %v2823, %v2870
        %v2904 = vsub.f32 %v2824, %v2870
        %v2905 = vsub.f32 %v2825, %v2873
        %v2906 = vsub.f32 %v2826, %v2873
        %v2907 = vsub.f32 %v2827, %v2876
        %v2908 = vsub.f32 %v2828, %v2876
        %v2909 = vmul.f32 %v2877, 1.442695
        %v2910 = vpow.pop %v2909
        %v2911 = vmul.f32 %v2878, 1.442695
        %v2912 = vpow.pop %v2911
        %v2913 = vmul.f32 %v2879, 1.442695
        %v2914 = vpow.pop %v2913
        %v2915 = vmul.f32 %v2880, 1.442695
        %v2916 = vpow.pop %v2915
        %v2917 = vmul.f32 %v2881, 1.442695
        %v2918 = vpow.pop %v2917
        %v2919 = vmul.f32 %v2882, 1.442695
        %v2920 = vpow.pop %v2919
        %v2921 = vmul.f32 %v2883, 1.442695
        %v2922 = vpow.pop %v2921
        %v2923 = vmul.f32 %v2884, 1.442695
        %v2924 = vpow.pop %v2923
        %v2925 = vmul.f32 %v2885, 1.442695
        %v2926 = vpow.pop %v2925
        %v2927 = vmul.f32 %v2886, 1.442695
        %v2928 = vpow.pop %v2927
        %v2929 = vmul.f32 %v2887, 1.442695
        %v2930 = vpow.pop %v2929
        %v2931 = vmul.f32 %v2888, 1.442695
        %v2932 = vpow.pop %v2931
        %v2933 = vmul.f32 %v2889, 1.442695
        %v2934 = vpow.pop %v2933
        %v2935 = vmul.f32 %v2890, 1.442695
        %v2936 = vpow.pop %v2935
        %v2937 = vmul.f32 %v2891, 1.442695
        %v2938 = vpow.pop %v2937
        %v2939 = vmul.f32 %v2892, 1.442695
        %v2940 = vpow.pop %v2939
        %v2941 = vmul.f32 %v2893, 1.442695
        %v2942 = vpow.pop %v2941
        %v2943 = vmul.f32 %v2894, 1.442695
        %v2944 = vpow.pop %v2943
        %v2945 = vmul.f32 %v2895, 1.442695
        %v2946 = vpow.pop %v2945
        %v2947 = vmul.f32 %v2896, 1.442695
        %v2948 = vpow.pop %v2947
        %v2949 = vmul.f32 %v2897, 1.442695
        %v2950 = vpow.pop %v2949
        %v2951 = vmul.f32 %v2898, 1.442695
        %v2952 = vpow.pop %v2951
        %v2953 = vmul.f32 %v2899, 1.442695
        %v2954 = vpow.pop %v2953
        %v2955 = vmul.f32 %v2900, 1.442695
        %v2956 = vpow.pop %v2955
        %v2957 = vmul.f32 %v2901, 1.442695
        %v2958 = vpow.pop %v2957
        %v2959 = vmul.f32 %v2902, 1.442695
        %v2960 = vpow.pop %v2959
        %v2961 = vmul.f32 %v2903, 1.442695
        %v2962 = vpow.pop %v2961
        %v2963 = vmul.f32 %v2904, 1.442695
        %v2964 = vpow.pop %v2963
        %v2965 = vmul.f32 %v2905, 1.442695
        %v2966 = vpow.pop %v2965
        %v2967 = vmul.f32 %v2906, 1.442695
        %v2968 = vpow.pop %v2967
        %v2969 = vmul.f32 %v2907, 1.442695
        %v2970 = vpow.pop %v2969
        %v2971 = vmul.f32 %v2908, 1.442695
        %v2972 = vpow.pop %v2971
        %v2973 = vadd.f32 %v2910, %v2912
        %2974 = vadd.xlane.f32.xlu0 %v2973
        %v2975 = vpop.xlane.xlu0 %2974
        %v2976 = vadd.f32 %v2914, %v2916
        %2977 = vadd.xlane.f32.xlu0 %v2976
        %v2978 = vpop.xlane.xlu0 %2977
        %v2979 = vadd.f32 %v2918, %v2920
        %2980 = vadd.xlane.f32.xlu0 %v2979
        %v2981 = vpop.xlane.xlu0 %2980
        %v2982 = vadd.f32 %v2922, %v2924
        %2983 = vadd.xlane.f32.xlu0 %v2982
        %v2984 = vpop.xlane.xlu0 %2983
        %v2985 = vadd.f32 %v2926, %v2928
        %2986 = vadd.xlane.f32.xlu0 %v2985
        %v2987 = vpop.xlane.xlu0 %2986
        %v2988 = vadd.f32 %v2930, %v2932
        %2989 = vadd.xlane.f32.xlu0 %v2988
        %v2990 = vpop.xlane.xlu0 %2989
        %v2991 = vadd.f32 %v2934, %v2936
        %2992 = vadd.xlane.f32.xlu0 %v2991
        %v2993 = vpop.xlane.xlu0 %2992
        %v2994 = vadd.f32 %v2938, %v2940
        %2995 = vadd.xlane.f32.xlu0 %v2994
        %v2996 = vpop.xlane.xlu0 %2995
        %v2997 = vadd.f32 %v2942, %v2944
        %2998 = vadd.xlane.f32.xlu0 %v2997
        %v2999 = vpop.xlane.xlu0 %2998
        %v3000 = vadd.f32 %v2946, %v2948
        %3001 = vadd.xlane.f32.xlu0 %v3000
        %v3002 = vpop.xlane.xlu0 %3001
        %v3003 = vadd.f32 %v2950, %v2952
        %3004 = vadd.xlane.f32.xlu0 %v3003
        %v3005 = vpop.xlane.xlu0 %3004
        %v3006 = vadd.f32 %v2954, %v2956
        %3007 = vadd.xlane.f32.xlu0 %v3006
        %v3008 = vpop.xlane.xlu0 %3007
        %v3009 = vadd.f32 %v2958, %v2960
        %3010 = vadd.xlane.f32.xlu0 %v3009
        %v3011 = vpop.xlane.xlu0 %3010
        %v3012 = vadd.f32 %v2962, %v2964
        %3013 = vadd.xlane.f32.xlu0 %v3012
        %v3014 = vpop.xlane.xlu0 %3013
        %v3015 = vadd.f32 %v2966, %v2968
        %3016 = vadd.xlane.f32.xlu0 %v3015
        %v3017 = vpop.xlane.xlu0 %3016
        %v3018 = vadd.f32 %v2970, %v2972
        %3019 = vadd.xlane.f32.xlu0 %v3018
        %v3020 = vpop.xlane.xlu0 %3019
        %v3021 = vrcp.pop %v2975
        %v3022 = vrcp.pop %v2978
        %v3023 = vrcp.pop %v2981
        %v3024 = vrcp.pop %v2984
        %v3025 = vrcp.pop %v2987
        %v3026 = vrcp.pop %v2990
        %v3027 = vrcp.pop %v2993
        %v3028 = vrcp.pop %v2996
        %v3029 = vrcp.pop %v2999
        %v3030 = vrcp.pop %v3002
        %v3031 = vrcp.pop %v3005
        %v3032 = vrcp.pop %v3008
        %v3033 = vrcp.pop %v3011
        %v3034 = vrcp.pop %v3014
        %v3035 = vrcp.pop %v3017
        %v3036 = vrcp.pop %v3020
        %v3037 = vpack.c.bf16 %v2914, %v2910
        %v3038 = vpack.c.bf16 %v2916, %v2912
        %v3039 = vpack.c.bf16 %v2922, %v2918
        %v3040 = vpack.c.bf16 %v2924, %v2920
        %v3041 = vpack.c.bf16 %v2930, %v2926
        %v3042 = vpack.c.bf16 %v2932, %v2928
        %v3043 = vpack.c.bf16 %v2938, %v2934
        %v3044 = vpack.c.bf16 %v2940, %v2936
        %v3045 = vpack.c.bf16 %v2946, %v2942
        %v3046 = vpack.c.bf16 %v2948, %v2944
        %v3047 = vpack.c.bf16 %v2954, %v2950
        %v3048 = vpack.c.bf16 %v2956, %v2952
        %v3049 = vpack.c.bf16 %v2962, %v2958
        %v3050 = vpack.c.bf16 %v2964, %v2960
        %v3051 = vpack.c.bf16 %v2970, %v2966
        %v3052 = vpack.c.bf16 %v2972, %v2968
        %v3053 = vld [vmem:[#allocation3] sm:$0xff]
        %v3054 = vld [vmem:[#allocation3 + $0x8] sm:$0xff]
        %v3055 = vld [vmem:[#allocation3 + $0x10] sm:$0xff]
        %v3056 = vld [vmem:[#allocation3 + $0x18] sm:$0xff]
        %v3057 = vld [vmem:[#allocation3 + $0x20] sm:$0xff]
        %v3058 = vld [vmem:[#allocation3 + $0x28] sm:$0xff]
        %v3059 = vld [vmem:[#allocation3 + $0x30] sm:$0xff]
        %v3060 = vld [vmem:[#allocation3 + $0x38] sm:$0xff]
        %v3061 = vld [vmem:[#allocation3 + $0x40] sm:$0xff]
        %v3062 = vld [vmem:[#allocation3 + $0x48] sm:$0xff]
        %v3063 = vld [vmem:[#allocation3 + $0x50] sm:$0xff]
        %v3064 = vld [vmem:[#allocation3 + $0x58] sm:$0xff]
        %v3065 = vld [vmem:[#allocation3 + $0x60] sm:$0xff]
        %v3066 = vld [vmem:[#allocation3 + $0x68] sm:$0xff]
        %v3067 = vld [vmem:[#allocation3 + $0x70] sm:$0xff]
        %v3068 = vld [vmem:[#allocation3 + $0x78] sm:$0xff]
        %3085 = vrot.lane.b32.xlu0 %v3053, 64
        %v3086 = vpop.permute.xlu0 %3085
        %3087 = vrot.lane.b32.xlu0 %v3054, 64
        %v3088 = vpop.permute.xlu0 %3087
        %3089 = vrot.lane.b32.xlu0 %v3055, 64
        %v3090 = vpop.permute.xlu0 %3089
        %3091 = vrot.lane.b32.xlu0 %v3056, 64
        %v3092 = vpop.permute.xlu0 %3091
        %3093 = vrot.lane.b32.xlu0 %v3057, 64
        %v3094 = vpop.permute.xlu0 %3093
        %3095 = vrot.lane.b32.xlu0 %v3058, 64
        %v3096 = vpop.permute.xlu0 %3095
        %3097 = vrot.lane.b32.xlu0 %v3059, 64
        %v3098 = vpop.permute.xlu0 %3097
        %3099 = vrot.lane.b32.xlu0 %v3060, 64
        %v3100 = vpop.permute.xlu0 %3099
        %3101 = vrot.lane.b32.xlu0 %v3061, 64
        %v3102 = vpop.permute.xlu0 %3101
        %3103 = vrot.lane.b32.xlu0 %v3062, 64
        %v3104 = vpop.permute.xlu0 %3103
        %3105 = vrot.lane.b32.xlu0 %v3063, 64
        %v3106 = vpop.permute.xlu0 %3105
        %3107 = vrot.lane.b32.xlu0 %v3064, 64
        %v3108 = vpop.permute.xlu0 %3107
        %3109 = vrot.lane.b32.xlu0 %v3065, 64
        %v3110 = vpop.permute.xlu0 %3109
        %3111 = vrot.lane.b32.xlu0 %v3066, 64
        %v3112 = vpop.permute.xlu0 %3111
        %3113 = vrot.lane.b32.xlu0 %v3067, 64
        %v3114 = vpop.permute.xlu0 %3113
        %3115 = vrot.lane.b32.xlu0 %v3068, 64
        %v3116 = vpop.permute.xlu0 %3115
        %3133 = vmatprep.subr.bf16.mxu0 0
        %3134 = vmatpush1.bf16.msra.mxu0 %v3086
        %3135 = vmatprep.subr.bf16.mxu0 0
        %3136 = vmatpush1.bf16.msra.mxu0 %v3088
        %3137 = vmatprep.subr.bf16.mxu0 0
        %3138 = vmatpush1.bf16.msra.mxu0 %v3090
        %3139 = vmatprep.subr.bf16.mxu0 0
        %3140 = vmatpush1.bf16.msra.mxu0 %v3092
        %3141 = vmatprep.subr.bf16.mxu0 0
        %3142 = vmatpush1.bf16.msra.mxu0 %v3094
        %3143 = vmatprep.subr.bf16.mxu0 0
        %3144 = vmatpush1.bf16.msra.mxu0 %v3096
        %3145 = vmatprep.subr.bf16.mxu0 0
        %3146 = vmatpush1.bf16.msra.mxu0 %v3098
        %3147 = vmatprep.subr.bf16.mxu0 0
        %3148 = vmatpush1.bf16.msra.mxu0 %v3100
        %3149 = vmatprep.subr.bf16.mxu0 0
        %3150 = vmatpush1.bf16.msra.mxu0 %v3102
        %3151 = vmatprep.subr.bf16.mxu0 0
        %3152 = vmatpush1.bf16.msra.mxu0 %v3104
        %3153 = vmatprep.subr.bf16.mxu0 0
        %3154 = vmatpush1.bf16.msra.mxu0 %v3106
        %3155 = vmatprep.subr.bf16.mxu0 0
        %3156 = vmatpush1.bf16.msra.mxu0 %v3108
        %3157 = vmatprep.subr.bf16.mxu0 0
        %3158 = vmatpush1.bf16.msra.mxu0 %v3110
        %3159 = vmatprep.subr.bf16.mxu0 0
        %3160 = vmatpush1.bf16.msra.mxu0 %v3112
        %3161 = vmatprep.subr.bf16.mxu0 0
        %3162 = vmatpush1.bf16.msra.mxu0 %v3114
        %3163 = vmatprep.subr.bf16.mxu0 0
        %3164 = vmatpush1.bf16.msra.mxu0 %v3116
        %3165 = vmatprep.mubr.bf16.mxu0 %v3038
        %3166 = vmatmul.mubr.bf16.gmra.mrb[0].mxu0 %v3037
        %v3167 = vpop.f32.mrb[0].mxu0
        %v3168 = vadd.f32 0.0, %v3167
        %v3169 = vpop.f32.mrb[0].mxu0
        %v3170 = vpop.f32.mrb[0].mxu0
        %v3171 = vadd.f32 0.0, %v3170
        %v3172 = vpop.f32.mrb[0].mxu0
        %3173 = vmatprep.mubr.bf16.mxu0 %v3040
        %3174 = vmatmul.mubr.bf16.gmra.mrb[0].mxu0 %v3039
        %v3175 = vpop.f32.mrb[0].mxu0
        %v3176 = vadd.f32 0.0, %v3175
        %v3177 = vpop.f32.mrb[0].mxu0
        %v3178 = vpop.f32.mrb[0].mxu0
        %v3179 = vadd.f32 0.0, %v3178
        %v3180 = vpop.f32.mrb[0].mxu0
        %3181 = vmatprep.mubr.bf16.mxu0 %v3042
        %3182 = vmatmul.mubr.bf16.gmra.mrb[0].mxu0 %v3041
        %v3183 = vpop.f32.mrb[0].mxu0
        %v3184 = vadd.f32 0.0, %v3183
        %v3185 = vpop.f32.mrb[0].mxu0
        %v3186 = vpop.f32.mrb[0].mxu0
        %v3187 = vadd.f32 0.0, %v3186
        %v3188 = vpop.f32.mrb[0].mxu0
        %3189 = vmatprep.mubr.bf16.mxu0 %v3044
        %3190 = vmatmul.mubr.bf16.gmra.mrb[0].mxu0 %v3043
        %v3191 = vpop.f32.mrb[0].mxu0
        %v3192 = vadd.f32 0.0, %v3191
        %v3193 = vpop.f32.mrb[0].mxu0
        %v3194 = vpop.f32.mrb[0].mxu0
        %v3195 = vadd.f32 0.0, %v3194
        %v3196 = vpop.f32.mrb[0].mxu0
        %3197 = vmatprep.mubr.bf16.mxu0 %v3046
        %3198 = vmatmul.mubr.bf16.gmra.mrb[0].mxu0 %v3045
        %v3199 = vpop.f32.mrb[0].mxu0
        %v3200 = vadd.f32 0.0, %v3199
        %v3201 = vpop.f32.mrb[0].mxu0
        %v3202 = vpop.f32.mrb[0].mxu0
        %v3203 = vadd.f32 0.0, %v3202
        %v3204 = vpop.f32.mrb[0].mxu0
        %3205 = vmatprep.mubr.bf16.mxu0 %v3048
        %3206 = vmatmul.mubr.bf16.gmra.mrb[0].mxu0 %v3047
        %v3207 = vpop.f32.mrb[0].mxu0
        %v3208 = vadd.f32 0.0, %v3207
        %v3209 = vpop.f32.mrb[0].mxu0
        %v3210 = vpop.f32.mrb[0].mxu0
        %v3211 = vadd.f32 0.0, %v3210
        %v3212 = vpop.f32.mrb[0].mxu0
        %3213 = vmatprep.mubr.bf16.mxu0 %v3050
        %3214 = vmatmul.mubr.bf16.gmra.mrb[0].mxu0 %v3049
        %v3215 = vpop.f32.mrb[0].mxu0
        %v3216 = vadd.f32 0.0, %v3215
        %v3217 = vpop.f32.mrb[0].mxu0
        %v3218 = vpop.f32.mrb[0].mxu0
        %v3219 = vadd.f32 0.0, %v3218
        %v3220 = vpop.f32.mrb[0].mxu0
        %3221 = vmatprep.mubr.bf16.mxu0 %v3052
        %3222 = vmatmul.mubr.bf16.gmra.mrb[0].mxu0 %v3051
        %v3223 = vpop.f32.mrb[0].mxu0
        %v3224 = vadd.f32 0.0, %v3223
        %v3225 = vpop.f32.mrb[0].mxu0
        %v3226 = vpop.f32.mrb[0].mxu0
        %v3227 = vadd.f32 0.0, %v3226
        %v3228 = vpop.f32.mrb[0].mxu0
        %3229 = vdwg.mxu0
        %v3230 = vmul.f32 %v3168, %v3021
        %v3231 = vmul.f32 %v3171, %v3022
        %v3232 = vmul.f32 %v3176, %v3023
        %v3233 = vmul.f32 %v3179, %v3024
        %v3234 = vmul.f32 %v3184, %v3025
        %v3235 = vmul.f32 %v3187, %v3026
        %v3236 = vmul.f32 %v3192, %v3027
        %v3237 = vmul.f32 %v3195, %v3028
        %v3238 = vmul.f32 %v3200, %v3029
        %v3239 = vmul.f32 %v3203, %v3030
        %v3240 = vmul.f32 %v3208, %v3031
        %v3241 = vmul.f32 %v3211, %v3032
        %v3242 = vmul.f32 %v3216, %v3033
        %v3243 = vmul.f32 %v3219, %v3034
        %v3244 = vmul.f32 %v3224, %v3035
        %v3245 = vmul.f32 %v3227, %v3036
        %v3246 = vpack.c.bf16 %v3231, %v3230
        %v3247 = vpack.c.bf16 %v3233, %v3232
        %v3248 = vpack.c.bf16 %v3235, %v3234
        %v3249 = vpack.c.bf16 %v3237, %v3236
        %v3250 = vpack.c.bf16 %v3239, %v3238
        %v3251 = vpack.c.bf16 %v3241, %v3240
        %v3252 = vpack.c.bf16 %v3243, %v3242
        %v3253 = vpack.c.bf16 %v3245, %v3244
        %3262 = vrot.lane.b32.xlu0 %v3246, 64
        %v3263 = vpop.permute.xlu0 %3262
        %3264 = vrot.lane.b32.xlu0 %v3247, 64
        %v3265 = vpop.permute.xlu0 %3264
        %3266 = vrot.lane.b32.xlu0 %v3248, 64
        %v3267 = vpop.permute.xlu0 %3266
        %3268 = vrot.lane.b32.xlu0 %v3249, 64
        %v3269 = vpop.permute.xlu0 %3268
        %3270 = vrot.lane.b32.xlu0 %v3250, 64
        %v3271 = vpop.permute.xlu0 %3270
        %3272 = vrot.lane.b32.xlu0 %v3251, 64
        %v3273 = vpop.permute.xlu0 %3272
        %3274 = vrot.lane.b32.xlu0 %v3252, 64
        %v3275 = vpop.permute.xlu0 %3274
        %3276 = vrot.lane.b32.xlu0 %v3253, 64
        %v3277 = vpop.permute.xlu0 %3276
        %vm3286 = vcmask 785920
        %3287 = vst.msk [vmem:[#allocation4] sm:$0xff] %vm3286, %v3263
        %3288 = vst.msk [vmem:[#allocation4 + $0x8] sm:$0xff] %vm3286, %v3265
        %3289 = vst.msk [vmem:[#allocation4 + $0x10] sm:$0xff] %vm3286, %v3267
        %3290 = vst.msk [vmem:[#allocation4 + $0x18] sm:$0xff] %vm3286, %v3269
        %3291 = vst.msk [vmem:[#allocation4 + $0x20] sm:$0xff] %vm3286, %v3271
        %3292 = vst.msk [vmem:[#allocation4 + $0x28] sm:$0xff] %vm3286, %v3273
        %3293 = vst.msk [vmem:[#allocation4 + $0x30] sm:$0xff] %vm3286, %v3275
        %3294 = vst.msk [vmem:[#allocation4 + $0x38] sm:$0xff] %vm3286, %v3277
        %v3295 = vld [vmem:[#allocation2 + $0x60] sm:$0xff]
        %v3296 = vld [vmem:[#allocation2 + $0x68] sm:$0xff]
        %v3297 = vld [vmem:[#allocation2 + $0x70] sm:$0xff]
        %v3298 = vld [vmem:[#allocation2 + $0x78] sm:$0xff]
        %3299 = vrot.lane.b32.xlu0 %v1421, 32
        %v3300 = vpop.permute.xlu0 %3299
        %3301 = vrot.lane.b32.xlu0 %v1422, 32
        %v3302 = vpop.permute.xlu0 %3301
        %3303 = vrot.lane.b32.xlu0 %v1423, 32
        %v3304 = vpop.permute.xlu0 %3303
        %3305 = vrot.lane.b32.xlu0 %v1424, 32
        %v3306 = vpop.permute.xlu0 %3305
        %3307 = vrot.lane.b32.xlu0 %v1425, 32
        %v3308 = vpop.permute.xlu0 %3307
        %3309 = vrot.lane.b32.xlu0 %v1426, 32
        %v3310 = vpop.permute.xlu0 %3309
        %3311 = vrot.lane.b32.xlu0 %v1427, 32
        %v3312 = vpop.permute.xlu0 %3311
        %3313 = vrot.lane.b32.xlu0 %v1428, 32
        %v3314 = vpop.permute.xlu0 %3313
        %v3316 = vsel %vm1433, %v3300, 0
        %v3319 = vsel %vm1433, %v3302, 0
        %v3322 = vsel %vm1433, %v3304, 0
        %v3325 = vsel %vm1433, %v3306, 0
        %v3328 = vsel %vm1433, %v3308, 0
        %v3331 = vsel %vm1433, %v3310, 0
        %v3334 = vsel %vm1433, %v3312, 0
        %v3337 = vsel %vm1433, %v3314, 0
        %3339 = vmatprep.subr.bf16.mxu0 %v3296
        %3340 = vmatpush1.bf16.msra.mxu0 %v3295
        %3341 = vmatprep.subr.bf16.mxu0 %v3298
        %3342 = vmatpush1.bf16.msra.mxu0 %v3297
        %3343 = vmatprep.subr.bf16.mxu0 0
        %3344 = vmatpush1.bf16.msra.mxu0 0
        %3345 = vmatprep.subr.bf16.mxu0 0
        %3346 = vmatpush1.bf16.msra.mxu0 0
        %3347 = vmatprep.subr.bf16.mxu0 0
        %3348 = vmatpush1.bf16.msra.mxu0 0
        %3349 = vmatprep.subr.bf16.mxu0 0
        %3350 = vmatpush1.bf16.msra.mxu0 0
        %3351 = vmatprep.subr.bf16.mxu0 0
        %3352 = vmatpush1.bf16.msra.mxu0 0
        %3353 = vmatprep.subr.bf16.mxu0 0
        %3354 = vmatpush1.bf16.msra.mxu0 0
        %3355 = vmatprep.subr.bf16.mxu0 0
        %3356 = vmatpush1.bf16.msra.mxu0 0
        %3357 = vmatprep.subr.bf16.mxu0 0
        %3358 = vmatpush1.bf16.msra.mxu0 0
        %3359 = vmatprep.subr.bf16.mxu0 0
        %3360 = vmatpush1.bf16.msra.mxu0 0
        %3361 = vmatprep.subr.bf16.mxu0 0
        %3362 = vmatpush1.bf16.msra.mxu0 0
        %3363 = vmatprep.subr.bf16.mxu0 0
        %3364 = vmatpush1.bf16.msra.mxu0 0
        %3365 = vmatprep.subr.bf16.mxu0 0
        %3366 = vmatpush1.bf16.msra.mxu0 0
        %3367 = vmatprep.subr.bf16.mxu0 0
        %3368 = vmatpush1.bf16.msra.mxu0 0
        %3369 = vmatprep.subr.bf16.mxu0 0
        %3370 = vmatpush1.bf16.msra.mxu0 0
        %3371 = vmatprep.mubr.bf16.mxu0 0
        %3372 = vmatmul.mubr.bf16.gmra.mrb[0].mxu0 %v3316
        %v3373 = vpop.f32.mrb[0].mxu0
        %v3374 = vadd.f32 0.0, %v3373
        %v3375 = vpop.f32.mrb[0].mxu0
        %v3376 = vadd.f32 0.0, %v3375
        %v3377 = vpop.f32.mrb[0].mxu0
        %v3378 = vadd.f32 0.0, %v3377
        %v3379 = vpop.f32.mrb[0].mxu0
        %v3380 = vadd.f32 0.0, %v3379
        %3381 = vmatprep.mubr.bf16.mxu0 0
        %3382 = vmatmul.mubr.bf16.gmra.mrb[0].mxu0 %v3319
        %v3383 = vpop.f32.mrb[0].mxu0
        %v3384 = vadd.f32 0.0, %v3383
        %v3385 = vpop.f32.mrb[0].mxu0
        %v3386 = vadd.f32 0.0, %v3385
        %v3387 = vpop.f32.mrb[0].mxu0
        %v3388 = vadd.f32 0.0, %v3387
        %v3389 = vpop.f32.mrb[0].mxu0
        %v3390 = vadd.f32 0.0, %v3389
        %3391 = vmatprep.mubr.bf16.mxu0 0
        %3392 = vmatmul.mubr.bf16.gmra.mrb[0].mxu0 %v3322
        %v3393 = vpop.f32.mrb[0].mxu0
        %v3394 = vadd.f32 0.0, %v3393
        %v3395 = vpop.f32.mrb[0].mxu0
        %v3396 = vadd.f32 0.0, %v3395
        %v3397 = vpop.f32.mrb[0].mxu0
        %v3398 = vadd.f32 0.0, %v3397
        %v3399 = vpop.f32.mrb[0].mxu0
        %v3400 = vadd.f32 0.0, %v3399
        %3401 = vmatprep.mubr.bf16.mxu0 0
        %3402 = vmatmul.mubr.bf16.gmra.mrb[0].mxu0 %v3325
        %v3403 = vpop.f32.mrb[0].mxu0
        %v3404 = vadd.f32 0.0, %v3403
        %v3405 = vpop.f32.mrb[0].mxu0
        %v3406 = vadd.f32 0.0, %v3405
        %v3407 = vpop.f32.mrb[0].mxu0
        %v3408 = vadd.f32 0.0, %v3407
        %v3409 = vpop.f32.mrb[0].mxu0
        %v3410 = vadd.f32 0.0, %v3409
        %3411 = vmatprep.mubr.bf16.mxu0 0
        %3412 = vmatmul.mubr.bf16.gmra.mrb[0].mxu0 %v3328
        %v3413 = vpop.f32.mrb[0].mxu0
        %v3414 = vadd.f32 0.0, %v3413
        %v3415 = vpop.f32.mrb[0].mxu0
        %v3416 = vadd.f32 0.0, %v3415
        %v3417 = vpop.f32.mrb[0].mxu0
        %v3418 = vadd.f32 0.0, %v3417
        %v3419 = vpop.f32.mrb[0].mxu0
        %v3420 = vadd.f32 0.0, %v3419
        %3421 = vmatprep.mubr.bf16.mxu0 0
        %3422 = vmatmul.mubr.bf16.gmra.mrb[0].mxu0 %v3331
        %v3423 = vpop.f32.mrb[0].mxu0
        %v3424 = vadd.f32 0.0, %v3423
        %v3425 = vpop.f32.mrb[0].mxu0
        %v3426 = vadd.f32 0.0, %v3425
        %v3427 = vpop.f32.mrb[0].mxu0
        %v3428 = vadd.f32 0.0, %v3427
        %v3429 = vpop.f32.mrb[0].mxu0
        %v3430 = vadd.f32 0.0, %v3429
        %3431 = vmatprep.mubr.bf16.mxu0 0
        %3432 = vmatmul.mubr.bf16.gmra.mrb[0].mxu0 %v3334
        %v3433 = vpop.f32.mrb[0].mxu0
        %v3434 = vadd.f32 0.0, %v3433
        %v3435 = vpop.f32.mrb[0].mxu0
        %v3436 = vadd.f32 0.0, %v3435
        %v3437 = vpop.f32.mrb[0].mxu0
        %v3438 = vadd.f32 0.0, %v3437
        %v3439 = vpop.f32.mrb[0].mxu0
        %v3440 = vadd.f32 0.0, %v3439
        %3441 = vmatprep.mubr.bf16.mxu0 0
        %3442 = vmatmul.mubr.bf16.gmra.mrb[0].mxu0 %v3337
        %v3443 = vpop.f32.mrb[0].mxu0
        %v3444 = vadd.f32 0.0, %v3443
        %v3445 = vpop.f32.mrb[0].mxu0
        %v3446 = vadd.f32 0.0, %v3445
        %v3447 = vpop.f32.mrb[0].mxu0
        %v3448 = vadd.f32 0.0, %v3447
        %v3449 = vpop.f32.mrb[0].mxu0
        %v3450 = vadd.f32 0.0, %v3449
        %3451 = vdwg.mxu0
        %v3452 = vsel %vm1574, %v3374, -1e+30
        %v3453 = vsel %vm1575, %v3376, -1e+30
        %v3454 = vsel %vm1574, %v3378, -1e+30
        %v3455 = vsel %vm1575, %v3380, -1e+30
        %v3456 = vsel %vm1574, %v3384, -1e+30
        %v3457 = vsel %vm1575, %v3386, -1e+30
        %v3458 = vsel %vm1574, %v3388, -1e+30
        %v3459 = vsel %vm1575, %v3390, -1e+30
        %v3460 = vsel %vm1574, %v3394, -1e+30
        %v3461 = vsel %vm1575, %v3396, -1e+30
        %v3462 = vsel %vm1574, %v3398, -1e+30
        %v3463 = vsel %vm1575, %v3400, -1e+30
        %v3464 = vsel %vm1574, %v3404, -1e+30
        %v3465 = vsel %vm1575, %v3406, -1e+30
        %v3466 = vsel %vm1574, %v3408, -1e+30
        %v3467 = vsel %vm1575, %v3410, -1e+30
        %v3468 = vsel %vm1574, %v3414, -1e+30
        %v3469 = vsel %vm1575, %v3416, -1e+30
        %v3470 = vsel %vm1574, %v3418, -1e+30
        %v3471 = vsel %vm1575, %v3420, -1e+30
        %v3472 = vsel %vm1574, %v3424, -1e+30
        %v3473 = vsel %vm1575, %v3426, -1e+30
        %v3474 = vsel %vm1574, %v3428, -1e+30
        %v3475 = vsel %vm1575, %v3430, -1e+30
        %v3476 = vsel %vm1574, %v3434, -1e+30
        %v3477 = vsel %vm1575, %v3436, -1e+30
        %v3478 = vsel %vm1574, %v3438, -1e+30
        %v3479 = vsel %vm1575, %v3440, -1e+30
        %v3480 = vsel %vm1574, %v3444, -1e+30
        %v3481 = vsel %vm1575, %v3446, -1e+30
        %v3482 = vsel %vm1574, %v3448, -1e+30
        %v3483 = vsel %vm1575, %v3450, -1e+30
        %v3484 = vmax.f32 %v3452, %v3453
        %3485 = vmax.xlane.f32.xlu0 %v3484
        %v3486 = vpop.xlane.xlu0 %3485
        %v3487 = vmax.f32 %v3454, %v3455
        %3488 = vmax.xlane.f32.xlu0 %v3487
        %v3489 = vpop.xlane.xlu0 %3488
        %v3490 = vmax.f32 %v3456, %v3457
        %3491 = vmax.xlane.f32.xlu0 %v3490
        %v3492 = vpop.xlane.xlu0 %3491
        %v3493 = vmax.f32 %v3458, %v3459
        %3494 = vmax.xlane.f32.xlu0 %v3493
        %v3495 = vpop.xlane.xlu0 %3494
        %v3496 = vmax.f32 %v3460, %v3461
        %3497 = vmax.xlane.f32.xlu0 %v3496
        %v3498 = vpop.xlane.xlu0 %3497
        %v3499 = vmax.f32 %v3462, %v3463
        %3500 = vmax.xlane.f32.xlu0 %v3499
        %v3501 = vpop.xlane.xlu0 %3500
        %v3502 = vmax.f32 %v3464, %v3465
        %3503 = vmax.xlane.f32.xlu0 %v3502
        %v3504 = vpop.xlane.xlu0 %3503
        %v3505 = vmax.f32 %v3466, %v3467
        %3506 = vmax.xlane.f32.xlu0 %v3505
        %v3507 = vpop.xlane.xlu0 %3506
        %v3508 = vmax.f32 %v3468, %v3469
        %3509 = vmax.xlane.f32.xlu0 %v3508
        %v3510 = vpop.xlane.xlu0 %3509
        %v3511 = vmax.f32 %v3470, %v3471
        %3512 = vmax.xlane.f32.xlu0 %v3511
        %v3513 = vpop.xlane.xlu0 %3512
        %v3514 = vmax.f32 %v3472, %v3473
        %3515 = vmax.xlane.f32.xlu0 %v3514
        %v3516 = vpop.xlane.xlu0 %3515
        %v3517 = vmax.f32 %v3474, %v3475
        %3518 = vmax.xlane.f32.xlu0 %v3517
        %v3519 = vpop.xlane.xlu0 %3518
        %v3520 = vmax.f32 %v3476, %v3477
        %3521 = vmax.xlane.f32.xlu0 %v3520
        %v3522 = vpop.xlane.xlu0 %3521
        %v3523 = vmax.f32 %v3478, %v3479
        %3524 = vmax.xlane.f32.xlu0 %v3523
        %v3525 = vpop.xlane.xlu0 %3524
        %v3526 = vmax.f32 %v3480, %v3481
        %3527 = vmax.xlane.f32.xlu0 %v3526
        %v3528 = vpop.xlane.xlu0 %3527
        %v3529 = vmax.f32 %v3482, %v3483
        %3530 = vmax.xlane.f32.xlu0 %v3529
        %v3531 = vpop.xlane.xlu0 %3530
        %v3532 = vsub.f32 %v3452, %v3486
        %v3533 = vsub.f32 %v3453, %v3486
        %v3534 = vsub.f32 %v3454, %v3489
        %v3535 = vsub.f32 %v3455, %v3489
        %v3536 = vsub.f32 %v3456, %v3492
        %v3537 = vsub.f32 %v3457, %v3492
        %v3538 = vsub.f32 %v3458, %v3495
        %v3539 = vsub.f32 %v3459, %v3495
        %v3540 = vsub.f32 %v3460, %v3498
        %v3541 = vsub.f32 %v3461, %v3498
        %v3542 = vsub.f32 %v3462, %v3501
        %v3543 = vsub.f32 %v3463, %v3501
        %v3544 = vsub.f32 %v3464, %v3504
        %v3545 = vsub.f32 %v3465, %v3504
        %v3546 = vsub.f32 %v3466, %v3507
        %v3547 = vsub.f32 %v3467, %v3507
        %v3548 = vsub.f32 %v3468, %v3510
        %v3549 = vsub.f32 %v3469, %v3510
        %v3550 = vsub.f32 %v3470, %v3513
        %v3551 = vsub.f32 %v3471, %v3513
        %v3552 = vsub.f32 %v3472, %v3516
        %v3553 = vsub.f32 %v3473, %v3516
        %v3554 = vsub.f32 %v3474, %v3519
        %v3555 = vsub.f32 %v3475, %v3519
        %v3556 = vsub.f32 %v3476, %v3522
        %v3557 = vsub.f32 %v3477, %v3522
        %v3558 = vsub.f32 %v3478, %v3525
        %v3559 = vsub.f32 %v3479, %v3525
        %v3560 = vsub.f32 %v3480, %v3528
        %v3561 = vsub.f32 %v3481, %v3528
        %v3562 = vsub.f32 %v3482, %v3531
        %v3563 = vsub.f32 %v3483, %v3531
        %v3564 = vmul.f32 %v3532, 1.442695
        %v3565 = vpow.pop %v3564
        %v3566 = vmul.f32 %v3533, 1.442695
        %v3567 = vpow.pop %v3566
        %v3568 = vmul.f32 %v3534, 1.442695
        %v3569 = vpow.pop %v3568
        %v3570 = vmul.f32 %v3535, 1.442695
        %v3571 = vpow.pop %v3570
        %v3572 = vmul.f32 %v3536, 1.442695
        %v3573 = vpow.pop %v3572
        %v3574 = vmul.f32 %v3537, 1.442695
        %v3575 = vpow.pop %v3574
        %v3576 = vmul.f32 %v3538, 1.442695
        %v3577 = vpow.pop %v3576
        %v3578 = vmul.f32 %v3539, 1.442695
        %v3579 = vpow.pop %v3578
        %v3580 = vmul.f32 %v3540, 1.442695
        %v3581 = vpow.pop %v3580
        %v3582 = vmul.f32 %v3541, 1.442695
        %v3583 = vpow.pop %v3582
        %v3584 = vmul.f32 %v3542, 1.442695
        %v3585 = vpow.pop %v3584
        %v3586 = vmul.f32 %v3543, 1.442695
        %v3587 = vpow.pop %v3586
        %v3588 = vmul.f32 %v3544, 1.442695
        %v3589 = vpow.pop %v3588
        %v3590 = vmul.f32 %v3545, 1.442695
        %v3591 = vpow.pop %v3590
        %v3592 = vmul.f32 %v3546, 1.442695
        %v3593 = vpow.pop %v3592
        %v3594 = vmul.f32 %v3547, 1.442695
        %v3595 = vpow.pop %v3594
        %v3596 = vmul.f32 %v3548, 1.442695
        %v3597 = vpow.pop %v3596
        %v3598 = vmul.f32 %v3549, 1.442695
        %v3599 = vpow.pop %v3598
        %v3600 = vmul.f32 %v3550, 1.442695
        %v3601 = vpow.pop %v3600
        %v3602 = vmul.f32 %v3551, 1.442695
        %v3603 = vpow.pop %v3602
        %v3604 = vmul.f32 %v3552, 1.442695
        %v3605 = vpow.pop %v3604
        %v3606 = vmul.f32 %v3553, 1.442695
        %v3607 = vpow.pop %v3606
        %v3608 = vmul.f32 %v3554, 1.442695
        %v3609 = vpow.pop %v3608
        %v3610 = vmul.f32 %v3555, 1.442695
        %v3611 = vpow.pop %v3610
        %v3612 = vmul.f32 %v3556, 1.442695
        %v3613 = vpow.pop %v3612
        %v3614 = vmul.f32 %v3557, 1.442695
        %v3615 = vpow.pop %v3614
        %v3616 = vmul.f32 %v3558, 1.442695
        %v3617 = vpow.pop %v3616
        %v3618 = vmul.f32 %v3559, 1.442695
        %v3619 = vpow.pop %v3618
        %v3620 = vmul.f32 %v3560, 1.442695
        %v3621 = vpow.pop %v3620
        %v3622 = vmul.f32 %v3561, 1.442695
        %v3623 = vpow.pop %v3622
        %v3624 = vmul.f32 %v3562, 1.442695
        %v3625 = vpow.pop %v3624
        %v3626 = vmul.f32 %v3563, 1.442695
        %v3627 = vpow.pop %v3626
        %v3628 = vadd.f32 %v3565, %v3567
        %3629 = vadd.xlane.f32.xlu0 %v3628
        %v3630 = vpop.xlane.xlu0 %3629
        %v3631 = vadd.f32 %v3569, %v3571
        %3632 = vadd.xlane.f32.xlu0 %v3631
        %v3633 = vpop.xlane.xlu0 %3632
        %v3634 = vadd.f32 %v3573, %v3575
        %3635 = vadd.xlane.f32.xlu0 %v3634
        %v3636 = vpop.xlane.xlu0 %3635
        %v3637 = vadd.f32 %v3577, %v3579
        %3638 = vadd.xlane.f32.xlu0 %v3637
        %v3639 = vpop.xlane.xlu0 %3638
        %v3640 = vadd.f32 %v3581, %v3583
        %3641 = vadd.xlane.f32.xlu0 %v3640
        %v3642 = vpop.xlane.xlu0 %3641
        %v3643 = vadd.f32 %v3585, %v3587
        %3644 = vadd.xlane.f32.xlu0 %v3643
        %v3645 = vpop.xlane.xlu0 %3644
        %v3646 = vadd.f32 %v3589, %v3591
        %3647 = vadd.xlane.f32.xlu0 %v3646
        %v3648 = vpop.xlane.xlu0 %3647
        %v3649 = vadd.f32 %v3593, %v3595
        %3650 = vadd.xlane.f32.xlu0 %v3649
        %v3651 = vpop.xlane.xlu0 %3650
        %v3652 = vadd.f32 %v3597, %v3599
        %3653 = vadd.xlane.f32.xlu0 %v3652
        %v3654 = vpop.xlane.xlu0 %3653
        %v3655 = vadd.f32 %v3601, %v3603
        %3656 = vadd.xlane.f32.xlu0 %v3655
        %v3657 = vpop.xlane.xlu0 %3656
        %v3658 = vadd.f32 %v3605, %v3607
        %3659 = vadd.xlane.f32.xlu0 %v3658
        %v3660 = vpop.xlane.xlu0 %3659
        %v3661 = vadd.f32 %v3609, %v3611
        %3662 = vadd.xlane.f32.xlu0 %v3661
        %v3663 = vpop.xlane.xlu0 %3662
        %v3664 = vadd.f32 %v3613, %v3615
        %3665 = vadd.xlane.f32.xlu0 %v3664
        %v3666 = vpop.xlane.xlu0 %3665
        %v3667 = vadd.f32 %v3617, %v3619
        %3668 = vadd.xlane.f32.xlu0 %v3667
        %v3669 = vpop.xlane.xlu0 %3668
        %v3670 = vadd.f32 %v3621, %v3623
        %3671 = vadd.xlane.f32.xlu0 %v3670
        %v3672 = vpop.xlane.xlu0 %3671
        %v3673 = vadd.f32 %v3625, %v3627
        %3674 = vadd.xlane.f32.xlu0 %v3673
        %v3675 = vpop.xlane.xlu0 %3674
        %v3676 = vrcp.pop %v3630
        %v3677 = vrcp.pop %v3633
        %v3678 = vrcp.pop %v3636
        %v3679 = vrcp.pop %v3639
        %v3680 = vrcp.pop %v3642
        %v3681 = vrcp.pop %v3645
        %v3682 = vrcp.pop %v3648
        %v3683 = vrcp.pop %v3651
        %v3684 = vrcp.pop %v3654
        %v3685 = vrcp.pop %v3657
        %v3686 = vrcp.pop %v3660
        %v3687 = vrcp.pop %v3663
        %v3688 = vrcp.pop %v3666
        %v3689 = vrcp.pop %v3669
        %v3690 = vrcp.pop %v3672
        %v3691 = vrcp.pop %v3675
        %v3692 = vpack.c.bf16 %v3569, %v3565
        %v3693 = vpack.c.bf16 %v3571, %v3567
        %v3694 = vpack.c.bf16 %v3577, %v3573
        %v3695 = vpack.c.bf16 %v3579, %v3575
        %v3696 = vpack.c.bf16 %v3585, %v3581
        %v3697 = vpack.c.bf16 %v3587, %v3583
        %v3698 = vpack.c.bf16 %v3593, %v3589
        %v3699 = vpack.c.bf16 %v3595, %v3591
        %v3700 = vpack.c.bf16 %v3601, %v3597
        %v3701 = vpack.c.bf16 %v3603, %v3599
        %v3702 = vpack.c.bf16 %v3609, %v3605
        %v3703 = vpack.c.bf16 %v3611, %v3607
        %v3704 = vpack.c.bf16 %v3617, %v3613
        %v3705 = vpack.c.bf16 %v3619, %v3615
        %v3706 = vpack.c.bf16 %v3625, %v3621
        %v3707 = vpack.c.bf16 %v3627, %v3623
        %v3708 = vld [vmem:[#allocation3] sm:$0xff]
        %v3709 = vld [vmem:[#allocation3 + $0x8] sm:$0xff]
        %v3710 = vld [vmem:[#allocation3 + $0x10] sm:$0xff]
        %v3711 = vld [vmem:[#allocation3 + $0x18] sm:$0xff]
        %v3712 = vld [vmem:[#allocation3 + $0x20] sm:$0xff]
        %v3713 = vld [vmem:[#allocation3 + $0x28] sm:$0xff]
        %v3714 = vld [vmem:[#allocation3 + $0x30] sm:$0xff]
        %v3715 = vld [vmem:[#allocation3 + $0x38] sm:$0xff]
        %v3716 = vld [vmem:[#allocation3 + $0x40] sm:$0xff]
        %v3717 = vld [vmem:[#allocation3 + $0x48] sm:$0xff]
        %v3718 = vld [vmem:[#allocation3 + $0x50] sm:$0xff]
        %v3719 = vld [vmem:[#allocation3 + $0x58] sm:$0xff]
        %v3720 = vld [vmem:[#allocation3 + $0x60] sm:$0xff]
        %v3721 = vld [vmem:[#allocation3 + $0x68] sm:$0xff]
        %v3722 = vld [vmem:[#allocation3 + $0x70] sm:$0xff]
        %v3723 = vld [vmem:[#allocation3 + $0x78] sm:$0xff]
        %3740 = vrot.lane.b32.xlu0 %v3708, 32
        %v3741 = vpop.permute.xlu0 %3740
        %3742 = vrot.lane.b32.xlu0 %v3709, 32
        %v3743 = vpop.permute.xlu0 %3742
        %3744 = vrot.lane.b32.xlu0 %v3710, 32
        %v3745 = vpop.permute.xlu0 %3744
        %3746 = vrot.lane.b32.xlu0 %v3711, 32
        %v3747 = vpop.permute.xlu0 %3746
        %3748 = vrot.lane.b32.xlu0 %v3712, 32
        %v3749 = vpop.permute.xlu0 %3748
        %3750 = vrot.lane.b32.xlu0 %v3713, 32
        %v3751 = vpop.permute.xlu0 %3750
        %3752 = vrot.lane.b32.xlu0 %v3714, 32
        %v3753 = vpop.permute.xlu0 %3752
        %3754 = vrot.lane.b32.xlu0 %v3715, 32
        %v3755 = vpop.permute.xlu0 %3754
        %3756 = vrot.lane.b32.xlu0 %v3716, 32
        %v3757 = vpop.permute.xlu0 %3756
        %3758 = vrot.lane.b32.xlu0 %v3717, 32
        %v3759 = vpop.permute.xlu0 %3758
        %3760 = vrot.lane.b32.xlu0 %v3718, 32
        %v3761 = vpop.permute.xlu0 %3760
        %3762 = vrot.lane.b32.xlu0 %v3719, 32
        %v3763 = vpop.permute.xlu0 %3762
        %3764 = vrot.lane.b32.xlu0 %v3720, 32
        %v3765 = vpop.permute.xlu0 %3764
        %3766 = vrot.lane.b32.xlu0 %v3721, 32
        %v3767 = vpop.permute.xlu0 %3766
        %3768 = vrot.lane.b32.xlu0 %v3722, 32
        %v3769 = vpop.permute.xlu0 %3768
        %3770 = vrot.lane.b32.xlu0 %v3723, 32
        %v3771 = vpop.permute.xlu0 %3770
        %3788 = vmatprep.subr.bf16.mxu0 0
        %3789 = vmatpush1.bf16.msra.mxu0 %v3741
        %3790 = vmatprep.subr.bf16.mxu0 0
        %3791 = vmatpush1.bf16.msra.mxu0 %v3743
        %3792 = vmatprep.subr.bf16.mxu0 0
        %3793 = vmatpush1.bf16.msra.mxu0 %v3745
        %3794 = vmatprep.subr.bf16.mxu0 0
        %3795 = vmatpush1.bf16.msra.mxu0 %v3747
        %3796 = vmatprep.subr.bf16.mxu0 0
        %3797 = vmatpush1.bf16.msra.mxu0 %v3749
        %3798 = vmatprep.subr.bf16.mxu0 0
        %3799 = vmatpush1.bf16.msra.mxu0 %v3751
        %3800 = vmatprep.subr.bf16.mxu0 0
        %3801 = vmatpush1.bf16.msra.mxu0 %v3753
        %3802 = vmatprep.subr.bf16.mxu0 0
        %3803 = vmatpush1.bf16.msra.mxu0 %v3755
        %3804 = vmatprep.subr.bf16.mxu0 0
        %3805 = vmatpush1.bf16.msra.mxu0 %v3757
        %3806 = vmatprep.subr.bf16.mxu0 0
        %3807 = vmatpush1.bf16.msra.mxu0 %v3759
        %3808 = vmatprep.subr.bf16.mxu0 0
        %3809 = vmatpush1.bf16.msra.mxu0 %v3761
        %3810 = vmatprep.subr.bf16.mxu0 0
        %3811 = vmatpush1.bf16.msra.mxu0 %v3763
        %3812 = vmatprep.subr.bf16.mxu0 0
        %3813 = vmatpush1.bf16.msra.mxu0 %v3765
        %3814 = vmatprep.subr.bf16.mxu0 0
        %3815 = vmatpush1.bf16.msra.mxu0 %v3767
        %3816 = vmatprep.subr.bf16.mxu0 0
        %3817 = vmatpush1.bf16.msra.mxu0 %v3769
        %3818 = vmatprep.subr.bf16.mxu0 0
        %3819 = vmatpush1.bf16.msra.mxu0 %v3771
        %3820 = vmatprep.mubr.bf16.mxu0 %v3693
        %3821 = vmatmul.mubr.bf16.gmra.mrb[0].mxu0 %v3692
        %v3822 = vpop.f32.mrb[0].mxu0
        %v3823 = vadd.f32 0.0, %v3822
        %v3824 = vpop.f32.mrb[0].mxu0
        %v3825 = vpop.f32.mrb[0].mxu0
        %v3826 = vadd.f32 0.0, %v3825
        %v3827 = vpop.f32.mrb[0].mxu0
        %3828 = vmatprep.mubr.bf16.mxu0 %v3695
        %3829 = vmatmul.mubr.bf16.gmra.mrb[0].mxu0 %v3694
        %v3830 = vpop.f32.mrb[0].mxu0
        %v3831 = vadd.f32 0.0, %v3830
        %v3832 = vpop.f32.mrb[0].mxu0
        %v3833 = vpop.f32.mrb[0].mxu0
        %v3834 = vadd.f32 0.0, %v3833
        %v3835 = vpop.f32.mrb[0].mxu0
        %3836 = vmatprep.mubr.bf16.mxu0 %v3697
        %3837 = vmatmul.mubr.bf16.gmra.mrb[0].mxu0 %v3696
        %v3838 = vpop.f32.mrb[0].mxu0
        %v3839 = vadd.f32 0.0, %v3838
        %v3840 = vpop.f32.mrb[0].mxu0
        %v3841 = vpop.f32.mrb[0].mxu0
        %v3842 = vadd.f32 0.0, %v3841
        %v3843 = vpop.f32.mrb[0].mxu0
        %3844 = vmatprep.mubr.bf16.mxu0 %v3699
        %3845 = vmatmul.mubr.bf16.gmra.mrb[0].mxu0 %v3698
        %v3846 = vpop.f32.mrb[0].mxu0
        %v3847 = vadd.f32 0.0, %v3846
        %v3848 = vpop.f32.mrb[0].mxu0
        %v3849 = vpop.f32.mrb[0].mxu0
        %v3850 = vadd.f32 0.0, %v3849
        %v3851 = vpop.f32.mrb[0].mxu0
        %3852 = vmatprep.mubr.bf16.mxu0 %v3701
        %3853 = vmatmul.mubr.bf16.gmra.mrb[0].mxu0 %v3700
        %v3854 = vpop.f32.mrb[0].mxu0
        %v3855 = vadd.f32 0.0, %v3854
        %v3856 = vpop.f32.mrb[0].mxu0
        %v3857 = vpop.f32.mrb[0].mxu0
        %v3858 = vadd.f32 0.0, %v3857
        %v3859 = vpop.f32.mrb[0].mxu0
        %3860 = vmatprep.mubr.bf16.mxu0 %v3703
        %3861 = vmatmul.mubr.bf16.gmra.mrb[0].mxu0 %v3702
        %v3862 = vpop.f32.mrb[0].mxu0
        %v3863 = vadd.f32 0.0, %v3862
        %v3864 = vpop.f32.mrb[0].mxu0
        %v3865 = vpop.f32.mrb[0].mxu0
        %v3866 = vadd.f32 0.0, %v3865
        %v3867 = vpop.f32.mrb[0].mxu0
        %3868 = vmatprep.mubr.bf16.mxu0 %v3705
        %3869 = vmatmul.mubr.bf16.gmra.mrb[0].mxu0 %v3704
        %v3870 = vpop.f32.mrb[0].mxu0
        %v3871 = vadd.f32 0.0, %v3870
        %v3872 = vpop.f32.mrb[0].mxu0
        %v3873 = vpop.f32.mrb[0].mxu0
        %v3874 = vadd.f32 0.0, %v3873
        %v3875 = vpop.f32.mrb[0].mxu0
        %3876 = vmatprep.mubr.bf16.mxu0 %v3707
        %3877 = vmatmul.mubr.bf16.gmra.mrb[0].mxu0 %v3706
        %v3878 = vpop.f32.mrb[0].mxu0
        %v3879 = vadd.f32 0.0, %v3878
        %v3880 = vpop.f32.mrb[0].mxu0
        %v3881 = vpop.f32.mrb[0].mxu0
        %v3882 = vadd.f32 0.0, %v3881
        %v3883 = vpop.f32.mrb[0].mxu0
        %3884 = vdwg.mxu0
        %v3885 = vmul.f32 %v3823, %v3676
        %v3886 = vmul.f32 %v3826, %v3677
        %v3887 = vmul.f32 %v3831, %v3678
        %v3888 = vmul.f32 %v3834, %v3679
        %v3889 = vmul.f32 %v3839, %v3680
        %v3890 = vmul.f32 %v3842, %v3681
        %v3891 = vmul.f32 %v3847, %v3682
        %v3892 = vmul.f32 %v3850, %v3683
        %v3893 = vmul.f32 %v3855, %v3684
        %v3894 = vmul.f32 %v3858, %v3685
        %v3895 = vmul.f32 %v3863, %v3686
        %v3896 = vmul.f32 %v3866, %v3687
        %v3897 = vmul.f32 %v3871, %v3688
        %v3898 = vmul.f32 %v3874, %v3689
        %v3899 = vmul.f32 %v3879, %v3690
        %v3900 = vmul.f32 %v3882, %v3691
        %v3901 = vpack.c.bf16 %v3886, %v3885
        %v3902 = vpack.c.bf16 %v3888, %v3887
        %v3903 = vpack.c.bf16 %v3890, %v3889
        %v3904 = vpack.c.bf16 %v3892, %v3891
        %v3905 = vpack.c.bf16 %v3894, %v3893
        %v3906 = vpack.c.bf16 %v3896, %v3895
        %v3907 = vpack.c.bf16 %v3898, %v3897
        %v3908 = vpack.c.bf16 %v3900, %v3899
        %3917 = vrot.lane.b32.xlu0 %v3901, 96
        %v3918 = vpop.permute.xlu0 %3917
        %3919 = vrot.lane.b32.xlu0 %v3902, 96
        %v3920 = vpop.permute.xlu0 %3919
        %3921 = vrot.lane.b32.xlu0 %v3903, 96
        %v3922 = vpop.permute.xlu0 %3921
        %3923 = vrot.lane.b32.xlu0 %v3904, 96
        %v3924 = vpop.permute.xlu0 %3923
        %3925 = vrot.lane.b32.xlu0 %v3905, 96
        %v3926 = vpop.permute.xlu0 %3925
        %3927 = vrot.lane.b32.xlu0 %v3906, 96
        %v3928 = vpop.permute.xlu0 %3927
        %3929 = vrot.lane.b32.xlu0 %v3907, 96
        %v3930 = vpop.permute.xlu0 %3929
        %3931 = vrot.lane.b32.xlu0 %v3908, 96
        %v3932 = vpop.permute.xlu0 %3931
        %vm3941 = vcmask 1048320
        %3942 = vst.msk [vmem:[#allocation4] sm:$0xff] %vm3941, %v3918
        %3943 = vst.msk [vmem:[#allocation4 + $0x8] sm:$0xff] %vm3941, %v3920
        %3944 = vst.msk [vmem:[#allocation4 + $0x10] sm:$0xff] %vm3941, %v3922
        %3945 = vst.msk [vmem:[#allocation4 + $0x18] sm:$0xff] %vm3941, %v3924
        %3946 = vst.msk [vmem:[#allocation4 + $0x20] sm:$0xff] %vm3941, %v3926
        %3947 = vst.msk [vmem:[#allocation4 + $0x28] sm:$0xff] %vm3941, %v3928
        %3948 = vst.msk [vmem:[#allocation4 + $0x30] sm:$0xff] %vm3941, %v3930
        %3949 = vst.msk [vmem:[#allocation4 + $0x38] sm:$0xff] %vm3941, %v3932
        %v3950 = vld [vmem:[#allocation4] sm:$0xff]
        %v3951 = vld [vmem:[#allocation4 + $0x8] sm:$0xff]
        %v3952 = vld [vmem:[#allocation4 + $0x10] sm:$0xff]
        %v3953 = vld [vmem:[#allocation4 + $0x18] sm:$0xff]
        %v3954 = vld [vmem:[#allocation4 + $0x20] sm:$0xff]
        %v3955 = vld [vmem:[#allocation4 + $0x28] sm:$0xff]
        %v3956 = vld [vmem:[#allocation4 + $0x30] sm:$0xff]
        %v3957 = vld [vmem:[#allocation4 + $0x38] sm:$0xff]
        %v3958 = vld [vmem:[#allocation14] sm:$0xf]
        %v3959 = vld [vmem:[#allocation14 + $0x4] sm:$0xf]
        %v3960 = vld [vmem:[#allocation14 + $0x8] sm:$0xf]
        %v3961 = vld [vmem:[#allocation14 + $0xc] sm:$0xf]
        %v3962 = vld [vmem:[#allocation14 + $0x10] sm:$0xf]
        %v3963 = vld [vmem:[#allocation14 + $0x14] sm:$0xf]
        %v3964 = vld [vmem:[#allocation14 + $0x18] sm:$0xf]
        %v3965 = vld [vmem:[#allocation14 + $0x1c] sm:$0xf]
        %v3966 = vld [vmem:[#allocation14 + $0x20] sm:$0xf]
        %v3967 = vld [vmem:[#allocation14 + $0x24] sm:$0xf]
        %v3968 = vld [vmem:[#allocation14 + $0x28] sm:$0xf]
        %v3969 = vld [vmem:[#allocation14 + $0x2c] sm:$0xf]
        %v3970 = vld [vmem:[#allocation14 + $0x30] sm:$0xf]
        %v3971 = vld [vmem:[#allocation14 + $0x34] sm:$0xf]
        %v3972 = vld [vmem:[#allocation14 + $0x38] sm:$0xf]
        %v3973 = vld [vmem:[#allocation14 + $0x3c] sm:$0xf]
        %v3974 = vld [vmem:[%s9] sm:$0x1]
        %v3976 = vlaneseq
        %v3977 = vshrl.u32 %v3976, 7
        %v3978 = vsub.s32 0, %v3977
        %v3979 = vrot.slane %v3974, %v3978
        %v3997 = vunpack.c.l.b16 %v3958
        %v3998 = vunpack.c.l.b16 %v3959
        %v3999 = vunpack.c.l.b16 %v3960
        %v4000 = vunpack.c.l.b16 %v3961
        %v4001 = vunpack.c.l.b16 %v3962
        %v4002 = vunpack.c.l.b16 %v3963
        %v4003 = vunpack.c.l.b16 %v3964
        %v4004 = vunpack.c.l.b16 %v3965
        %v4005 = vunpack.c.l.b16 %v3966
        %v4006 = vunpack.c.l.b16 %v3967
        %v4007 = vunpack.c.l.b16 %v3968
        %v4008 = vunpack.c.l.b16 %v3969
        %v4009 = vunpack.c.l.b16 %v3970
        %v4010 = vunpack.c.l.b16 %v3971
        %v4011 = vunpack.c.l.b16 %v3972
        %v4012 = vunpack.c.l.b16 %v3973
        %v4013 = vpack.c.b16 %v3998, %v3997
        %v4014 = vpack.c.b16 %v4000, %v3999
        %v4015 = vpack.c.b16 %v4002, %v4001
        %v4016 = vpack.c.b16 %v4004, %v4003
        %v4017 = vpack.c.b16 %v4006, %v4005
        %v4018 = vpack.c.b16 %v4008, %v4007
        %v4019 = vpack.c.b16 %v4010, %v4009
        %v4020 = vpack.c.b16 %v4012, %v4011
        %4029 = vmatprep.subr.bf16.mxu0 0
        %4030 = vmatpush1.bf16.msra.mxu0 %v4013
        %4031 = vmatprep.subr.bf16.mxu0 0
        %4032 = vmatpush1.bf16.msra.mxu0 %v4014
        %4033 = vmatprep.subr.bf16.mxu0 0
        %4034 = vmatpush1.bf16.msra.mxu0 %v4015
        %4035 = vmatprep.subr.bf16.mxu0 0
        %4036 = vmatpush1.bf16.msra.mxu0 %v4016
        %4037 = vmatprep.subr.bf16.mxu0 0
        %4038 = vmatpush1.bf16.msra.mxu0 %v4017
        %4039 = vmatprep.subr.bf16.mxu0 0
        %4040 = vmatpush1.bf16.msra.mxu0 %v4018
        %4041 = vmatprep.subr.bf16.mxu0 0
        %4042 = vmatpush1.bf16.msra.mxu0 %v4019
        %4043 = vmatprep.subr.bf16.mxu0 0
        %4044 = vmatpush1.bf16.msra.mxu0 %v4020
        %4045 = vmatprep.subr.bf16.mxu0 0
        %4046 = vmatpush1.bf16.msra.mxu0 0
        %4047 = vmatprep.subr.bf16.mxu0 0
        %4048 = vmatpush1.bf16.msra.mxu0 0
        %4049 = vmatprep.subr.bf16.mxu0 0
        %4050 = vmatpush1.bf16.msra.mxu0 0
        %4051 = vmatprep.subr.bf16.mxu0 0
        %4052 = vmatpush1.bf16.msra.mxu0 0
        %4053 = vmatprep.subr.bf16.mxu0 0
        %4054 = vmatpush1.bf16.msra.mxu0 0
        %4055 = vmatprep.subr.bf16.mxu0 0
        %4056 = vmatpush1.bf16.msra.mxu0 0
        %4057 = vmatprep.subr.bf16.mxu0 0
        %4058 = vmatpush1.bf16.msra.mxu0 0
        %4059 = vmatprep.subr.bf16.mxu0 0
        %4060 = vmatpush1.bf16.msra.mxu0 0
        %4061 = vmatprep.mubr.bf16.mxu0 0
        %4062 = vmatmul.mubr.bf16.gmra.mrb[0].mxu0 %v3950
        %v4063 = vpop.f32.mrb[0].mxu0
        %v4064 = vadd.f32 %v3979, %v4063
        %v4065 = vpop.f32.mrb[0].mxu0
        %v4066 = vpop.f32.mrb[0].mxu0
        %v4067 = vadd.f32 %v3979, %v4066
        %v4068 = vpop.f32.mrb[0].mxu0
        %4069 = vmatprep.mubr.bf16.mxu0 0
        %4070 = vmatmul.mubr.bf16.gmra.mrb[0].mxu0 %v3951
        %v4071 = vpop.f32.mrb[0].mxu0
        %v4072 = vadd.f32 %v3979, %v4071
        %v4073 = vpop.f32.mrb[0].mxu0
        %v4074 = vpop.f32.mrb[0].mxu0
        %v4075 = vadd.f32 %v3979, %v4074
        %v4076 = vpop.f32.mrb[0].mxu0
        %4077 = vmatprep.mubr.bf16.mxu0 0
        %4078 = vmatmul.mubr.bf16.gmra.mrb[0].mxu0 %v3952
        %v4079 = vpop.f32.mrb[0].mxu0
        %v4080 = vadd.f32 %v3979, %v4079
        %v4081 = vpop.f32.mrb[0].mxu0
        %v4082 = vpop.f32.mrb[0].mxu0
        %v4083 = vadd.f32 %v3979, %v4082
        %v4084 = vpop.f32.mrb[0].mxu0
        %4085 = vmatprep.mubr.bf16.mxu0 0
        %4086 = vmatmul.mubr.bf16.gmra.mrb[0].mxu0 %v3953
        %v4087 = vpop.f32.mrb[0].mxu0
        %v4088 = vadd.f32 %v3979, %v4087
        %v4089 = vpop.f32.mrb[0].mxu0
        %v4090 = vpop.f32.mrb[0].mxu0
        %v4091 = vadd.f32 %v3979, %v4090
        %v4092 = vpop.f32.mrb[0].mxu0
        %4093 = vmatprep.mubr.bf16.mxu0 0
        %4094 = vmatmul.mubr.bf16.gmra.mrb[0].mxu0 %v3954
        %v4095 = vpop.f32.mrb[0].mxu0
        %v4096 = vadd.f32 %v3979, %v4095
        %v4097 = vpop.f32.mrb[0].mxu0
        %v4098 = vpop.f32.mrb[0].mxu0
        %v4099 = vadd.f32 %v3979, %v4098
        %v4100 = vpop.f32.mrb[0].mxu0
        %4101 = vmatprep.mubr.bf16.mxu0 0
        %4102 = vmatmul.mubr.bf16.gmra.mrb[0].mxu0 %v3955
        %v4103 = vpop.f32.mrb[0].mxu0
        %v4104 = vadd.f32 %v3979, %v4103
        %v4105 = vpop.f32.mrb[0].mxu0
        %v4106 = vpop.f32.mrb[0].mxu0
        %v4107 = vadd.f32 %v3979, %v4106
        %v4108 = vpop.f32.mrb[0].mxu0
        %4109 = vmatprep.mubr.bf16.mxu0 0
        %4110 = vmatmul.mubr.bf16.gmra.mrb[0].mxu0 %v3956
        %v4111 = vpop.f32.mrb[0].mxu0
        %v4112 = vadd.f32 %v3979, %v4111
        %v4113 = vpop.f32.mrb[0].mxu0
        %v4114 = vpop.f32.mrb[0].mxu0
        %v4115 = vadd.f32 %v3979, %v4114
        %v4116 = vpop.f32.mrb[0].mxu0
        %4117 = vmatprep.mubr.bf16.mxu0 0
        %4118 = vmatmul.mubr.bf16.gmra.mrb[0].mxu0 %v3957
        %v4119 = vpop.f32.mrb[0].mxu0
        %v4120 = vadd.f32 %v3979, %v4119
        %v4121 = vpop.f32.mrb[0].mxu0
        %v4122 = vpop.f32.mrb[0].mxu0
        %v4123 = vadd.f32 %v3979, %v4122
        %v4124 = vpop.f32.mrb[0].mxu0
        %4125 = vdwg.mxu0
        %4126 = vst [vmem:[%s493] sm:$0xff] %v4064
        %4127 = vst [vmem:[%s493 + $0x8] sm:$0xff] %v4067
        %4128 = vst [vmem:[%s493 + $0x10] sm:$0xff] %v4072
        %4129 = vst [vmem:[%s493 + $0x18] sm:$0xff] %v4075
        %4130 = vst [vmem:[%s493 + $0x20] sm:$0xff] %v4080
        %4131 = vst [vmem:[%s493 + $0x28] sm:$0xff] %v4083
        %4132 = vst [vmem:[%s493 + $0x30] sm:$0xff] %v4088
        %4133 = vst [vmem:[%s493 + $0x38] sm:$0xff] %v4091
        %4134 = vst [vmem:[%s493 + $0x40] sm:$0xff] %v4096
        %4135 = vst [vmem:[%s493 + $0x48] sm:$0xff] %v4099
        %4136 = vst [vmem:[%s493 + $0x50] sm:$0xff] %v4104
        %4137 = vst [vmem:[%s493 + $0x58] sm:$0xff] %v4107
        %4138 = vst [vmem:[%s493 + $0x60] sm:$0xff] %v4112
        %4139 = vst [vmem:[%s493 + $0x68] sm:$0xff] %v4115
        %4140 = vst [vmem:[%s493 + $0x70] sm:$0xff] %v4120
        %4141 = vst [vmem:[%s493 + $0x78] sm:$0xff] %v4123
        %s4142 = sand.u32 %s276, 1
        %s4143 = scalar_lea.sflag [#allocation7], %s4142
        %s4144 = sand.u32 %s276, 1
        %s4145 = smul.addr %s4144, 128
        %s4146 = scalar_lea.vmem [#allocation16], %s4145
        // Predicated region
        $region89: #{tpu_custom_call.1} parent=59 // pred_check
          %p4147 = pneg %p286
        $region90: #{tpu_custom_call.1} parent=59 // pred_check_branch
          %4149 = sbr.rel (%p4147) target = $region92
        $region91: #{tpu_custom_call.1} parent=59 // pred_region
          %s4150 = smul.u32 16, %s37
          %s4152 = ssub.s32 2048, 2048
          %4153 = vsyncadd %s4143, %s4152
          %s4154 = smul.addr %s36, 32
          %s4155 = sadd.s32 %s4150, %s4154
          %s4156 = smul.addr %s4155, 128
          %s4157 = scalar_lea.hbm %s10, %s4156
          %s4158 = sshll.u32 %s4146, 4
          %s4159 = int_to_ptr.vmem [resolvable:$true] %s4158
          %4164 = dma.vmem_to_hbm [thread:$0]  %s4159, 2048, %s4157, %s4143, 128, 128, 8
        $region92: #{tpu_custom_call.1} parent=59 // pred_fallthru
          _
      $region60: #{tpu_custom_call.1} parent=5 // pred_fallthru
        _
      %p4165 = scmp.le.s32.totalorder 2, %s27
      // Predicated region
      $region93: #{tpu_custom_call.1} parent=5 // pred_check
        %p4166 = pneg %p4165
      $region94: #{tpu_custom_call.1} parent=5 // pred_check_branch
        %4168 = sbr.rel (%p4166) target = $region96
      $region95: #{tpu_custom_call.1} parent=5 // pred_region
        %s4169 = ssub.s32 %s27, 2
        // Predicated region
        $region97: #{tpu_custom_call.1} parent=95 // pred_check
          %p4170 = pneg %p292
        $region98: #{tpu_custom_call.1} parent=95 // pred_check_branch
          %4172 = sbr.rel (%p4170) target = $region100
        $region99: #{tpu_custom_call.1} parent=95 // pred_region
          %s4173 = sand.u32 %s277, 1
          %s4174 = scalar_lea.sflag [#allocation7], %s4173
          %s4175 = sand.u32 %s277, 1
          %s4176 = smul.addr %s4175, 128
          %s4177 = scalar_lea.vmem [#allocation16], %s4176
          %4178 = dma.done %s4174, 2048
        $region100: #{tpu_custom_call.1} parent=95 // pred_fallthru
          _
      $region96: #{tpu_custom_call.1} parent=5 // pred_fallthru
        _
    $region6: #{tpu_custom_call.1} parent=1 // loop_footer
      %s31 = sadd.s32 1, %s27
    $region7: #{tpu_custom_call.1} parent=1 // loop_footer_branch
      %26 = sbr.rel target = $region3
    $region8: #{tpu_custom_call.1} parent=1 // loop_exit
      _
    %4179 = vsyncpa [#allocation6], 1
    %s4180 = scalar_lea.sflag [#allocation6], 1
    %4181 = vsyncpa %s4180, 1
    %4182 = vsyncpa [#allocation9], 1
    %s4183 = scalar_lea.sflag [#allocation9], 1
    %4184 = vsyncpa %s4183, 1
    %4185 = vsyncpa [#allocation12], 1
    %4186 = vsyncpa [#allocation15], 1
    %4187 = vsyncpa [#allocation7], 1
    %s4188 = scalar_lea.sflag [#allocation7], 1
    %4189 = vsyncpa %s4188, 1

</llo_original>
